<compile_context>
chip_gen: v6e
topology: v6e:2x2x1
jax: 0.10.0
libtpu: 0.0.40
codegen_flags: <defaults>
</compile_context>

<pallas_src>
import functools
import math

import jax
import jax.numpy as jnp
from jax.experimental import pallas as pl
from jax.experimental.pallas import tpu as pltpu

_LANE = 128   # lane width (last dim of a vreg)
_SUB = 8      # sublane width (second-to-last dim of a vreg)


def _round_up(x: int, m: int) -> int:
    return ((x + m - 1) // m) * m


def _fused_mlp_kernel(x_ref, *refs, num_layers: int):
    """Whole MLP on one column slab of points, feature-major layout.

    x_ref : (input_dim, tn)                       -- x^T slab
    refs  : (wT_0, b_0, wT_1, b_1, ..., wT_{L-1}, b_{L-1}, o_ref)
            wT_i : (dout_i, din_i)   b_i : (dout_i, 1)
    o_ref : (dout_pad, tn)                        -- final-layer output slab
    Activations stay in VMEM/vregs between layers; accumulation is f32.
    """
    o_ref = refs[-1]
    h = x_ref[...]                                   # (din, tn) storage dtype
    for i in range(num_layers):
        wT = refs[2 * i][...]                        # (dout, din)
        b = refs[2 * i + 1][...].astype(jnp.float32)  # (dout, 1) -> lane broadcast
        # Exact f32 matmul when params are f32; native bf16 MXU otherwise.
        prec = jax.lax.Precision.HIGHEST if wT.dtype == jnp.float32 else None
        acc = jnp.dot(wT, h.astype(wT.dtype),
                      preferred_element_type=jnp.float32,
                      precision=prec) + b            # (dout, tn) f32
        if i < num_layers - 1:
            acc = jnp.maximum(acc, 0.0)              # ReLU in f32 (lane-dense)
            h = acc.astype(wT.dtype)                 # stay in param dtype
        else:
            o_ref[...] = acc.astype(o_ref.dtype)     # small (dout_pad, tn) store


def mlp_forward_fused(params, x, *, tn_max: int = 2048, out_dtype=None):
    """Fused forward pass: y = MLP(x). x: [N, input_dim]. Returns [N, output_dim]."""
    N, input_dim = x.shape
    num_layers = len(params)
    output_dim = params[-1][0].shape[1]
    out_dtype = out_dtype if out_dtype is not None else x.dtype

    # --- feature-major params: W^T (dout, din), bias (dout, 1) ----------------
    wTs, bs = [], []
    for (w, b) in params:
        wTs.append(w.T)                 # tiny arrays; transpose in the wrapper
        bs.append(b.reshape(-1, 1))

    # Pad the final layer's output rows up to a multiple of 8 (sublane) so the
    # output slab store is unmasked.  Only 8 rows of garbage vs. 128 lanes before.
    dout_pad = _round_up(output_dim, _SUB)
    if dout_pad != output_dim:
        wT_last, b_last = wTs[-1], bs[-1]
        wTs[-1] = jnp.zeros((dout_pad, wT_last.shape[1]), wT_last.dtype
                            ).at[:output_dim, :].set(wT_last)
        bs[-1] = jnp.zeros((dout_pad, 1), b_last.dtype
                           ).at[:output_dim, :].set(b_last)

    # --- N tiling on the lane axis: multiples of 128 --------------------------
    n128 = _round_up(max(N, 1), _LANE)
    tn_cap = max(_LANE, (tn_max // _LANE) * _LANE)   # force multiple of 128
    tn = min(tn_cap, n128)
    # Prefer >= 2 grid steps so v7x's two TensorCores both get work.
    if tn == n128 and n128 >= 2 * _LANE:
        tn = _round_up(n128 // 2, _LANE)
    grid_n = pl.cdiv(N, tn)
    n_pad = grid_n * tn

    xT = x.T                                          # (input_dim, N)
    if n_pad != N:
        xT = jnp.pad(xT, ((0, 0), (0, n_pad - N)))    # zero-padded tail points

    flat_args = []
    in_specs = [pl.BlockSpec((input_dim, tn), lambda j: (0, j))]
    for wT, b in zip(wTs, bs):
        flat_args += [wT, b]
        # Weights/biases are tiny -> full-array VMEM blocks, constant index_map,
        # resident across all grid steps (Pallas skips the re-DMA).
        in_specs += [
            pl.BlockSpec(wT.shape, lambda j: (0, 0)),
            pl.BlockSpec(b.shape, lambda j: (0, 0)),
        ]

    kernel = functools.partial(_fused_mlp_kernel, num_layers=num_layers)
    out = pl.pallas_call(
        kernel,
        out_shape=jax.ShapeDtypeStruct((dout_pad, n_pad), out_dtype),
        grid_spec=pltpu.PrefetchScalarGridSpec(
            num_scalar_prefetch=0,
            grid=(grid_n,),
            in_specs=in_specs,
            out_specs=pl.BlockSpec((dout_pad, tn), lambda j: (0, j)),
        ),
        compiler_params=pltpu.CompilerParams(
            dimension_semantics=("parallel",),
            # Footprint is tiny (x slab 2xtn, out slab 8xtn, acts 32xtn, weights
            # <20 KiB) -> a few MiB even double-buffered.  Explicit limit keeps
            # any future re-tuning honest on v7x's 64 MiB VMEM.
            vmem_limit_bytes=32 << 20,
        ),
    )(xT, *flat_args)
    # Slice off padded rows/points and return row-major [N, output_dim].
    return out[:output_dim, :N].T


def mlp_forward(params, x, **kwargs):
    """Replicates MLP.forward: returns (output, None)."""
    return mlp_forward_fused(params, x, **kwargs), None


def init_mlp_params(key, num_layers, input_dim, hidden_dim, output_dim=3):
    """nn.Linear-shaped params (weights stored as [fan_in, fan_out] = W^T of torch)."""
    dims = [input_dim] + [hidden_dim] * (num_layers - 1) + [output_dim]
    params = []
    for fan_in, fan_out in zip(dims[:-1], dims[1:]):
        key, kw, kb = jax.random.split(key, 3)
        bound = 1.0 / math.sqrt(fan_in)
        w = jax.random.uniform(kw, (fan_in, fan_out), jnp.float32, -bound, bound)
        b = jax.random.uniform(kb, (fan_out,), jnp.float32, -bound, bound)
        params.append((w, b))
    return params


def mlp_reference(params, x):
    n = len(params)
    for i, (w, b) in enumerate(params):
        x = x @ w + b
        if i != n - 1:
            x = jnp.maximum(x, 0.0)
    return x


if __name__ == "__main__":
    # Coordinate-MLP style shapes (consistent with the module).
    num_layers = 4      # first + 2 mid + final
    input_dim = 2
    hidden_dim = 32
    output_dim = 3
    N = 1000            # NOT a multiple of 128 -> exercises lane padding + 2-step grid

    key = jax.random.PRNGKey(0)
    key, kx = jax.random.split(key)
    x = jax.random.normal(kx, (N, input_dim), dtype=jnp.float32)
    params = init_mlp_params(key, num_layers, input_dim, hidden_dim, output_dim)

    # f32 path: exact match against the pure-JAX reference.
    out, y = mlp_forward(params, x)
    out = jax.block_until_ready(out)
    assert y is None
    assert out.shape == (N, output_dim), out.shape
    ref = mlp_reference(params, x)
    assert jnp.allclose(out, ref, atol=1e-5, rtol=1e-5), "mismatch vs reference"

    # bf16-storage path (halves input DMA bytes on v6e/v7x; f32 accumulate in-kernel).
    params_bf16 = [(w.astype(jnp.bfloat16), b.astype(jnp.bfloat16)) for w, b in params]
    out_bf16, _ = mlp_forward(params_bf16, x.astype(jnp.bfloat16))
    out_bf16 = jax.block_until_ready(out_bf16).astype(jnp.float32)
    assert out_bf16.shape == (N, output_dim)
    assert bool(jnp.all(jnp.isfinite(out_bf16)))
    max_err = float(jnp.max(jnp.abs(out_bf16 - ref)))
    assert max_err < 0.1 * (float(jnp.max(jnp.abs(ref))) + 1.0), max_err

    print("KERNEL_OK")
</pallas_src>

<mosaic_0001>
module attributes {stable_mosaic.version = 11 : i64} {
  func.func @_fused_mlp_kernel(%arg0: i32, %arg1: memref<2x512xf32, #tpu.memory_space<vmem>>, %arg2: memref<32x2xf32, #tpu.memory_space<vmem>>, %arg3: memref<32x1xf32, #tpu.memory_space<vmem>>, %arg4: memref<32x32xf32, #tpu.memory_space<vmem>>, %arg5: memref<32x1xf32, #tpu.memory_space<vmem>>, %arg6: memref<32x32xf32, #tpu.memory_space<vmem>>, %arg7: memref<32x1xf32, #tpu.memory_space<vmem>>, %arg8: memref<8x32xf32, #tpu.memory_space<vmem>>, %arg9: memref<8x1xf32, #tpu.memory_space<vmem>>, %arg10: memref<8x512xf32, #tpu.memory_space<vmem>>) attributes {dimension_semantics = [#tpu.dimension_semantics<parallel>], iteration_bounds = array<i64: 2>, scalar_prefetch = 0 : i64, scratch_operands = 0 : i64, tpu.core_type = #tpu.core_type<tc>, window_params = [{transform_indices = @transform_0, window_bounds = array<i64: 2, 512>}, {pipeline_mode = #tpu.pipeline_mode<synchronous>, transform_indices = @transform_1, window_bounds = array<i64: 32, 2>}, {pipeline_mode = #tpu.pipeline_mode<synchronous>, transform_indices = @transform_2, window_bounds = array<i64: 32, 1>}, {pipeline_mode = #tpu.pipeline_mode<synchronous>, transform_indices = @transform_3, window_bounds = array<i64: 32, 32>}, {pipeline_mode = #tpu.pipeline_mode<synchronous>, transform_indices = @transform_4, window_bounds = array<i64: 32, 1>}, {pipeline_mode = #tpu.pipeline_mode<synchronous>, transform_indices = @transform_5, window_bounds = array<i64: 32, 32>}, {pipeline_mode = #tpu.pipeline_mode<synchronous>, transform_indices = @transform_6, window_bounds = array<i64: 32, 1>}, {pipeline_mode = #tpu.pipeline_mode<synchronous>, transform_indices = @transform_7, window_bounds = array<i64: 8, 32>}, {pipeline_mode = #tpu.pipeline_mode<synchronous>, transform_indices = @transform_8, window_bounds = array<i64: 8, 1>}, {transform_indices = @transform_9, window_bounds = array<i64: 8, 512>}]} {
    %c0 = arith.constant 0 : index
    %c0_0 = arith.constant 0 : index
    %0 = vector.load %arg1[%c0, %c0_0] : memref<2x512xf32, #tpu.memory_space<vmem>>, vector<2x512xf32>
    %c0_1 = arith.constant 0 : index
    %c0_2 = arith.constant 0 : index
    %1 = vector.load %arg2[%c0_1, %c0_2] : memref<32x2xf32, #tpu.memory_space<vmem>>, vector<32x2xf32>
    %c0_3 = arith.constant 0 : index
    %c0_4 = arith.constant 0 : index
    %2 = vector.load %arg3[%c0_3, %c0_4] : memref<32x1xf32, #tpu.memory_space<vmem>>, vector<32x1xf32>
    %cst = arith.constant dense<0.000000e+00> : vector<32x512xf32>
    %3 = tpu.matmul %1, %0, %cst {dimension_numbers = #tpu.dot_dimension_numbers<[1], [0], [0], [1], [0, 0, 1, 1], [], []>, precision = #tpu.contract_precision<fp32>} : vector<32x2xf32>, vector<2x512xf32>, vector<32x512xf32> -> vector<32x512xf32>
    %4 = vector.broadcast %2 : vector<32x1xf32> to vector<32x512xf32>
    %5 = arith.addf %3, %4 : vector<32x512xf32>
    %cst_5 = arith.constant 0.000000e+00 : f32
    %6 = vector.broadcast %cst_5 : f32 to vector<32x512xf32>
    %7 = arith.maximumf %5, %6 : vector<32x512xf32>
    %c0_6 = arith.constant 0 : index
    %c0_7 = arith.constant 0 : index
    %8 = vector.load %arg4[%c0_6, %c0_7] : memref<32x32xf32, #tpu.memory_space<vmem>>, vector<32x32xf32>
    %c0_8 = arith.constant 0 : index
    %c0_9 = arith.constant 0 : index
    %9 = vector.load %arg5[%c0_8, %c0_9] : memref<32x1xf32, #tpu.memory_space<vmem>>, vector<32x1xf32>
    %cst_10 = arith.constant dense<0.000000e+00> : vector<32x512xf32>
    %10 = tpu.matmul %8, %7, %cst_10 {dimension_numbers = #tpu.dot_dimension_numbers<[1], [0], [0], [1], [0, 0, 1, 1], [], []>, precision = #tpu.contract_precision<fp32>} : vector<32x32xf32>, vector<32x512xf32>, vector<32x512xf32> -> vector<32x512xf32>
    %11 = vector.broadcast %9 : vector<32x1xf32> to vector<32x512xf32>
    %12 = arith.addf %10, %11 : vector<32x512xf32>
    %cst_11 = arith.constant 0.000000e+00 : f32
    %13 = vector.broadcast %cst_11 : f32 to vector<32x512xf32>
    %14 = arith.maximumf %12, %13 : vector<32x512xf32>
    %c0_12 = arith.constant 0 : index
    %c0_13 = arith.constant 0 : index
    %15 = vector.load %arg6[%c0_12, %c0_13] : memref<32x32xf32, #tpu.memory_space<vmem>>, vector<32x32xf32>
    %c0_14 = arith.constant 0 : index
    %c0_15 = arith.constant 0 : index
    %16 = vector.load %arg7[%c0_14, %c0_15] : memref<32x1xf32, #tpu.memory_space<vmem>>, vector<32x1xf32>
    %cst_16 = arith.constant dense<0.000000e+00> : vector<32x512xf32>
    %17 = tpu.matmul %15, %14, %cst_16 {dimension_numbers = #tpu.dot_dimension_numbers<[1], [0], [0], [1], [0, 0, 1, 1], [], []>, precision = #tpu.contract_precision<fp32>} : vector<32x32xf32>, vector<32x512xf32>, vector<32x512xf32> -> vector<32x512xf32>
    %18 = vector.broadcast %16 : vector<32x1xf32> to vector<32x512xf32>
    %19 = arith.addf %17, %18 : vector<32x512xf32>
    %cst_17 = arith.constant 0.000000e+00 : f32
    %20 = vector.broadcast %cst_17 : f32 to vector<32x512xf32>
    %21 = arith.maximumf %19, %20 : vector<32x512xf32>
    %c0_18 = arith.constant 0 : index
    %c0_19 = arith.constant 0 : index
    %22 = vector.load %arg8[%c0_18, %c0_19] : memref<8x32xf32, #tpu.memory_space<vmem>>, vector<8x32xf32>
    %c0_20 = arith.constant 0 : index
    %c0_21 = arith.constant 0 : index
    %23 = vector.load %arg9[%c0_20, %c0_21] : memref<8x1xf32, #tpu.memory_space<vmem>>, vector<8x1xf32>
    %cst_22 = arith.constant dense<0.000000e+00> : vector<8x512xf32>
    %24 = tpu.matmul %22, %21, %cst_22 {dimension_numbers = #tpu.dot_dimension_numbers<[1], [0], [0], [1], [0, 0, 1, 1], [], []>, precision = #tpu.contract_precision<fp32>} : vector<8x32xf32>, vector<32x512xf32>, vector<8x512xf32> -> vector<8x512xf32>
    %25 = vector.broadcast %23 : vector<8x1xf32> to vector<8x512xf32>
    %26 = arith.addf %24, %25 : vector<8x512xf32>
    %c0_23 = arith.constant 0 : index
    %c0_24 = arith.constant 0 : index
    %27 = vector.load %arg10[%c0_23, %c0_24] : memref<8x512xf32, #tpu.memory_space<vmem>>, vector<8x512xf32>
    tpu.vector_store %arg10[%c0_23, %c0_24], %26 {strides = array<i32>} : memref<8x512xf32, #tpu.memory_space<vmem>>, vector<8x512xf32>,
    return
  }
  func.func @transform_0(%arg0: i32) -> (i32, i32) {
    %c0_i32 = arith.constant 0 : i32
    %c0_i32_0 = arith.constant 0 : i32
    return %c0_i32, %arg0 : i32, i32
  }
  func.func @transform_1(%arg0: i32) -> (i32, i32) {
    %c0_i32 = arith.constant 0 : i32
    %c0_i32_0 = arith.constant 0 : i32
    %c0_i32_1 = arith.constant 0 : i32
    return %c0_i32, %c0_i32_0 : i32, i32
  }
  func.func @transform_2(%arg0: i32) -> (i32, i32) {
    %c0_i32 = arith.constant 0 : i32
    %c0_i32_0 = arith.constant 0 : i32
    %c0_i32_1 = arith.constant 0 : i32
    return %c0_i32, %c0_i32_0 : i32, i32
  }
  func.func @transform_3(%arg0: i32) -> (i32, i32) {
    %c0_i32 = arith.constant 0 : i32
    %c0_i32_0 = arith.constant 0 : i32
    %c0_i32_1 = arith.constant 0 : i32
    return %c0_i32, %c0_i32_0 : i32, i32
  }
  func.func @transform_4(%arg0: i32) -> (i32, i32) {
    %c0_i32 = arith.constant 0 : i32
    %c0_i32_0 = arith.constant 0 : i32
    %c0_i32_1 = arith.constant 0 : i32
    return %c0_i32, %c0_i32_0 : i32, i32
  }
  func.func @transform_5(%arg0: i32) -> (i32, i32) {
    %c0_i32 = arith.constant 0 : i32
    %c0_i32_0 = arith.constant 0 : i32
    %c0_i32_1 = arith.constant 0 : i32
    return %c0_i32, %c0_i32_0 : i32, i32
  }
  func.func @transform_6(%arg0: i32) -> (i32, i32) {
    %c0_i32 = arith.constant 0 : i32
    %c0_i32_0 = arith.constant 0 : i32
    %c0_i32_1 = arith.constant 0 : i32
    return %c0_i32, %c0_i32_0 : i32, i32
  }
  func.func @transform_7(%arg0: i32) -> (i32, i32) {
    %c0_i32 = arith.constant 0 : i32
    %c0_i32_0 = arith.constant 0 : i32
    %c0_i32_1 = arith.constant 0 : i32
    return %c0_i32, %c0_i32_0 : i32, i32
  }
  func.func @transform_8(%arg0: i32) -> (i32, i32) {
    %c0_i32 = arith.constant 0 : i32
    %c0_i32_0 = arith.constant 0 : i32
    %c0_i32_1 = arith.constant 0 : i32
    return %c0_i32, %c0_i32_0 : i32, i32
  }
  func.func @transform_9(%arg0: i32) -> (i32, i32) {
    %c0_i32 = arith.constant 0 : i32
    %c0_i32_0 = arith.constant 0 : i32
    return %c0_i32, %arg0 : i32, i32
  }
}

</mosaic_0001>

<llo_original>
// kernel: tpu_custom_call.1
$region0: #{tpu_custom_call.1}
  #allocation0 [shape = 'u32[]', space=smem, size = 0x4, offset = 0x4, fixed_abs, tag = 'smem constant byte address 0x4 - core index']
  #allocation1 [shape = 'u32[144,128]{1,0:T(1,128)}', space=vmem, size = 0x12000, scoped, tag = 'internal scratch']
  %s0 = inlined_call_operand.vmem [shape: f32[2,1024], index: 0, kind: input, shape index: {}]
  %s1 = inlined_call_operand.vmem [shape: f32[32,2], index: 1, kind: input, shape index: {}]
  %s2 = inlined_call_operand.vmem [shape: f32[32,1], index: 2, kind: input, shape index: {}]
  %s3 = inlined_call_operand.vmem [shape: f32[32,32], index: 3, kind: input, shape index: {}]
  %s4 = inlined_call_operand.vmem [shape: f32[32,1], index: 4, kind: input, shape index: {}]
  %s5 = inlined_call_operand.vmem [shape: f32[32,32], index: 5, kind: input, shape index: {}]
  %s6 = inlined_call_operand.vmem [shape: f32[32,1], index: 6, kind: input, shape index: {}]
  %s7 = inlined_call_operand.vmem [shape: f32[8,32], index: 7, kind: input, shape index: {}]
  %s8 = inlined_call_operand.vmem [shape: f32[8,1], index: 8, kind: input, shape index: {}]
  %s9 = inlined_call_operand.hbm [shape: f32[8,1024], index: 9, kind: output, shape index: {}]
  %s10 = sld [smem:[#allocation0]]
  $region69: #{tpu_custom_call.1} parent=0
    _
  %s12 = ssub.s32 1, %s10
  %s13 = scalar_select 0, %s12, %s10
  $region1: #{tpu_custom_call.1} parent=0
    #allocation2 [shape = 'u8[32768]{0}', space=vmem, size = 0x8000, scoped, tag = 'output window, operand 0']
    #allocation3 [shape = 's32[2]{0}', space=sflag, size = 0x8, scoped, tag = 'scoped memory for tpu_custom_call.1']
    %14 = vsyncpa [#allocation3], 0
    %s15 = scalar_lea.sflag [#allocation3], 1
    %16 = vsyncpa %s15, 0
    loop: start=0, step=1, limit=4
    $region2: #{tpu_custom_call.1} parent=1 // loop_pre_header
      _
    $region3: #{tpu_custom_call.1} parent=1 // loop_header
      %s18 = sphi 0, %s22
      %p19 = scmp.ge.s32.totalorder %s18, 4
      %s28 = sphi 0, %s30
      %s31 = sphi 0, %s28
      %s32 = sphi 0, %s31
      %s48 = sphi 0, %s32
      %s52 = sphi 0, %s52
      %s54 = sphi 0, %s52
      %s55 = sphi 0, %s54
      %s69 = sphi 0, %s55
      %s73 = sphi 0, %s73
      %s75 = sphi 0, %s73
      %s76 = sphi 0, %s75
      %s90 = sphi 0, %s76
      %s94 = sphi 0, %s94
      %s96 = sphi 0, %s94
      %s97 = sphi 0, %s96
      %s111 = sphi 0, %s97
      %s115 = sphi 0, %s115
      %s117 = sphi 0, %s115
      %s118 = sphi 0, %s117
      %s132 = sphi 0, %s118
      %s136 = sphi 0, %s136
      %s138 = sphi 0, %s136
      %s139 = sphi 0, %s138
      %s153 = sphi 0, %s139
      %s157 = sphi 0, %s157
      %s159 = sphi 0, %s157
      %s160 = sphi 0, %s159
      %s174 = sphi 0, %s160
      %s178 = sphi 0, %s178
      %s180 = sphi 0, %s178
      %s181 = sphi 0, %s180
      %s195 = sphi 0, %s181
      %s199 = sphi 0, %s199
      %s201 = sphi 0, %s199
      %s202 = sphi 0, %s201
      %s216 = sphi 0, %s202
      %s222 = sphi 0, %s224
      %s225 = sphi 0, %s222
      %s226 = sphi 0, %s225
      %s242 = sphi 0, %s226
    $region4: #{tpu_custom_call.1} parent=1 // loop_header_branch
      %21 = sbr.rel (%p19) target = $region8
    $region5: #{tpu_custom_call.1} parent=1 // loop_body
      %s23 = ssub.s32 %s18, 1
      %s24 = ssub.s32 %s18, 2
      %s25 = sadd.s32 %s18, 1
      %s26 = ssub.s32 %s18, %s25
      %p27 = scmp.eq.s32.totalorder %s26, 0
      %s29 = sadd.s32 %s28, 1
      %s30 = scalar_select %p27, %s28, %s29
      %p33 = pneg %p27
      %p34 = scmp.eq.s32.totalorder %s18, 1
      %p35 = por %p33, %p34
      %p36 = scmp.ne.s32.totalorder %s28, %s31
      %p37 = scmp.eq.s32.totalorder %s18, 0
      %p38 = por %p36, %p37
      %p39 = scmp.ne.s32.totalorder %s28, %s31
      %p40 = scmp.eq.s32.totalorder %s23, 1
      %p41 = por %p39, %p40
      %p42 = scmp.ne.s32.totalorder %s31, %s32
      %p43 = scmp.eq.s32.totalorder %s23, 0
      %p44 = por %p42, %p43
      %p45 = scmp.ne.s32.totalorder %s31, %s32
      %p46 = scmp.eq.s32.totalorder %s24, 1
      %p47 = por %p45, %p46
      %p49 = scmp.ne.s32.totalorder %s32, %s48
      %p50 = scmp.eq.s32.totalorder %s24, 0
      %p51 = por %p49, %p50
      %s53 = sadd.s32 %s52, 1
      %p56 = scmp.eq.s32.totalorder %s18, 1
      %p57 = scmp.ne.s32.totalorder %s52, %s54
      %p58 = scmp.eq.s32.totalorder %s18, 0
      %p59 = por %p57, %p58
      %p60 = scmp.ne.s32.totalorder %s52, %s54
      %p61 = scmp.eq.s32.totalorder %s23, 1
      %p62 = por %p60, %p61
      %p63 = scmp.ne.s32.totalorder %s54, %s55
      %p64 = scmp.eq.s32.totalorder %s23, 0
      %p65 = por %p63, %p64
      %p66 = scmp.ne.s32.totalorder %s54, %s55
      %p67 = scmp.eq.s32.totalorder %s24, 1
      %p68 = por %p66, %p67
      %p70 = scmp.ne.s32.totalorder %s55, %s69
      %p71 = scmp.eq.s32.totalorder %s24, 0
      %p72 = por %p70, %p71
      %s74 = sadd.s32 %s73, 1
      %p77 = scmp.eq.s32.totalorder %s18, 1
      %p78 = scmp.ne.s32.totalorder %s73, %s75
      %p79 = scmp.eq.s32.totalorder %s18, 0
      %p80 = por %p78, %p79
      %p81 = scmp.ne.s32.totalorder %s73, %s75
      %p82 = scmp.eq.s32.totalorder %s23, 1
      %p83 = por %p81, %p82
      %p84 = scmp.ne.s32.totalorder %s75, %s76
      %p85 = scmp.eq.s32.totalorder %s23, 0
      %p86 = por %p84, %p85
      %p87 = scmp.ne.s32.totalorder %s75, %s76
      %p88 = scmp.eq.s32.totalorder %s24, 1
      %p89 = por %p87, %p88
      %p91 = scmp.ne.s32.totalorder %s76, %s90
      %p92 = scmp.eq.s32.totalorder %s24, 0
      %p93 = por %p91, %p92
      %s95 = sadd.s32 %s94, 1
      %p98 = scmp.eq.s32.totalorder %s18, 1
      %p99 = scmp.ne.s32.totalorder %s94, %s96
      %p100 = scmp.eq.s32.totalorder %s18, 0
      %p101 = por %p99, %p100
      %p102 = scmp.ne.s32.totalorder %s94, %s96
      %p103 = scmp.eq.s32.totalorder %s23, 1
      %p104 = por %p102, %p103
      %p105 = scmp.ne.s32.totalorder %s96, %s97
      %p106 = scmp.eq.s32.totalorder %s23, 0
      %p107 = por %p105, %p106
      %p108 = scmp.ne.s32.totalorder %s96, %s97
      %p109 = scmp.eq.s32.totalorder %s24, 1
      %p110 = por %p108, %p109
      %p112 = scmp.ne.s32.totalorder %s97, %s111
      %p113 = scmp.eq.s32.totalorder %s24, 0
      %p114 = por %p112, %p113
      %s116 = sadd.s32 %s115, 1
      %p119 = scmp.eq.s32.totalorder %s18, 1
      %p120 = scmp.ne.s32.totalorder %s115, %s117
      %p121 = scmp.eq.s32.totalorder %s18, 0
      %p122 = por %p120, %p121
      %p123 = scmp.ne.s32.totalorder %s115, %s117
      %p124 = scmp.eq.s32.totalorder %s23, 1
      %p125 = por %p123, %p124
      %p126 = scmp.ne.s32.totalorder %s117, %s118
      %p127 = scmp.eq.s32.totalorder %s23, 0
      %p128 = por %p126, %p127
      %p129 = scmp.ne.s32.totalorder %s117, %s118
      %p130 = scmp.eq.s32.totalorder %s24, 1
      %p131 = por %p129, %p130
      %p133 = scmp.ne.s32.totalorder %s118, %s132
      %p134 = scmp.eq.s32.totalorder %s24, 0
      %p135 = por %p133, %p134
      %s137 = sadd.s32 %s136, 1
      %p140 = scmp.eq.s32.totalorder %s18, 1
      %p141 = scmp.ne.s32.totalorder %s136, %s138
      %p142 = scmp.eq.s32.totalorder %s18, 0
      %p143 = por %p141, %p142
      %p144 = scmp.ne.s32.totalorder %s136, %s138
      %p145 = scmp.eq.s32.totalorder %s23, 1
      %p146 = por %p144, %p145
      %p147 = scmp.ne.s32.totalorder %s138, %s139
      %p148 = scmp.eq.s32.totalorder %s23, 0
      %p149 = por %p147, %p148
      %p150 = scmp.ne.s32.totalorder %s138, %s139
      %p151 = scmp.eq.s32.totalorder %s24, 1
      %p152 = por %p150, %p151
      %p154 = scmp.ne.s32.totalorder %s139, %s153
      %p155 = scmp.eq.s32.totalorder %s24, 0
      %p156 = por %p154, %p155
      %s158 = sadd.s32 %s157, 1
      %p161 = scmp.eq.s32.totalorder %s18, 1
      %p162 = scmp.ne.s32.totalorder %s157, %s159
      %p163 = scmp.eq.s32.totalorder %s18, 0
      %p164 = por %p162, %p163
      %p165 = scmp.ne.s32.totalorder %s157, %s159
      %p166 = scmp.eq.s32.totalorder %s23, 1
      %p167 = por %p165, %p166
      %p168 = scmp.ne.s32.totalorder %s159, %s160
      %p169 = scmp.eq.s32.totalorder %s23, 0
      %p170 = por %p168, %p169
      %p171 = scmp.ne.s32.totalorder %s159, %s160
      %p172 = scmp.eq.s32.totalorder %s24, 1
      %p173 = por %p171, %p172
      %p175 = scmp.ne.s32.totalorder %s160, %s174
      %p176 = scmp.eq.s32.totalorder %s24, 0
      %p177 = por %p175, %p176
      %s179 = sadd.s32 %s178, 1
      %p182 = scmp.eq.s32.totalorder %s18, 1
      %p183 = scmp.ne.s32.totalorder %s178, %s180
      %p184 = scmp.eq.s32.totalorder %s18, 0
      %p185 = por %p183, %p184
      %p186 = scmp.ne.s32.totalorder %s178, %s180
      %p187 = scmp.eq.s32.totalorder %s23, 1
      %p188 = por %p186, %p187
      %p189 = scmp.ne.s32.totalorder %s180, %s181
      %p190 = scmp.eq.s32.totalorder %s23, 0
      %p191 = por %p189, %p190
      %p192 = scmp.ne.s32.totalorder %s180, %s181
      %p193 = scmp.eq.s32.totalorder %s24, 1
      %p194 = por %p192, %p193
      %p196 = scmp.ne.s32.totalorder %s181, %s195
      %p197 = scmp.eq.s32.totalorder %s24, 0
      %p198 = por %p196, %p197
      %s200 = sadd.s32 %s199, 1
      %p203 = scmp.eq.s32.totalorder %s18, 1
      %p204 = scmp.ne.s32.totalorder %s199, %s201
      %p205 = scmp.eq.s32.totalorder %s18, 0
      %p206 = por %p204, %p205
      %p207 = scmp.ne.s32.totalorder %s199, %s201
      %p208 = scmp.eq.s32.totalorder %s23, 1
      %p209 = por %p207, %p208
      %p210 = scmp.ne.s32.totalorder %s201, %s202
      %p211 = scmp.eq.s32.totalorder %s23, 0
      %p212 = por %p210, %p211
      %p213 = scmp.ne.s32.totalorder %s201, %s202
      %p214 = scmp.eq.s32.totalorder %s24, 1
      %p215 = por %p213, %p214
      %p217 = scmp.ne.s32.totalorder %s202, %s216
      %p218 = scmp.eq.s32.totalorder %s24, 0
      %p219 = por %p217, %p218
      %s220 = ssub.s32 %s18, %s25
      %p221 = scmp.eq.s32.totalorder %s220, 0
      %s223 = sadd.s32 %s222, 1
      %s224 = scalar_select %p221, %s222, %s223
      %p227 = pneg %p221
      %p228 = scmp.eq.s32.totalorder %s18, 1
      %p229 = por %p227, %p228
      %p230 = scmp.ne.s32.totalorder %s222, %s225
      %p231 = scmp.eq.s32.totalorder %s18, 0
      %p232 = por %p230, %p231
      %p233 = scmp.ne.s32.totalorder %s222, %s225
      %p234 = scmp.eq.s32.totalorder %s23, 1
      %p235 = por %p233, %p234
      %p236 = scmp.ne.s32.totalorder %s225, %s226
      %p237 = scmp.eq.s32.totalorder %s23, 0
      %p238 = por %p236, %p237
      %p239 = scmp.ne.s32.totalorder %s225, %s226
      %p240 = scmp.eq.s32.totalorder %s24, 1
      %p241 = por %p239, %p240
      %p243 = scmp.ne.s32.totalorder %s226, %s242
      %p244 = scmp.eq.s32.totalorder %s24, 0
      %p245 = por %p243, %p244
      %p246 = scmp.le.s32.totalorder 1, %s18
      %p247 = scmp.lt.s32.totalorder %s18, 3
      %p248 = pnand %p246, %p247
      %p249 = pneg %p248
      // Predicated region
      $region9: #{tpu_custom_call.1} parent=5 // pred_check
        _
      $region10: #{tpu_custom_call.1} parent=5 // pred_check_branch
        %251 = sbr.rel (%p248) target = $region12
      $region11: #{tpu_custom_call.1} parent=5 // pred_region
        %s252 = ssub.s32 %s18, 1
        // Predicated region
        $region13: #{tpu_custom_call.1} parent=11 // pred_check
          %p253 = pneg %p65
        $region14: #{tpu_custom_call.1} parent=11 // pred_check_branch
          %255 = sbr.rel (%p253) target = $region16
        $region15: #{tpu_custom_call.1} parent=11 // pred_region
          _
        $region16: #{tpu_custom_call.1} parent=11 // pred_fallthru
          _
        // Predicated region
        $region17: #{tpu_custom_call.1} parent=11 // pred_check
          %p256 = pneg %p86
        $region18: #{tpu_custom_call.1} parent=11 // pred_check_branch
          %258 = sbr.rel (%p256) target = $region20
        $region19: #{tpu_custom_call.1} parent=11 // pred_region
          _
        $region20: #{tpu_custom_call.1} parent=11 // pred_fallthru
          _
        // Predicated region
        $region21: #{tpu_custom_call.1} parent=11 // pred_check
          %p259 = pneg %p107
        $region22: #{tpu_custom_call.1} parent=11 // pred_check_branch
          %261 = sbr.rel (%p259) target = $region24
        $region23: #{tpu_custom_call.1} parent=11 // pred_region
          _
        $region24: #{tpu_custom_call.1} parent=11 // pred_fallthru
          _
        // Predicated region
        $region25: #{tpu_custom_call.1} parent=11 // pred_check
          %p262 = pneg %p128
        $region26: #{tpu_custom_call.1} parent=11 // pred_check_branch
          %264 = sbr.rel (%p262) target = $region28
        $region27: #{tpu_custom_call.1} parent=11 // pred_region
          _
        $region28: #{tpu_custom_call.1} parent=11 // pred_fallthru
          _
        // Predicated region
        $region29: #{tpu_custom_call.1} parent=11 // pred_check
          %p265 = pneg %p149
        $region30: #{tpu_custom_call.1} parent=11 // pred_check_branch
          %267 = sbr.rel (%p265) target = $region32
        $region31: #{tpu_custom_call.1} parent=11 // pred_region
          _
        $region32: #{tpu_custom_call.1} parent=11 // pred_fallthru
          _
        // Predicated region
        $region33: #{tpu_custom_call.1} parent=11 // pred_check
          %p268 = pneg %p170
        $region34: #{tpu_custom_call.1} parent=11 // pred_check_branch
          %270 = sbr.rel (%p268) target = $region36
        $region35: #{tpu_custom_call.1} parent=11 // pred_region
          _
        $region36: #{tpu_custom_call.1} parent=11 // pred_fallthru
          _
        // Predicated region
        $region37: #{tpu_custom_call.1} parent=11 // pred_check
          %p271 = pneg %p191
        $region38: #{tpu_custom_call.1} parent=11 // pred_check_branch
          %273 = sbr.rel (%p271) target = $region40
        $region39: #{tpu_custom_call.1} parent=11 // pred_region
          _
        $region40: #{tpu_custom_call.1} parent=11 // pred_fallthru
          _
        // Predicated region
        $region41: #{tpu_custom_call.1} parent=11 // pred_check
          %p274 = pneg %p212
        $region42: #{tpu_custom_call.1} parent=11 // pred_check_branch
          %276 = sbr.rel (%p274) target = $region44
        $region43: #{tpu_custom_call.1} parent=11 // pred_region
          _
        $region44: #{tpu_custom_call.1} parent=11 // pred_fallthru
          _
      $region12: #{tpu_custom_call.1} parent=5 // pred_fallthru
        _
      %p277 = scmp.lt.s32.totalorder %s18, 2
      // Predicated region
      $region45: #{tpu_custom_call.1} parent=5 // pred_check
        %p278 = pneg %p277
      $region46: #{tpu_custom_call.1} parent=5 // pred_check_branch
        %280 = sbr.rel (%p278) target = $region48
      $region47: #{tpu_custom_call.1} parent=5 // pred_region
        // Predicated region
        $region49: #{tpu_custom_call.1} parent=47 // pred_check
          %p281 = pneg %p38
        $region50: #{tpu_custom_call.1} parent=47 // pred_check_branch
          %283 = sbr.rel (%p281) target = $region52
        $region51: #{tpu_custom_call.1} parent=47 // pred_region
          %s284 = smul.u32 4, %s18
          %p285 = scmp.lt.s32.totalorder %s284, 7
          %s286 = scalar_select %p285, %s284, 7
          %s287 = smul.addr %s286, 2
          %s288 = scalar_lea.vmem %s0, %s287
          %s289 = smul.u32 4, %s18
        $region52: #{tpu_custom_call.1} parent=47 // pred_fallthru
          _
      $region48: #{tpu_custom_call.1} parent=5 // pred_fallthru
        _
      %p290 = scmp.le.s32.totalorder 1, %s18
      %p291 = scmp.lt.s32.totalorder %s18, 3
      %p292 = pnand %p290, %p291
      %p293 = pneg %p292
      // Predicated region
      $region53: #{tpu_custom_call.1} parent=5 // pred_check
        _
      $region54: #{tpu_custom_call.1} parent=5 // pred_check_branch
        %295 = sbr.rel (%p292) target = $region56
      $region55: #{tpu_custom_call.1} parent=5 // pred_region
        %s296 = ssub.s32 %s18, 1
        %s297 = smul.u32 4, %s23
        %p298 = scmp.lt.s32.totalorder %s297, 7
        %s299 = scalar_select %p298, %s297, 7
        %s300 = smul.addr %s299, 2
        %s301 = scalar_lea.vmem %s0, %s300
        %p302 = pneg %p44
        %p303 = pneg %p41
        %p304 = pneg %p65
        %p305 = pneg %p62
        %p306 = pneg %p86
        %p307 = pneg %p83
        %p308 = pneg %p107
        %p309 = pneg %p104
        %p310 = pneg %p128
        %p311 = pneg %p125
        %p312 = pneg %p149
        %p313 = pneg %p146
        %p314 = pneg %p170
        %p315 = pneg %p167
        %p316 = pneg %p191
        %p317 = pneg %p188
        %p318 = pneg %p212
        %p319 = pneg %p209
        %p320 = pneg %p238
        %p321 = pneg %p235
        %s322 = sand.u32 %s225, 1
        %s323 = scalar_lea.sflag [#allocation3], %s322
        %s324 = sand.u32 %s225, 1
        %s325 = smul.addr %s324, 32
        %s326 = scalar_lea.vmem [#allocation2], %s325
        %s327 = smul.u32 4, %s23
        %p328 = scmp.lt.s32.totalorder %s327, 7
        %s329 = scalar_select %p328, %s327, 7
        %s330 = smul.addr %s329, 2
        %s331 = scalar_lea.vmem %s0, %s330
        %s332 = smul.u32 4, %s23
        %s333 = smul.u32 4, %s23
        %v334 = vld [vmem:[%s331] sm:$0xff]
        %v335 = vld [vmem:[%s1] sm:$0xff]
        %v336 = vld [vmem:[%s1 + $0x8] sm:$0xff]
        %v337 = vld [vmem:[%s1 + $0x10] sm:$0xff]
        %v338 = vld [vmem:[%s1 + $0x18] sm:$0xff]
        %v339 = vld [vmem:[%s2] sm:$0xff]
        %v340 = vld [vmem:[%s2 + $0x8] sm:$0xff]
        %v341 = vld [vmem:[%s2 + $0x10] sm:$0xff]
        %v342 = vld [vmem:[%s2 + $0x18] sm:$0xff]
        %344 = vset.pattern.permute.xlu0 0
        %345 = vperm.xlu0 %344, %v339
        %v346 = vpop.permute.xlu0 %345
        %349 = vset.pattern.permute.xlu0 0
        %350 = vperm.xlu0 %349, %v340
        %v351 = vpop.permute.xlu0 %350
        %354 = vset.pattern.permute.xlu0 0
        %355 = vperm.xlu0 %354, %v341
        %v356 = vpop.permute.xlu0 %355
        %359 = vset.pattern.permute.xlu0 0
        %360 = vperm.xlu0 %359, %v342
        %v361 = vpop.permute.xlu0 %360
        %v364 = vcombine.high %v334, %v334
        %v366 = vunpack.c.l.s4 1983009808
        %v367 = vunpack.c.0.s8 %v366
        %v368 = vlaneseq
        %v369 = vshrl.u32 %v368, 7
        %v370 = vsub.s32 %v367, %v369
        %v371 = vrot.slane %v334, %v370
        %v373 = vunpack.c.l.s4 1983009808
        %v374 = vunpack.c.0.s8 %v373
        %v375 = vlaneseq
        %v376 = vshrl.u32 %v375, 7
        %v377 = vsub.s32 %v374, %v376
        %v378 = vrot.slane %v364, %v377
        %v379 = vcombine.high %v371, %v371
        %v380 = vcombine.high %v378, %v378
        %vm381 = vcmask 15360
        %v383 = vsel %vm381, %v335, 0
        %v386 = vsel %vm381, %v336, 0
        %v389 = vsel %vm381, %v337, 0
        %v392 = vsel %vm381, %v338, 0
        %vm394 = vcmask 1041408
        %v395 = vsel %vm394, %v371, 0
        %v397 = vsel %vm394, %v379, 0
        %v399 = vsel %vm394, %v378, 0
        %v401 = vsel %vm394, %v380, 0
        %403 = vmatprep.subr.mxu0 0.0
        %404 = vmatpush1.msra.mxu0 0.0
        %405 = vmatprep.subr.mxu0 0.0
        %406 = vmatpush1.msra.mxu0 0.0
        %407 = vmatprep.subr.mxu0 0.0
        %408 = vmatpush1.msra.mxu0 0.0
        %409 = vmatprep.subr.mxu0 0.0
        %410 = vmatpush1.msra.mxu0 0.0
        %411 = vmatprep.subr.mxu0 0.0
        %412 = vmatpush1.msra.mxu0 0.0
        %413 = vmatprep.subr.mxu0 0.0
        %414 = vmatpush1.msra.mxu0 0.0
        %415 = vmatprep.subr.mxu0 0.0
        %416 = vmatpush1.msra.mxu0 0.0
        %417 = vmatprep.subr.mxu0 0.0
        %418 = vmatpush1.msra.mxu0 0.0
        %419 = vmatprep.subr.mxu0 0.0
        %420 = vmatpush1.msra.mxu0 0.0
        %421 = vmatprep.subr.mxu0 0.0
        %422 = vmatpush1.msra.mxu0 0.0
        %423 = vmatprep.subr.mxu0 0.0
        %424 = vmatpush1.msra.mxu0 0.0
        %425 = vmatprep.subr.mxu0 0.0
        %426 = vmatpush1.msra.mxu0 0.0
        %427 = vmatprep.subr.mxu0 0.0
        %428 = vmatpush1.msra.mxu0 0.0
        %429 = vmatprep.subr.mxu0 0.0
        %430 = vmatpush1.msra.mxu0 0.0
        %431 = vmatprep.subr.mxu0 0.0
        %432 = vmatpush1.msra.mxu0 0.0
        %v433 = vand.u32 %v397, 4294901760
        %434 = vmatprep.subr.mxu0 %v433
        %v435 = vand.u32 %v395, 4294901760
        %436 = vmatpush1.msra.mxu0 %v435
        %437 = vmatprep.subr.mxu0 0.0
        %438 = vmatpush2.msra.mxu0 0.0
        %439 = vmatprep.subr.mxu0 0.0
        %440 = vmatpush2.msra.mxu0 0.0
        %441 = vmatprep.subr.mxu0 0.0
        %442 = vmatpush2.msra.mxu0 0.0
        %443 = vmatprep.subr.mxu0 0.0
        %444 = vmatpush2.msra.mxu0 0.0
        %445 = vmatprep.subr.mxu0 0.0
        %446 = vmatpush2.msra.mxu0 0.0
        %447 = vmatprep.subr.mxu0 0.0
        %448 = vmatpush2.msra.mxu0 0.0
        %449 = vmatprep.subr.mxu0 0.0
        %450 = vmatpush2.msra.mxu0 0.0
        %451 = vmatprep.subr.mxu0 0.0
        %452 = vmatpush2.msra.mxu0 0.0
        %453 = vmatprep.subr.mxu0 0.0
        %454 = vmatpush2.msra.mxu0 0.0
        %455 = vmatprep.subr.mxu0 0.0
        %456 = vmatpush2.msra.mxu0 0.0
        %457 = vmatprep.subr.mxu0 0.0
        %458 = vmatpush2.msra.mxu0 0.0
        %459 = vmatprep.subr.mxu0 0.0
        %460 = vmatpush2.msra.mxu0 0.0
        %461 = vmatprep.subr.mxu0 0.0
        %462 = vmatpush2.msra.mxu0 0.0
        %463 = vmatprep.subr.mxu0 0.0
        %464 = vmatpush2.msra.mxu0 0.0
        %465 = vmatprep.subr.mxu0 0.0
        %466 = vmatpush2.msra.mxu0 0.0
        %467 = vmatprep.subr.mxu0 0.0
        %468 = vmatpush2.msra.mxu0 0.0
        %469 = vmatprep.mubr.f32.mxu0 0.0
        %v470 = vand.u32 %v383, 4294901760
        %v471 = vsub.f32 %v383, %v470
        %v472 = vand.u32 %v471, 4294901760
        %v473 = vsub.f32 %v471, %v472
        %v474 = vand.u32 %v473, 4294901760
        %475 = vmatmul.mubr.f32.gmra.mxu0 %v474
        %v476 = vpop.f32.mrf.mxu0
        %v477 = vadd.f32 %v346, %v476
        %v478 = vpop.f32.mrf.mxu0
        %v479 = vadd.f32 %v346, %v478
        %480 = vmatprep.mubr.f32.mxu0 0.0
        %v481 = vand.u32 %v386, 4294901760
        %v482 = vsub.f32 %v386, %v481
        %v483 = vand.u32 %v482, 4294901760
        %v484 = vsub.f32 %v482, %v483
        %v485 = vand.u32 %v484, 4294901760
        %486 = vmatmul.mubr.f32.gmra.mxu0 %v485
        %v487 = vpop.f32.mrf.mxu0
        %v488 = vadd.f32 %v351, %v487
        %v489 = vpop.f32.mrf.mxu0
        %v490 = vadd.f32 %v351, %v489
        %491 = vmatprep.mubr.f32.mxu0 0.0
        %v492 = vand.u32 %v389, 4294901760
        %v493 = vsub.f32 %v389, %v492
        %v494 = vand.u32 %v493, 4294901760
        %v495 = vsub.f32 %v493, %v494
        %v496 = vand.u32 %v495, 4294901760
        %497 = vmatmul.mubr.f32.gmra.mxu0 %v496
        %v498 = vpop.f32.mrf.mxu0
        %v499 = vadd.f32 %v356, %v498
        %v500 = vpop.f32.mrf.mxu0
        %v501 = vadd.f32 %v356, %v500
        %502 = vmatprep.mubr.f32.mxu0 0.0
        %v503 = vand.u32 %v392, 4294901760
        %v504 = vsub.f32 %v392, %v503
        %v505 = vand.u32 %v504, 4294901760
        %v506 = vsub.f32 %v504, %v505
        %v507 = vand.u32 %v506, 4294901760
        %508 = vmatmul.mubr.f32.gmra.mxu0 %v507
        %v509 = vpop.f32.mrf.mxu0
        %v510 = vadd.f32 %v361, %v509
        %v511 = vpop.f32.mrf.mxu0
        %v512 = vadd.f32 %v361, %v511
        %513 = vdwg.mxu0
        %514 = vmatprep.subr.mxu0 0.0
        %515 = vmatpush1.msra.mxu0 0.0
        %516 = vmatprep.subr.mxu0 0.0
        %517 = vmatpush1.msra.mxu0 0.0
        %518 = vmatprep.subr.mxu0 0.0
        %519 = vmatpush1.msra.mxu0 0.0
        %520 = vmatprep.subr.mxu0 0.0
        %521 = vmatpush1.msra.mxu0 0.0
        %522 = vmatprep.subr.mxu0 0.0
        %523 = vmatpush1.msra.mxu0 0.0
        %524 = vmatprep.subr.mxu0 0.0
        %525 = vmatpush1.msra.mxu0 0.0
        %526 = vmatprep.subr.mxu0 0.0
        %527 = vmatpush1.msra.mxu0 0.0
        %528 = vmatprep.subr.mxu0 0.0
        %529 = vmatpush1.msra.mxu0 0.0
        %530 = vmatprep.subr.mxu0 0.0
        %531 = vmatpush1.msra.mxu0 0.0
        %532 = vmatprep.subr.mxu0 0.0
        %533 = vmatpush1.msra.mxu0 0.0
        %534 = vmatprep.subr.mxu0 0.0
        %535 = vmatpush1.msra.mxu0 0.0
        %536 = vmatprep.subr.mxu0 0.0
        %537 = vmatpush1.msra.mxu0 0.0
        %538 = vmatprep.subr.mxu0 0.0
        %539 = vmatpush1.msra.mxu0 0.0
        %540 = vmatprep.subr.mxu0 0.0
        %541 = vmatpush1.msra.mxu0 0.0
        %542 = vmatprep.subr.mxu0 0.0
        %543 = vmatpush1.msra.mxu0 0.0
        %v544 = vand.u32 %v397, 4294901760
        %v545 = vsub.f32 %v397, %v544
        %v546 = vand.u32 %v545, 4294901760
        %v547 = vsub.f32 %v545, %v546
        %v548 = vand.u32 %v547, 4294901760
        %549 = vmatprep.subr.mxu0 %v548
        %v550 = vand.u32 %v395, 4294901760
        %v551 = vsub.f32 %v395, %v550
        %v552 = vand.u32 %v551, 4294901760
        %v553 = vsub.f32 %v551, %v552
        %v554 = vand.u32 %v553, 4294901760
        %555 = vmatpush1.msra.mxu0 %v554
        %556 = vmatprep.subr.mxu0 0.0
        %557 = vmatpush2.msra.mxu0 0.0
        %558 = vmatprep.subr.mxu0 0.0
        %559 = vmatpush2.msra.mxu0 0.0
        %560 = vmatprep.subr.mxu0 0.0
        %561 = vmatpush2.msra.mxu0 0.0
        %562 = vmatprep.subr.mxu0 0.0
        %563 = vmatpush2.msra.mxu0 0.0
        %564 = vmatprep.subr.mxu0 0.0
        %565 = vmatpush2.msra.mxu0 0.0
        %566 = vmatprep.subr.mxu0 0.0
        %567 = vmatpush2.msra.mxu0 0.0
        %568 = vmatprep.subr.mxu0 0.0
        %569 = vmatpush2.msra.mxu0 0.0
        %570 = vmatprep.subr.mxu0 0.0
        %571 = vmatpush2.msra.mxu0 0.0
        %572 = vmatprep.subr.mxu0 0.0
        %573 = vmatpush2.msra.mxu0 0.0
        %574 = vmatprep.subr.mxu0 0.0
        %575 = vmatpush2.msra.mxu0 0.0
        %576 = vmatprep.subr.mxu0 0.0
        %577 = vmatpush2.msra.mxu0 0.0
        %578 = vmatprep.subr.mxu0 0.0
        %579 = vmatpush2.msra.mxu0 0.0
        %580 = vmatprep.subr.mxu0 0.0
        %581 = vmatpush2.msra.mxu0 0.0
        %582 = vmatprep.subr.mxu0 0.0
        %583 = vmatpush2.msra.mxu0 0.0
        %584 = vmatprep.subr.mxu0 0.0
        %585 = vmatpush2.msra.mxu0 0.0
        %586 = vmatprep.subr.mxu0 0.0
        %587 = vmatpush2.msra.mxu0 0.0
        %588 = vmatprep.mubr.f32.mxu0 0.0
        %v589 = vand.u32 %v383, 4294901760
        %590 = vmatmul.mubr.f32.gmra.mxu0 %v589
        %v591 = vpop.f32.mrf.mxu0
        %v592 = vadd.f32 %v477, %v591
        %v593 = vpop.f32.mrf.mxu0
        %v594 = vadd.f32 %v479, %v593
        %595 = vmatprep.mubr.f32.mxu0 0.0
        %v596 = vand.u32 %v386, 4294901760
        %597 = vmatmul.mubr.f32.gmra.mxu0 %v596
        %v598 = vpop.f32.mrf.mxu0
        %v599 = vadd.f32 %v488, %v598
        %v600 = vpop.f32.mrf.mxu0
        %v601 = vadd.f32 %v490, %v600
        %602 = vmatprep.mubr.f32.mxu0 0.0
        %v603 = vand.u32 %v389, 4294901760
        %604 = vmatmul.mubr.f32.gmra.mxu0 %v603
        %v605 = vpop.f32.mrf.mxu0
        %v606 = vadd.f32 %v499, %v605
        %v607 = vpop.f32.mrf.mxu0
        %v608 = vadd.f32 %v501, %v607
        %609 = vmatprep.mubr.f32.mxu0 0.0
        %v610 = vand.u32 %v392, 4294901760
        %611 = vmatmul.mubr.f32.gmra.mxu0 %v610
        %v612 = vpop.f32.mrf.mxu0
        %v613 = vadd.f32 %v510, %v612
        %v614 = vpop.f32.mrf.mxu0
        %v615 = vadd.f32 %v512, %v614
        %616 = vdwg.mxu0
        %617 = vmatprep.subr.mxu0 0.0
        %618 = vmatpush1.msra.mxu0 0.0
        %619 = vmatprep.subr.mxu0 0.0
        %620 = vmatpush1.msra.mxu0 0.0
        %621 = vmatprep.subr.mxu0 0.0
        %622 = vmatpush1.msra.mxu0 0.0
        %623 = vmatprep.subr.mxu0 0.0
        %624 = vmatpush1.msra.mxu0 0.0
        %625 = vmatprep.subr.mxu0 0.0
        %626 = vmatpush1.msra.mxu0 0.0
        %627 = vmatprep.subr.mxu0 0.0
        %628 = vmatpush1.msra.mxu0 0.0
        %629 = vmatprep.subr.mxu0 0.0
        %630 = vmatpush1.msra.mxu0 0.0
        %631 = vmatprep.subr.mxu0 0.0
        %632 = vmatpush1.msra.mxu0 0.0
        %633 = vmatprep.subr.mxu0 0.0
        %634 = vmatpush1.msra.mxu0 0.0
        %635 = vmatprep.subr.mxu0 0.0
        %636 = vmatpush1.msra.mxu0 0.0
        %637 = vmatprep.subr.mxu0 0.0
        %638 = vmatpush1.msra.mxu0 0.0
        %639 = vmatprep.subr.mxu0 0.0
        %640 = vmatpush1.msra.mxu0 0.0
        %641 = vmatprep.subr.mxu0 0.0
        %642 = vmatpush1.msra.mxu0 0.0
        %643 = vmatprep.subr.mxu0 0.0
        %644 = vmatpush1.msra.mxu0 0.0
        %645 = vmatprep.subr.mxu0 0.0
        %646 = vmatpush1.msra.mxu0 0.0
        %v647 = vand.u32 %v397, 4294901760
        %v648 = vsub.f32 %v397, %v647
        %649 = vmatprep.subr.mxu0 %v648
        %v650 = vand.u32 %v395, 4294901760
        %v651 = vsub.f32 %v395, %v650
        %652 = vmatpush1.msra.mxu0 %v651
        %653 = vmatprep.subr.mxu0 0.0
        %654 = vmatpush2.msra.mxu0 0.0
        %655 = vmatprep.subr.mxu0 0.0
        %656 = vmatpush2.msra.mxu0 0.0
        %657 = vmatprep.subr.mxu0 0.0
        %658 = vmatpush2.msra.mxu0 0.0
        %659 = vmatprep.subr.mxu0 0.0
        %660 = vmatpush2.msra.mxu0 0.0
        %661 = vmatprep.subr.mxu0 0.0
        %662 = vmatpush2.msra.mxu0 0.0
        %663 = vmatprep.subr.mxu0 0.0
        %664 = vmatpush2.msra.mxu0 0.0
        %665 = vmatprep.subr.mxu0 0.0
        %666 = vmatpush2.msra.mxu0 0.0
        %667 = vmatprep.subr.mxu0 0.0
        %668 = vmatpush2.msra.mxu0 0.0
        %669 = vmatprep.subr.mxu0 0.0
        %670 = vmatpush2.msra.mxu0 0.0
        %671 = vmatprep.subr.mxu0 0.0
        %672 = vmatpush2.msra.mxu0 0.0
        %673 = vmatprep.subr.mxu0 0.0
        %674 = vmatpush2.msra.mxu0 0.0
        %675 = vmatprep.subr.mxu0 0.0
        %676 = vmatpush2.msra.mxu0 0.0
        %677 = vmatprep.subr.mxu0 0.0
        %678 = vmatpush2.msra.mxu0 0.0
        %679 = vmatprep.subr.mxu0 0.0
        %680 = vmatpush2.msra.mxu0 0.0
        %681 = vmatprep.subr.mxu0 0.0
        %682 = vmatpush2.msra.mxu0 0.0
        %683 = vmatprep.subr.mxu0 0.0
        %684 = vmatpush2.msra.mxu0 0.0
        %685 = vmatprep.mubr.f32.mxu0 0.0
        %v686 = vand.u32 %v383, 4294901760
        %v687 = vsub.f32 %v383, %v686
        %688 = vmatmul.mubr.f32.gmra.mxu0 %v687
        %v689 = vpop.f32.mrf.mxu0
        %v690 = vadd.f32 %v592, %v689
        %v691 = vpop.f32.mrf.mxu0
        %v692 = vadd.f32 %v594, %v691
        %693 = vmatprep.mubr.f32.mxu0 0.0
        %v694 = vand.u32 %v386, 4294901760
        %v695 = vsub.f32 %v386, %v694
        %696 = vmatmul.mubr.f32.gmra.mxu0 %v695
        %v697 = vpop.f32.mrf.mxu0
        %v698 = vadd.f32 %v599, %v697
        %v699 = vpop.f32.mrf.mxu0
        %v700 = vadd.f32 %v601, %v699
        %701 = vmatprep.mubr.f32.mxu0 0.0
        %v702 = vand.u32 %v389, 4294901760
        %v703 = vsub.f32 %v389, %v702
        %704 = vmatmul.mubr.f32.gmra.mxu0 %v703
        %v705 = vpop.f32.mrf.mxu0
        %v706 = vadd.f32 %v606, %v705
        %v707 = vpop.f32.mrf.mxu0
        %v708 = vadd.f32 %v608, %v707
        %709 = vmatprep.mubr.f32.mxu0 0.0
        %v710 = vand.u32 %v392, 4294901760
        %v711 = vsub.f32 %v392, %v710
        %712 = vmatmul.mubr.f32.gmra.mxu0 %v711
        %v713 = vpop.f32.mrf.mxu0
        %v714 = vadd.f32 %v613, %v713
        %v715 = vpop.f32.mrf.mxu0
        %v716 = vadd.f32 %v615, %v715
        %717 = vdwg.mxu0
        %718 = vmatprep.subr.mxu0 0.0
        %719 = vmatpush1.msra.mxu0 0.0
        %720 = vmatprep.subr.mxu0 0.0
        %721 = vmatpush1.msra.mxu0 0.0
        %722 = vmatprep.subr.mxu0 0.0
        %723 = vmatpush1.msra.mxu0 0.0
        %724 = vmatprep.subr.mxu0 0.0
        %725 = vmatpush1.msra.mxu0 0.0
        %726 = vmatprep.subr.mxu0 0.0
        %727 = vmatpush1.msra.mxu0 0.0
        %728 = vmatprep.subr.mxu0 0.0
        %729 = vmatpush1.msra.mxu0 0.0
        %730 = vmatprep.subr.mxu0 0.0
        %731 = vmatpush1.msra.mxu0 0.0
        %732 = vmatprep.subr.mxu0 0.0
        %733 = vmatpush1.msra.mxu0 0.0
        %734 = vmatprep.subr.mxu0 0.0
        %735 = vmatpush1.msra.mxu0 0.0
        %736 = vmatprep.subr.mxu0 0.0
        %737 = vmatpush1.msra.mxu0 0.0
        %738 = vmatprep.subr.mxu0 0.0
        %739 = vmatpush1.msra.mxu0 0.0
        %740 = vmatprep.subr.mxu0 0.0
        %741 = vmatpush1.msra.mxu0 0.0
        %742 = vmatprep.subr.mxu0 0.0
        %743 = vmatpush1.msra.mxu0 0.0
        %744 = vmatprep.subr.mxu0 0.0
        %745 = vmatpush1.msra.mxu0 0.0
        %746 = vmatprep.subr.mxu0 0.0
        %747 = vmatpush1.msra.mxu0 0.0
        %v748 = vand.u32 %v397, 4294901760
        %749 = vmatprep.subr.mxu0 %v748
        %v750 = vand.u32 %v395, 4294901760
        %751 = vmatpush1.msra.mxu0 %v750
        %752 = vmatprep.subr.mxu0 0.0
        %753 = vmatpush2.msra.mxu0 0.0
        %754 = vmatprep.subr.mxu0 0.0
        %755 = vmatpush2.msra.mxu0 0.0
        %756 = vmatprep.subr.mxu0 0.0
        %757 = vmatpush2.msra.mxu0 0.0
        %758 = vmatprep.subr.mxu0 0.0
        %759 = vmatpush2.msra.mxu0 0.0
        %760 = vmatprep.subr.mxu0 0.0
        %761 = vmatpush2.msra.mxu0 0.0
        %762 = vmatprep.subr.mxu0 0.0
        %763 = vmatpush2.msra.mxu0 0.0
        %764 = vmatprep.subr.mxu0 0.0
        %765 = vmatpush2.msra.mxu0 0.0
        %766 = vmatprep.subr.mxu0 0.0
        %767 = vmatpush2.msra.mxu0 0.0
        %768 = vmatprep.subr.mxu0 0.0
        %769 = vmatpush2.msra.mxu0 0.0
        %770 = vmatprep.subr.mxu0 0.0
        %771 = vmatpush2.msra.mxu0 0.0
        %772 = vmatprep.subr.mxu0 0.0
        %773 = vmatpush2.msra.mxu0 0.0
        %774 = vmatprep.subr.mxu0 0.0
        %775 = vmatpush2.msra.mxu0 0.0
        %776 = vmatprep.subr.mxu0 0.0
        %777 = vmatpush2.msra.mxu0 0.0
        %778 = vmatprep.subr.mxu0 0.0
        %779 = vmatpush2.msra.mxu0 0.0
        %780 = vmatprep.subr.mxu0 0.0
        %781 = vmatpush2.msra.mxu0 0.0
        %782 = vmatprep.subr.mxu0 0.0
        %783 = vmatpush2.msra.mxu0 0.0
        %784 = vmatprep.mubr.f32.mxu0 0.0
        %v785 = vand.u32 %v383, 4294901760
        %v786 = vsub.f32 %v383, %v785
        %v787 = vand.u32 %v786, 4294901760
        %788 = vmatmul.mubr.f32.gmra.mxu0 %v787
        %v789 = vpop.f32.mrf.mxu0
        %v790 = vadd.f32 %v690, %v789
        %v791 = vpop.f32.mrf.mxu0
        %v792 = vadd.f32 %v692, %v791
        %793 = vmatprep.mubr.f32.mxu0 0.0
        %v794 = vand.u32 %v386, 4294901760
        %v795 = vsub.f32 %v386, %v794
        %v796 = vand.u32 %v795, 4294901760
        %797 = vmatmul.mubr.f32.gmra.mxu0 %v796
        %v798 = vpop.f32.mrf.mxu0
        %v799 = vadd.f32 %v698, %v798
        %v800 = vpop.f32.mrf.mxu0
        %v801 = vadd.f32 %v700, %v800
        %802 = vmatprep.mubr.f32.mxu0 0.0
        %v803 = vand.u32 %v389, 4294901760
        %v804 = vsub.f32 %v389, %v803
        %v805 = vand.u32 %v804, 4294901760
        %806 = vmatmul.mubr.f32.gmra.mxu0 %v805
        %v807 = vpop.f32.mrf.mxu0
        %v808 = vadd.f32 %v706, %v807
        %v809 = vpop.f32.mrf.mxu0
        %v810 = vadd.f32 %v708, %v809
        %811 = vmatprep.mubr.f32.mxu0 0.0
        %v812 = vand.u32 %v392, 4294901760
        %v813 = vsub.f32 %v392, %v812
        %v814 = vand.u32 %v813, 4294901760
        %815 = vmatmul.mubr.f32.gmra.mxu0 %v814
        %v816 = vpop.f32.mrf.mxu0
        %v817 = vadd.f32 %v714, %v816
        %v818 = vpop.f32.mrf.mxu0
        %v819 = vadd.f32 %v716, %v818
        %820 = vdwg.mxu0
        %821 = vmatprep.subr.mxu0 0.0
        %822 = vmatpush1.msra.mxu0 0.0
        %823 = vmatprep.subr.mxu0 0.0
        %824 = vmatpush1.msra.mxu0 0.0
        %825 = vmatprep.subr.mxu0 0.0
        %826 = vmatpush1.msra.mxu0 0.0
        %827 = vmatprep.subr.mxu0 0.0
        %828 = vmatpush1.msra.mxu0 0.0
        %829 = vmatprep.subr.mxu0 0.0
        %830 = vmatpush1.msra.mxu0 0.0
        %831 = vmatprep.subr.mxu0 0.0
        %832 = vmatpush1.msra.mxu0 0.0
        %833 = vmatprep.subr.mxu0 0.0
        %834 = vmatpush1.msra.mxu0 0.0
        %835 = vmatprep.subr.mxu0 0.0
        %836 = vmatpush1.msra.mxu0 0.0
        %837 = vmatprep.subr.mxu0 0.0
        %838 = vmatpush1.msra.mxu0 0.0
        %839 = vmatprep.subr.mxu0 0.0
        %840 = vmatpush1.msra.mxu0 0.0
        %841 = vmatprep.subr.mxu0 0.0
        %842 = vmatpush1.msra.mxu0 0.0
        %843 = vmatprep.subr.mxu0 0.0
        %844 = vmatpush1.msra.mxu0 0.0
        %845 = vmatprep.subr.mxu0 0.0
        %846 = vmatpush1.msra.mxu0 0.0
        %847 = vmatprep.subr.mxu0 0.0
        %848 = vmatpush1.msra.mxu0 0.0
        %849 = vmatprep.subr.mxu0 0.0
        %850 = vmatpush1.msra.mxu0 0.0
        %v851 = vand.u32 %v397, 4294901760
        %v852 = vsub.f32 %v397, %v851
        %v853 = vand.u32 %v852, 4294901760
        %854 = vmatprep.subr.mxu0 %v853
        %v855 = vand.u32 %v395, 4294901760
        %v856 = vsub.f32 %v395, %v855
        %v857 = vand.u32 %v856, 4294901760
        %858 = vmatpush1.msra.mxu0 %v857
        %859 = vmatprep.subr.mxu0 0.0
        %860 = vmatpush2.msra.mxu0 0.0
        %861 = vmatprep.subr.mxu0 0.0
        %862 = vmatpush2.msra.mxu0 0.0
        %863 = vmatprep.subr.mxu0 0.0
        %864 = vmatpush2.msra.mxu0 0.0
        %865 = vmatprep.subr.mxu0 0.0
        %866 = vmatpush2.msra.mxu0 0.0
        %867 = vmatprep.subr.mxu0 0.0
        %868 = vmatpush2.msra.mxu0 0.0
        %869 = vmatprep.subr.mxu0 0.0
        %870 = vmatpush2.msra.mxu0 0.0
        %871 = vmatprep.subr.mxu0 0.0
        %872 = vmatpush2.msra.mxu0 0.0
        %873 = vmatprep.subr.mxu0 0.0
        %874 = vmatpush2.msra.mxu0 0.0
        %875 = vmatprep.subr.mxu0 0.0
        %876 = vmatpush2.msra.mxu0 0.0
        %877 = vmatprep.subr.mxu0 0.0
        %878 = vmatpush2.msra.mxu0 0.0
        %879 = vmatprep.subr.mxu0 0.0
        %880 = vmatpush2.msra.mxu0 0.0
        %881 = vmatprep.subr.mxu0 0.0
        %882 = vmatpush2.msra.mxu0 0.0
        %883 = vmatprep.subr.mxu0 0.0
        %884 = vmatpush2.msra.mxu0 0.0
        %885 = vmatprep.subr.mxu0 0.0
        %886 = vmatpush2.msra.mxu0 0.0
        %887 = vmatprep.subr.mxu0 0.0
        %888 = vmatpush2.msra.mxu0 0.0
        %889 = vmatprep.subr.mxu0 0.0
        %890 = vmatpush2.msra.mxu0 0.0
        %891 = vmatprep.mubr.f32.mxu0 0.0
        %v892 = vand.u32 %v383, 4294901760
        %893 = vmatmul.mubr.f32.gmra.mxu0 %v892
        %v894 = vpop.f32.mrf.mxu0
        %v895 = vadd.f32 %v790, %v894
        %v896 = vpop.f32.mrf.mxu0
        %v897 = vadd.f32 %v792, %v896
        %898 = vmatprep.mubr.f32.mxu0 0.0
        %v899 = vand.u32 %v386, 4294901760
        %900 = vmatmul.mubr.f32.gmra.mxu0 %v899
        %v901 = vpop.f32.mrf.mxu0
        %v902 = vadd.f32 %v799, %v901
        %v903 = vpop.f32.mrf.mxu0
        %v904 = vadd.f32 %v801, %v903
        %905 = vmatprep.mubr.f32.mxu0 0.0
        %v906 = vand.u32 %v389, 4294901760
        %907 = vmatmul.mubr.f32.gmra.mxu0 %v906
        %v908 = vpop.f32.mrf.mxu0
        %v909 = vadd.f32 %v808, %v908
        %v910 = vpop.f32.mrf.mxu0
        %v911 = vadd.f32 %v810, %v910
        %912 = vmatprep.mubr.f32.mxu0 0.0
        %v913 = vand.u32 %v392, 4294901760
        %914 = vmatmul.mubr.f32.gmra.mxu0 %v913
        %v915 = vpop.f32.mrf.mxu0
        %v916 = vadd.f32 %v817, %v915
        %v917 = vpop.f32.mrf.mxu0
        %v918 = vadd.f32 %v819, %v917
        %919 = vdwg.mxu0
        %920 = vmatprep.subr.mxu0 0.0
        %921 = vmatpush1.msra.mxu0 0.0
        %922 = vmatprep.subr.mxu0 0.0
        %923 = vmatpush1.msra.mxu0 0.0
        %924 = vmatprep.subr.mxu0 0.0
        %925 = vmatpush1.msra.mxu0 0.0
        %926 = vmatprep.subr.mxu0 0.0
        %927 = vmatpush1.msra.mxu0 0.0
        %928 = vmatprep.subr.mxu0 0.0
        %929 = vmatpush1.msra.mxu0 0.0
        %930 = vmatprep.subr.mxu0 0.0
        %931 = vmatpush1.msra.mxu0 0.0
        %932 = vmatprep.subr.mxu0 0.0
        %933 = vmatpush1.msra.mxu0 0.0
        %934 = vmatprep.subr.mxu0 0.0
        %935 = vmatpush1.msra.mxu0 0.0
        %936 = vmatprep.subr.mxu0 0.0
        %937 = vmatpush1.msra.mxu0 0.0
        %938 = vmatprep.subr.mxu0 0.0
        %939 = vmatpush1.msra.mxu0 0.0
        %940 = vmatprep.subr.mxu0 0.0
        %941 = vmatpush1.msra.mxu0 0.0
        %942 = vmatprep.subr.mxu0 0.0
        %943 = vmatpush1.msra.mxu0 0.0
        %944 = vmatprep.subr.mxu0 0.0
        %945 = vmatpush1.msra.mxu0 0.0
        %946 = vmatprep.subr.mxu0 0.0
        %947 = vmatpush1.msra.mxu0 0.0
        %948 = vmatprep.subr.mxu0 0.0
        %949 = vmatpush1.msra.mxu0 0.0
        %v950 = vand.u32 %v397, 4294901760
        %951 = vmatprep.subr.mxu0 %v950
        %v952 = vand.u32 %v395, 4294901760
        %953 = vmatpush1.msra.mxu0 %v952
        %954 = vmatprep.subr.mxu0 0.0
        %955 = vmatpush2.msra.mxu0 0.0
        %956 = vmatprep.subr.mxu0 0.0
        %957 = vmatpush2.msra.mxu0 0.0
        %958 = vmatprep.subr.mxu0 0.0
        %959 = vmatpush2.msra.mxu0 0.0
        %960 = vmatprep.subr.mxu0 0.0
        %961 = vmatpush2.msra.mxu0 0.0
        %962 = vmatprep.subr.mxu0 0.0
        %963 = vmatpush2.msra.mxu0 0.0
        %964 = vmatprep.subr.mxu0 0.0
        %965 = vmatpush2.msra.mxu0 0.0
        %966 = vmatprep.subr.mxu0 0.0
        %967 = vmatpush2.msra.mxu0 0.0
        %968 = vmatprep.subr.mxu0 0.0
        %969 = vmatpush2.msra.mxu0 0.0
        %970 = vmatprep.subr.mxu0 0.0
        %971 = vmatpush2.msra.mxu0 0.0
        %972 = vmatprep.subr.mxu0 0.0
        %973 = vmatpush2.msra.mxu0 0.0
        %974 = vmatprep.subr.mxu0 0.0
        %975 = vmatpush2.msra.mxu0 0.0
        %976 = vmatprep.subr.mxu0 0.0
        %977 = vmatpush2.msra.mxu0 0.0
        %978 = vmatprep.subr.mxu0 0.0
        %979 = vmatpush2.msra.mxu0 0.0
        %980 = vmatprep.subr.mxu0 0.0
        %981 = vmatpush2.msra.mxu0 0.0
        %982 = vmatprep.subr.mxu0 0.0
        %983 = vmatpush2.msra.mxu0 0.0
        %984 = vmatprep.subr.mxu0 0.0
        %985 = vmatpush2.msra.mxu0 0.0
        %986 = vmatprep.mubr.f32.mxu0 0.0
        %v987 = vand.u32 %v383, 4294901760
        %988 = vmatmul.mubr.f32.gmra.mxu0 %v987
        %v989 = vpop.f32.mrf.mxu0
        %v990 = vadd.f32 %v895, %v989
        %v991 = vpop.f32.mrf.mxu0
        %v992 = vadd.f32 %v897, %v991
        %993 = vmatprep.mubr.f32.mxu0 0.0
        %v994 = vand.u32 %v386, 4294901760
        %995 = vmatmul.mubr.f32.gmra.mxu0 %v994
        %v996 = vpop.f32.mrf.mxu0
        %v997 = vadd.f32 %v902, %v996
        %v998 = vpop.f32.mrf.mxu0
        %v999 = vadd.f32 %v904, %v998
        %1000 = vmatprep.mubr.f32.mxu0 0.0
        %v1001 = vand.u32 %v389, 4294901760
        %1002 = vmatmul.mubr.f32.gmra.mxu0 %v1001
        %v1003 = vpop.f32.mrf.mxu0
        %v1004 = vadd.f32 %v909, %v1003
        %v1005 = vpop.f32.mrf.mxu0
        %v1006 = vadd.f32 %v911, %v1005
        %1007 = vmatprep.mubr.f32.mxu0 0.0
        %v1008 = vand.u32 %v392, 4294901760
        %1009 = vmatmul.mubr.f32.gmra.mxu0 %v1008
        %v1010 = vpop.f32.mrf.mxu0
        %v1011 = vadd.f32 %v916, %v1010
        %v1012 = vpop.f32.mrf.mxu0
        %v1013 = vadd.f32 %v918, %v1012
        %1014 = vdwg.mxu0
        %1015 = vmatprep.subr.mxu0 0.0
        %1016 = vmatpush1.msra.mxu0 0.0
        %1017 = vmatprep.subr.mxu0 0.0
        %1018 = vmatpush1.msra.mxu0 0.0
        %1019 = vmatprep.subr.mxu0 0.0
        %1020 = vmatpush1.msra.mxu0 0.0
        %1021 = vmatprep.subr.mxu0 0.0
        %1022 = vmatpush1.msra.mxu0 0.0
        %1023 = vmatprep.subr.mxu0 0.0
        %1024 = vmatpush1.msra.mxu0 0.0
        %1025 = vmatprep.subr.mxu0 0.0
        %1026 = vmatpush1.msra.mxu0 0.0
        %1027 = vmatprep.subr.mxu0 0.0
        %1028 = vmatpush1.msra.mxu0 0.0
        %1029 = vmatprep.subr.mxu0 0.0
        %1030 = vmatpush1.msra.mxu0 0.0
        %1031 = vmatprep.subr.mxu0 0.0
        %1032 = vmatpush1.msra.mxu0 0.0
        %1033 = vmatprep.subr.mxu0 0.0
        %1034 = vmatpush1.msra.mxu0 0.0
        %1035 = vmatprep.subr.mxu0 0.0
        %1036 = vmatpush1.msra.mxu0 0.0
        %1037 = vmatprep.subr.mxu0 0.0
        %1038 = vmatpush1.msra.mxu0 0.0
        %1039 = vmatprep.subr.mxu0 0.0
        %1040 = vmatpush1.msra.mxu0 0.0
        %1041 = vmatprep.subr.mxu0 0.0
        %1042 = vmatpush1.msra.mxu0 0.0
        %1043 = vmatprep.subr.mxu0 0.0
        %1044 = vmatpush1.msra.mxu0 0.0
        %v1045 = vand.u32 %v401, 4294901760
        %1046 = vmatprep.subr.mxu0 %v1045
        %v1047 = vand.u32 %v399, 4294901760
        %1048 = vmatpush1.msra.mxu0 %v1047
        %1049 = vmatprep.subr.mxu0 0.0
        %1050 = vmatpush2.msra.mxu0 0.0
        %1051 = vmatprep.subr.mxu0 0.0
        %1052 = vmatpush2.msra.mxu0 0.0
        %1053 = vmatprep.subr.mxu0 0.0
        %1054 = vmatpush2.msra.mxu0 0.0
        %1055 = vmatprep.subr.mxu0 0.0
        %1056 = vmatpush2.msra.mxu0 0.0
        %1057 = vmatprep.subr.mxu0 0.0
        %1058 = vmatpush2.msra.mxu0 0.0
        %1059 = vmatprep.subr.mxu0 0.0
        %1060 = vmatpush2.msra.mxu0 0.0
        %1061 = vmatprep.subr.mxu0 0.0
        %1062 = vmatpush2.msra.mxu0 0.0
        %1063 = vmatprep.subr.mxu0 0.0
        %1064 = vmatpush2.msra.mxu0 0.0
        %1065 = vmatprep.subr.mxu0 0.0
        %1066 = vmatpush2.msra.mxu0 0.0
        %1067 = vmatprep.subr.mxu0 0.0
        %1068 = vmatpush2.msra.mxu0 0.0
        %1069 = vmatprep.subr.mxu0 0.0
        %1070 = vmatpush2.msra.mxu0 0.0
        %1071 = vmatprep.subr.mxu0 0.0
        %1072 = vmatpush2.msra.mxu0 0.0
        %1073 = vmatprep.subr.mxu0 0.0
        %1074 = vmatpush2.msra.mxu0 0.0
        %1075 = vmatprep.subr.mxu0 0.0
        %1076 = vmatpush2.msra.mxu0 0.0
        %1077 = vmatprep.subr.mxu0 0.0
        %1078 = vmatpush2.msra.mxu0 0.0
        %1079 = vmatprep.subr.mxu0 0.0
        %1080 = vmatpush2.msra.mxu0 0.0
        %1081 = vmatprep.mubr.f32.mxu0 0.0
        %v1082 = vand.u32 %v383, 4294901760
        %v1083 = vsub.f32 %v383, %v1082
        %v1084 = vand.u32 %v1083, 4294901760
        %v1085 = vsub.f32 %v1083, %v1084
        %v1086 = vand.u32 %v1085, 4294901760
        %1087 = vmatmul.mubr.f32.gmra.mxu0 %v1086
        %v1088 = vpop.f32.mrf.mxu0
        %v1089 = vadd.f32 %v346, %v1088
        %v1090 = vpop.f32.mrf.mxu0
        %v1091 = vadd.f32 %v346, %v1090
        %1092 = vmatprep.mubr.f32.mxu0 0.0
        %v1093 = vand.u32 %v386, 4294901760
        %v1094 = vsub.f32 %v386, %v1093
        %v1095 = vand.u32 %v1094, 4294901760
        %v1096 = vsub.f32 %v1094, %v1095
        %v1097 = vand.u32 %v1096, 4294901760
        %1098 = vmatmul.mubr.f32.gmra.mxu0 %v1097
        %v1099 = vpop.f32.mrf.mxu0
        %v1100 = vadd.f32 %v351, %v1099
        %v1101 = vpop.f32.mrf.mxu0
        %v1102 = vadd.f32 %v351, %v1101
        %1103 = vmatprep.mubr.f32.mxu0 0.0
        %v1104 = vand.u32 %v389, 4294901760
        %v1105 = vsub.f32 %v389, %v1104
        %v1106 = vand.u32 %v1105, 4294901760
        %v1107 = vsub.f32 %v1105, %v1106
        %v1108 = vand.u32 %v1107, 4294901760
        %1109 = vmatmul.mubr.f32.gmra.mxu0 %v1108
        %v1110 = vpop.f32.mrf.mxu0
        %v1111 = vadd.f32 %v356, %v1110
        %v1112 = vpop.f32.mrf.mxu0
        %v1113 = vadd.f32 %v356, %v1112
        %1114 = vmatprep.mubr.f32.mxu0 0.0
        %v1115 = vand.u32 %v392, 4294901760
        %v1116 = vsub.f32 %v392, %v1115
        %v1117 = vand.u32 %v1116, 4294901760
        %v1118 = vsub.f32 %v1116, %v1117
        %v1119 = vand.u32 %v1118, 4294901760
        %1120 = vmatmul.mubr.f32.gmra.mxu0 %v1119
        %v1121 = vpop.f32.mrf.mxu0
        %v1122 = vadd.f32 %v361, %v1121
        %v1123 = vpop.f32.mrf.mxu0
        %v1124 = vadd.f32 %v361, %v1123
        %1125 = vdwg.mxu0
        %1126 = vmatprep.subr.mxu0 0.0
        %1127 = vmatpush1.msra.mxu0 0.0
        %1128 = vmatprep.subr.mxu0 0.0
        %1129 = vmatpush1.msra.mxu0 0.0
        %1130 = vmatprep.subr.mxu0 0.0
        %1131 = vmatpush1.msra.mxu0 0.0
        %1132 = vmatprep.subr.mxu0 0.0
        %1133 = vmatpush1.msra.mxu0 0.0
        %1134 = vmatprep.subr.mxu0 0.0
        %1135 = vmatpush1.msra.mxu0 0.0
        %1136 = vmatprep.subr.mxu0 0.0
        %1137 = vmatpush1.msra.mxu0 0.0
        %1138 = vmatprep.subr.mxu0 0.0
        %1139 = vmatpush1.msra.mxu0 0.0
        %1140 = vmatprep.subr.mxu0 0.0
        %1141 = vmatpush1.msra.mxu0 0.0
        %1142 = vmatprep.subr.mxu0 0.0
        %1143 = vmatpush1.msra.mxu0 0.0
        %1144 = vmatprep.subr.mxu0 0.0
        %1145 = vmatpush1.msra.mxu0 0.0
        %1146 = vmatprep.subr.mxu0 0.0
        %1147 = vmatpush1.msra.mxu0 0.0
        %1148 = vmatprep.subr.mxu0 0.0
        %1149 = vmatpush1.msra.mxu0 0.0
        %1150 = vmatprep.subr.mxu0 0.0
        %1151 = vmatpush1.msra.mxu0 0.0
        %1152 = vmatprep.subr.mxu0 0.0
        %1153 = vmatpush1.msra.mxu0 0.0
        %1154 = vmatprep.subr.mxu0 0.0
        %1155 = vmatpush1.msra.mxu0 0.0
        %v1156 = vand.u32 %v401, 4294901760
        %v1157 = vsub.f32 %v401, %v1156
        %v1158 = vand.u32 %v1157, 4294901760
        %v1159 = vsub.f32 %v1157, %v1158
        %v1160 = vand.u32 %v1159, 4294901760
        %1161 = vmatprep.subr.mxu0 %v1160
        %v1162 = vand.u32 %v399, 4294901760
        %v1163 = vsub.f32 %v399, %v1162
        %v1164 = vand.u32 %v1163, 4294901760
        %v1165 = vsub.f32 %v1163, %v1164
        %v1166 = vand.u32 %v1165, 4294901760
        %1167 = vmatpush1.msra.mxu0 %v1166
        %1168 = vmatprep.subr.mxu0 0.0
        %1169 = vmatpush2.msra.mxu0 0.0
        %1170 = vmatprep.subr.mxu0 0.0
        %1171 = vmatpush2.msra.mxu0 0.0
        %1172 = vmatprep.subr.mxu0 0.0
        %1173 = vmatpush2.msra.mxu0 0.0
        %1174 = vmatprep.subr.mxu0 0.0
        %1175 = vmatpush2.msra.mxu0 0.0
        %1176 = vmatprep.subr.mxu0 0.0
        %1177 = vmatpush2.msra.mxu0 0.0
        %1178 = vmatprep.subr.mxu0 0.0
        %1179 = vmatpush2.msra.mxu0 0.0
        %1180 = vmatprep.subr.mxu0 0.0
        %1181 = vmatpush2.msra.mxu0 0.0
        %1182 = vmatprep.subr.mxu0 0.0
        %1183 = vmatpush2.msra.mxu0 0.0
        %1184 = vmatprep.subr.mxu0 0.0
        %1185 = vmatpush2.msra.mxu0 0.0
        %1186 = vmatprep.subr.mxu0 0.0
        %1187 = vmatpush2.msra.mxu0 0.0
        %1188 = vmatprep.subr.mxu0 0.0
        %1189 = vmatpush2.msra.mxu0 0.0
        %1190 = vmatprep.subr.mxu0 0.0
        %1191 = vmatpush2.msra.mxu0 0.0
        %1192 = vmatprep.subr.mxu0 0.0
        %1193 = vmatpush2.msra.mxu0 0.0
        %1194 = vmatprep.subr.mxu0 0.0
        %1195 = vmatpush2.msra.mxu0 0.0
        %1196 = vmatprep.subr.mxu0 0.0
        %1197 = vmatpush2.msra.mxu0 0.0
        %1198 = vmatprep.subr.mxu0 0.0
        %1199 = vmatpush2.msra.mxu0 0.0
        %1200 = vmatprep.mubr.f32.mxu0 0.0
        %v1201 = vand.u32 %v383, 4294901760
        %1202 = vmatmul.mubr.f32.gmra.mxu0 %v1201
        %v1203 = vpop.f32.mrf.mxu0
        %v1204 = vadd.f32 %v1089, %v1203
        %v1205 = vpop.f32.mrf.mxu0
        %v1206 = vadd.f32 %v1091, %v1205
        %1207 = vmatprep.mubr.f32.mxu0 0.0
        %v1208 = vand.u32 %v386, 4294901760
        %1209 = vmatmul.mubr.f32.gmra.mxu0 %v1208
        %v1210 = vpop.f32.mrf.mxu0
        %v1211 = vadd.f32 %v1100, %v1210
        %v1212 = vpop.f32.mrf.mxu0
        %v1213 = vadd.f32 %v1102, %v1212
        %1214 = vmatprep.mubr.f32.mxu0 0.0
        %v1215 = vand.u32 %v389, 4294901760
        %1216 = vmatmul.mubr.f32.gmra.mxu0 %v1215
        %v1217 = vpop.f32.mrf.mxu0
        %v1218 = vadd.f32 %v1111, %v1217
        %v1219 = vpop.f32.mrf.mxu0
        %v1220 = vadd.f32 %v1113, %v1219
        %1221 = vmatprep.mubr.f32.mxu0 0.0
        %v1222 = vand.u32 %v392, 4294901760
        %1223 = vmatmul.mubr.f32.gmra.mxu0 %v1222
        %v1224 = vpop.f32.mrf.mxu0
        %v1225 = vadd.f32 %v1122, %v1224
        %v1226 = vpop.f32.mrf.mxu0
        %v1227 = vadd.f32 %v1124, %v1226
        %1228 = vdwg.mxu0
        %1229 = vmatprep.subr.mxu0 0.0
        %1230 = vmatpush1.msra.mxu0 0.0
        %1231 = vmatprep.subr.mxu0 0.0
        %1232 = vmatpush1.msra.mxu0 0.0
        %1233 = vmatprep.subr.mxu0 0.0
        %1234 = vmatpush1.msra.mxu0 0.0
        %1235 = vmatprep.subr.mxu0 0.0
        %1236 = vmatpush1.msra.mxu0 0.0
        %1237 = vmatprep.subr.mxu0 0.0
        %1238 = vmatpush1.msra.mxu0 0.0
        %1239 = vmatprep.subr.mxu0 0.0
        %1240 = vmatpush1.msra.mxu0 0.0
        %1241 = vmatprep.subr.mxu0 0.0
        %1242 = vmatpush1.msra.mxu0 0.0
        %1243 = vmatprep.subr.mxu0 0.0
        %1244 = vmatpush1.msra.mxu0 0.0
        %1245 = vmatprep.subr.mxu0 0.0
        %1246 = vmatpush1.msra.mxu0 0.0
        %1247 = vmatprep.subr.mxu0 0.0
        %1248 = vmatpush1.msra.mxu0 0.0
        %1249 = vmatprep.subr.mxu0 0.0
        %1250 = vmatpush1.msra.mxu0 0.0
        %1251 = vmatprep.subr.mxu0 0.0
        %1252 = vmatpush1.msra.mxu0 0.0
        %1253 = vmatprep.subr.mxu0 0.0
        %1254 = vmatpush1.msra.mxu0 0.0
        %1255 = vmatprep.subr.mxu0 0.0
        %1256 = vmatpush1.msra.mxu0 0.0
        %1257 = vmatprep.subr.mxu0 0.0
        %1258 = vmatpush1.msra.mxu0 0.0
        %v1259 = vand.u32 %v401, 4294901760
        %v1260 = vsub.f32 %v401, %v1259
        %1261 = vmatprep.subr.mxu0 %v1260
        %v1262 = vand.u32 %v399, 4294901760
        %v1263 = vsub.f32 %v399, %v1262
        %1264 = vmatpush1.msra.mxu0 %v1263
        %1265 = vmatprep.subr.mxu0 0.0
        %1266 = vmatpush2.msra.mxu0 0.0
        %1267 = vmatprep.subr.mxu0 0.0
        %1268 = vmatpush2.msra.mxu0 0.0
        %1269 = vmatprep.subr.mxu0 0.0
        %1270 = vmatpush2.msra.mxu0 0.0
        %1271 = vmatprep.subr.mxu0 0.0
        %1272 = vmatpush2.msra.mxu0 0.0
        %1273 = vmatprep.subr.mxu0 0.0
        %1274 = vmatpush2.msra.mxu0 0.0
        %1275 = vmatprep.subr.mxu0 0.0
        %1276 = vmatpush2.msra.mxu0 0.0
        %1277 = vmatprep.subr.mxu0 0.0
        %1278 = vmatpush2.msra.mxu0 0.0
        %1279 = vmatprep.subr.mxu0 0.0
        %1280 = vmatpush2.msra.mxu0 0.0
        %1281 = vmatprep.subr.mxu0 0.0
        %1282 = vmatpush2.msra.mxu0 0.0
        %1283 = vmatprep.subr.mxu0 0.0
        %1284 = vmatpush2.msra.mxu0 0.0
        %1285 = vmatprep.subr.mxu0 0.0
        %1286 = vmatpush2.msra.mxu0 0.0
        %1287 = vmatprep.subr.mxu0 0.0
        %1288 = vmatpush2.msra.mxu0 0.0
        %1289 = vmatprep.subr.mxu0 0.0
        %1290 = vmatpush2.msra.mxu0 0.0
        %1291 = vmatprep.subr.mxu0 0.0
        %1292 = vmatpush2.msra.mxu0 0.0
        %1293 = vmatprep.subr.mxu0 0.0
        %1294 = vmatpush2.msra.mxu0 0.0
        %1295 = vmatprep.subr.mxu0 0.0
        %1296 = vmatpush2.msra.mxu0 0.0
        %1297 = vmatprep.mubr.f32.mxu0 0.0
        %v1298 = vand.u32 %v383, 4294901760
        %v1299 = vsub.f32 %v383, %v1298
        %1300 = vmatmul.mubr.f32.gmra.mxu0 %v1299
        %v1301 = vpop.f32.mrf.mxu0
        %v1302 = vadd.f32 %v1204, %v1301
        %v1303 = vpop.f32.mrf.mxu0
        %v1304 = vadd.f32 %v1206, %v1303
        %1305 = vmatprep.mubr.f32.mxu0 0.0
        %v1306 = vand.u32 %v386, 4294901760
        %v1307 = vsub.f32 %v386, %v1306
        %1308 = vmatmul.mubr.f32.gmra.mxu0 %v1307
        %v1309 = vpop.f32.mrf.mxu0
        %v1310 = vadd.f32 %v1211, %v1309
        %v1311 = vpop.f32.mrf.mxu0
        %v1312 = vadd.f32 %v1213, %v1311
        %1313 = vmatprep.mubr.f32.mxu0 0.0
        %v1314 = vand.u32 %v389, 4294901760
        %v1315 = vsub.f32 %v389, %v1314
        %1316 = vmatmul.mubr.f32.gmra.mxu0 %v1315
        %v1317 = vpop.f32.mrf.mxu0
        %v1318 = vadd.f32 %v1218, %v1317
        %v1319 = vpop.f32.mrf.mxu0
        %v1320 = vadd.f32 %v1220, %v1319
        %1321 = vmatprep.mubr.f32.mxu0 0.0
        %v1322 = vand.u32 %v392, 4294901760
        %v1323 = vsub.f32 %v392, %v1322
        %1324 = vmatmul.mubr.f32.gmra.mxu0 %v1323
        %v1325 = vpop.f32.mrf.mxu0
        %v1326 = vadd.f32 %v1225, %v1325
        %v1327 = vpop.f32.mrf.mxu0
        %v1328 = vadd.f32 %v1227, %v1327
        %1329 = vdwg.mxu0
        %1330 = vmatprep.subr.mxu0 0.0
        %1331 = vmatpush1.msra.mxu0 0.0
        %1332 = vmatprep.subr.mxu0 0.0
        %1333 = vmatpush1.msra.mxu0 0.0
        %1334 = vmatprep.subr.mxu0 0.0
        %1335 = vmatpush1.msra.mxu0 0.0
        %1336 = vmatprep.subr.mxu0 0.0
        %1337 = vmatpush1.msra.mxu0 0.0
        %1338 = vmatprep.subr.mxu0 0.0
        %1339 = vmatpush1.msra.mxu0 0.0
        %1340 = vmatprep.subr.mxu0 0.0
        %1341 = vmatpush1.msra.mxu0 0.0
        %1342 = vmatprep.subr.mxu0 0.0
        %1343 = vmatpush1.msra.mxu0 0.0
        %1344 = vmatprep.subr.mxu0 0.0
        %1345 = vmatpush1.msra.mxu0 0.0
        %1346 = vmatprep.subr.mxu0 0.0
        %1347 = vmatpush1.msra.mxu0 0.0
        %1348 = vmatprep.subr.mxu0 0.0
        %1349 = vmatpush1.msra.mxu0 0.0
        %1350 = vmatprep.subr.mxu0 0.0
        %1351 = vmatpush1.msra.mxu0 0.0
        %1352 = vmatprep.subr.mxu0 0.0
        %1353 = vmatpush1.msra.mxu0 0.0
        %1354 = vmatprep.subr.mxu0 0.0
        %1355 = vmatpush1.msra.mxu0 0.0
        %1356 = vmatprep.subr.mxu0 0.0
        %1357 = vmatpush1.msra.mxu0 0.0
        %1358 = vmatprep.subr.mxu0 0.0
        %1359 = vmatpush1.msra.mxu0 0.0
        %v1360 = vand.u32 %v401, 4294901760
        %1361 = vmatprep.subr.mxu0 %v1360
        %v1362 = vand.u32 %v399, 4294901760
        %1363 = vmatpush1.msra.mxu0 %v1362
        %1364 = vmatprep.subr.mxu0 0.0
        %1365 = vmatpush2.msra.mxu0 0.0
        %1366 = vmatprep.subr.mxu0 0.0
        %1367 = vmatpush2.msra.mxu0 0.0
        %1368 = vmatprep.subr.mxu0 0.0
        %1369 = vmatpush2.msra.mxu0 0.0
        %1370 = vmatprep.subr.mxu0 0.0
        %1371 = vmatpush2.msra.mxu0 0.0
        %1372 = vmatprep.subr.mxu0 0.0
        %1373 = vmatpush2.msra.mxu0 0.0
        %1374 = vmatprep.subr.mxu0 0.0
        %1375 = vmatpush2.msra.mxu0 0.0
        %1376 = vmatprep.subr.mxu0 0.0
        %1377 = vmatpush2.msra.mxu0 0.0
        %1378 = vmatprep.subr.mxu0 0.0
        %1379 = vmatpush2.msra.mxu0 0.0
        %1380 = vmatprep.subr.mxu0 0.0
        %1381 = vmatpush2.msra.mxu0 0.0
        %1382 = vmatprep.subr.mxu0 0.0
        %1383 = vmatpush2.msra.mxu0 0.0
        %1384 = vmatprep.subr.mxu0 0.0
        %1385 = vmatpush2.msra.mxu0 0.0
        %1386 = vmatprep.subr.mxu0 0.0
        %1387 = vmatpush2.msra.mxu0 0.0
        %1388 = vmatprep.subr.mxu0 0.0
        %1389 = vmatpush2.msra.mxu0 0.0
        %1390 = vmatprep.subr.mxu0 0.0
        %1391 = vmatpush2.msra.mxu0 0.0
        %1392 = vmatprep.subr.mxu0 0.0
        %1393 = vmatpush2.msra.mxu0 0.0
        %1394 = vmatprep.subr.mxu0 0.0
        %1395 = vmatpush2.msra.mxu0 0.0
        %1396 = vmatprep.mubr.f32.mxu0 0.0
        %v1397 = vand.u32 %v383, 4294901760
        %v1398 = vsub.f32 %v383, %v1397
        %v1399 = vand.u32 %v1398, 4294901760
        %1400 = vmatmul.mubr.f32.gmra.mxu0 %v1399
        %v1401 = vpop.f32.mrf.mxu0
        %v1402 = vadd.f32 %v1302, %v1401
        %v1403 = vpop.f32.mrf.mxu0
        %v1404 = vadd.f32 %v1304, %v1403
        %1405 = vmatprep.mubr.f32.mxu0 0.0
        %v1406 = vand.u32 %v386, 4294901760
        %v1407 = vsub.f32 %v386, %v1406
        %v1408 = vand.u32 %v1407, 4294901760
        %1409 = vmatmul.mubr.f32.gmra.mxu0 %v1408
        %v1410 = vpop.f32.mrf.mxu0
        %v1411 = vadd.f32 %v1310, %v1410
        %v1412 = vpop.f32.mrf.mxu0
        %v1413 = vadd.f32 %v1312, %v1412
        %1414 = vmatprep.mubr.f32.mxu0 0.0
        %v1415 = vand.u32 %v389, 4294901760
        %v1416 = vsub.f32 %v389, %v1415
        %v1417 = vand.u32 %v1416, 4294901760
        %1418 = vmatmul.mubr.f32.gmra.mxu0 %v1417
        %v1419 = vpop.f32.mrf.mxu0
        %v1420 = vadd.f32 %v1318, %v1419
        %v1421 = vpop.f32.mrf.mxu0
        %v1422 = vadd.f32 %v1320, %v1421
        %1423 = vmatprep.mubr.f32.mxu0 0.0
        %v1424 = vand.u32 %v392, 4294901760
        %v1425 = vsub.f32 %v392, %v1424
        %v1426 = vand.u32 %v1425, 4294901760
        %1427 = vmatmul.mubr.f32.gmra.mxu0 %v1426
        %v1428 = vpop.f32.mrf.mxu0
        %v1429 = vadd.f32 %v1326, %v1428
        %v1430 = vpop.f32.mrf.mxu0
        %v1431 = vadd.f32 %v1328, %v1430
        %1432 = vdwg.mxu0
        %1433 = vmatprep.subr.mxu0 0.0
        %1434 = vmatpush1.msra.mxu0 0.0
        %1435 = vmatprep.subr.mxu0 0.0
        %1436 = vmatpush1.msra.mxu0 0.0
        %1437 = vmatprep.subr.mxu0 0.0
        %1438 = vmatpush1.msra.mxu0 0.0
        %1439 = vmatprep.subr.mxu0 0.0
        %1440 = vmatpush1.msra.mxu0 0.0
        %1441 = vmatprep.subr.mxu0 0.0
        %1442 = vmatpush1.msra.mxu0 0.0
        %1443 = vmatprep.subr.mxu0 0.0
        %1444 = vmatpush1.msra.mxu0 0.0
        %1445 = vmatprep.subr.mxu0 0.0
        %1446 = vmatpush1.msra.mxu0 0.0
        %1447 = vmatprep.subr.mxu0 0.0
        %1448 = vmatpush1.msra.mxu0 0.0
        %1449 = vmatprep.subr.mxu0 0.0
        %1450 = vmatpush1.msra.mxu0 0.0
        %1451 = vmatprep.subr.mxu0 0.0
        %1452 = vmatpush1.msra.mxu0 0.0
        %1453 = vmatprep.subr.mxu0 0.0
        %1454 = vmatpush1.msra.mxu0 0.0
        %1455 = vmatprep.subr.mxu0 0.0
        %1456 = vmatpush1.msra.mxu0 0.0
        %1457 = vmatprep.subr.mxu0 0.0
        %1458 = vmatpush1.msra.mxu0 0.0
        %1459 = vmatprep.subr.mxu0 0.0
        %1460 = vmatpush1.msra.mxu0 0.0
        %1461 = vmatprep.subr.mxu0 0.0
        %1462 = vmatpush1.msra.mxu0 0.0
        %v1463 = vand.u32 %v401, 4294901760
        %v1464 = vsub.f32 %v401, %v1463
        %v1465 = vand.u32 %v1464, 4294901760
        %1466 = vmatprep.subr.mxu0 %v1465
        %v1467 = vand.u32 %v399, 4294901760
        %v1468 = vsub.f32 %v399, %v1467
        %v1469 = vand.u32 %v1468, 4294901760
        %1470 = vmatpush1.msra.mxu0 %v1469
        %1471 = vmatprep.subr.mxu0 0.0
        %1472 = vmatpush2.msra.mxu0 0.0
        %1473 = vmatprep.subr.mxu0 0.0
        %1474 = vmatpush2.msra.mxu0 0.0
        %1475 = vmatprep.subr.mxu0 0.0
        %1476 = vmatpush2.msra.mxu0 0.0
        %1477 = vmatprep.subr.mxu0 0.0
        %1478 = vmatpush2.msra.mxu0 0.0
        %1479 = vmatprep.subr.mxu0 0.0
        %1480 = vmatpush2.msra.mxu0 0.0
        %1481 = vmatprep.subr.mxu0 0.0
        %1482 = vmatpush2.msra.mxu0 0.0
        %1483 = vmatprep.subr.mxu0 0.0
        %1484 = vmatpush2.msra.mxu0 0.0
        %1485 = vmatprep.subr.mxu0 0.0
        %1486 = vmatpush2.msra.mxu0 0.0
        %1487 = vmatprep.subr.mxu0 0.0
        %1488 = vmatpush2.msra.mxu0 0.0
        %1489 = vmatprep.subr.mxu0 0.0
        %1490 = vmatpush2.msra.mxu0 0.0
        %1491 = vmatprep.subr.mxu0 0.0
        %1492 = vmatpush2.msra.mxu0 0.0
        %1493 = vmatprep.subr.mxu0 0.0
        %1494 = vmatpush2.msra.mxu0 0.0
        %1495 = vmatprep.subr.mxu0 0.0
        %1496 = vmatpush2.msra.mxu0 0.0
        %1497 = vmatprep.subr.mxu0 0.0
        %1498 = vmatpush2.msra.mxu0 0.0
        %1499 = vmatprep.subr.mxu0 0.0
        %1500 = vmatpush2.msra.mxu0 0.0
        %1501 = vmatprep.subr.mxu0 0.0
        %1502 = vmatpush2.msra.mxu0 0.0
        %1503 = vmatprep.mubr.f32.mxu0 0.0
        %v1504 = vand.u32 %v383, 4294901760
        %1505 = vmatmul.mubr.f32.gmra.mxu0 %v1504
        %v1506 = vpop.f32.mrf.mxu0
        %v1507 = vadd.f32 %v1402, %v1506
        %v1508 = vpop.f32.mrf.mxu0
        %v1509 = vadd.f32 %v1404, %v1508
        %1510 = vmatprep.mubr.f32.mxu0 0.0
        %v1511 = vand.u32 %v386, 4294901760
        %1512 = vmatmul.mubr.f32.gmra.mxu0 %v1511
        %v1513 = vpop.f32.mrf.mxu0
        %v1514 = vadd.f32 %v1411, %v1513
        %v1515 = vpop.f32.mrf.mxu0
        %v1516 = vadd.f32 %v1413, %v1515
        %1517 = vmatprep.mubr.f32.mxu0 0.0
        %v1518 = vand.u32 %v389, 4294901760
        %1519 = vmatmul.mubr.f32.gmra.mxu0 %v1518
        %v1520 = vpop.f32.mrf.mxu0
        %v1521 = vadd.f32 %v1420, %v1520
        %v1522 = vpop.f32.mrf.mxu0
        %v1523 = vadd.f32 %v1422, %v1522
        %1524 = vmatprep.mubr.f32.mxu0 0.0
        %v1525 = vand.u32 %v392, 4294901760
        %1526 = vmatmul.mubr.f32.gmra.mxu0 %v1525
        %v1527 = vpop.f32.mrf.mxu0
        %v1528 = vadd.f32 %v1429, %v1527
        %v1529 = vpop.f32.mrf.mxu0
        %v1530 = vadd.f32 %v1431, %v1529
        %1531 = vdwg.mxu0
        %1532 = vmatprep.subr.mxu0 0.0
        %1533 = vmatpush1.msra.mxu0 0.0
        %1534 = vmatprep.subr.mxu0 0.0
        %1535 = vmatpush1.msra.mxu0 0.0
        %1536 = vmatprep.subr.mxu0 0.0
        %1537 = vmatpush1.msra.mxu0 0.0
        %1538 = vmatprep.subr.mxu0 0.0
        %1539 = vmatpush1.msra.mxu0 0.0
        %1540 = vmatprep.subr.mxu0 0.0
        %1541 = vmatpush1.msra.mxu0 0.0
        %1542 = vmatprep.subr.mxu0 0.0
        %1543 = vmatpush1.msra.mxu0 0.0
        %1544 = vmatprep.subr.mxu0 0.0
        %1545 = vmatpush1.msra.mxu0 0.0
        %1546 = vmatprep.subr.mxu0 0.0
        %1547 = vmatpush1.msra.mxu0 0.0
        %1548 = vmatprep.subr.mxu0 0.0
        %1549 = vmatpush1.msra.mxu0 0.0
        %1550 = vmatprep.subr.mxu0 0.0
        %1551 = vmatpush1.msra.mxu0 0.0
        %1552 = vmatprep.subr.mxu0 0.0
        %1553 = vmatpush1.msra.mxu0 0.0
        %1554 = vmatprep.subr.mxu0 0.0
        %1555 = vmatpush1.msra.mxu0 0.0
        %1556 = vmatprep.subr.mxu0 0.0
        %1557 = vmatpush1.msra.mxu0 0.0
        %1558 = vmatprep.subr.mxu0 0.0
        %1559 = vmatpush1.msra.mxu0 0.0
        %1560 = vmatprep.subr.mxu0 0.0
        %1561 = vmatpush1.msra.mxu0 0.0
        %v1562 = vand.u32 %v401, 4294901760
        %1563 = vmatprep.subr.mxu0 %v1562
        %v1564 = vand.u32 %v399, 4294901760
        %1565 = vmatpush1.msra.mxu0 %v1564
        %1566 = vmatprep.subr.mxu0 0.0
        %1567 = vmatpush2.msra.mxu0 0.0
        %1568 = vmatprep.subr.mxu0 0.0
        %1569 = vmatpush2.msra.mxu0 0.0
        %1570 = vmatprep.subr.mxu0 0.0
        %1571 = vmatpush2.msra.mxu0 0.0
        %1572 = vmatprep.subr.mxu0 0.0
        %1573 = vmatpush2.msra.mxu0 0.0
        %1574 = vmatprep.subr.mxu0 0.0
        %1575 = vmatpush2.msra.mxu0 0.0
        %1576 = vmatprep.subr.mxu0 0.0
        %1577 = vmatpush2.msra.mxu0 0.0
        %1578 = vmatprep.subr.mxu0 0.0
        %1579 = vmatpush2.msra.mxu0 0.0
        %1580 = vmatprep.subr.mxu0 0.0
        %1581 = vmatpush2.msra.mxu0 0.0
        %1582 = vmatprep.subr.mxu0 0.0
        %1583 = vmatpush2.msra.mxu0 0.0
        %1584 = vmatprep.subr.mxu0 0.0
        %1585 = vmatpush2.msra.mxu0 0.0
        %1586 = vmatprep.subr.mxu0 0.0
        %1587 = vmatpush2.msra.mxu0 0.0
        %1588 = vmatprep.subr.mxu0 0.0
        %1589 = vmatpush2.msra.mxu0 0.0
        %1590 = vmatprep.subr.mxu0 0.0
        %1591 = vmatpush2.msra.mxu0 0.0
        %1592 = vmatprep.subr.mxu0 0.0
        %1593 = vmatpush2.msra.mxu0 0.0
        %1594 = vmatprep.subr.mxu0 0.0
        %1595 = vmatpush2.msra.mxu0 0.0
        %1596 = vmatprep.subr.mxu0 0.0
        %1597 = vmatpush2.msra.mxu0 0.0
        %1598 = vmatprep.mubr.f32.mxu0 0.0
        %v1599 = vand.u32 %v383, 4294901760
        %1600 = vmatmul.mubr.f32.gmra.mxu0 %v1599
        %v1601 = vpop.f32.mrf.mxu0
        %v1602 = vadd.f32 %v1507, %v1601
        %v1603 = vpop.f32.mrf.mxu0
        %v1604 = vadd.f32 %v1509, %v1603
        %1605 = vmatprep.mubr.f32.mxu0 0.0
        %v1606 = vand.u32 %v386, 4294901760
        %1607 = vmatmul.mubr.f32.gmra.mxu0 %v1606
        %v1608 = vpop.f32.mrf.mxu0
        %v1609 = vadd.f32 %v1514, %v1608
        %v1610 = vpop.f32.mrf.mxu0
        %v1611 = vadd.f32 %v1516, %v1610
        %1612 = vmatprep.mubr.f32.mxu0 0.0
        %v1613 = vand.u32 %v389, 4294901760
        %1614 = vmatmul.mubr.f32.gmra.mxu0 %v1613
        %v1615 = vpop.f32.mrf.mxu0
        %v1616 = vadd.f32 %v1521, %v1615
        %v1617 = vpop.f32.mrf.mxu0
        %v1618 = vadd.f32 %v1523, %v1617
        %1619 = vmatprep.mubr.f32.mxu0 0.0
        %v1620 = vand.u32 %v392, 4294901760
        %1621 = vmatmul.mubr.f32.gmra.mxu0 %v1620
        %v1622 = vpop.f32.mrf.mxu0
        %v1623 = vadd.f32 %v1528, %v1622
        %v1624 = vpop.f32.mrf.mxu0
        %v1625 = vadd.f32 %v1530, %v1624
        %1626 = vdwg.mxu0
        %v1627 = vmax.f32 %v990, 0.0
        %v1628 = vmax.f32 %v992, 0.0
        %v1629 = vmax.f32 %v1602, 0.0
        %v1630 = vmax.f32 %v1604, 0.0
        %v1631 = vmax.f32 %v997, 0.0
        %v1632 = vmax.f32 %v999, 0.0
        %v1633 = vmax.f32 %v1609, 0.0
        %v1634 = vmax.f32 %v1611, 0.0
        %v1635 = vmax.f32 %v1004, 0.0
        %v1636 = vmax.f32 %v1006, 0.0
        %v1637 = vmax.f32 %v1616, 0.0
        %v1638 = vmax.f32 %v1618, 0.0
        %v1639 = vmax.f32 %v1011, 0.0
        %v1640 = vmax.f32 %v1013, 0.0
        %v1641 = vmax.f32 %v1623, 0.0
        %v1642 = vmax.f32 %v1625, 0.0
        %v1643 = vld [vmem:[%s3] sm:$0xff]
        %v1644 = vld [vmem:[%s3 + $0x8] sm:$0xff]
        %v1645 = vld [vmem:[%s3 + $0x10] sm:$0xff]
        %v1646 = vld [vmem:[%s3 + $0x18] sm:$0xff]
        %v1647 = vld [vmem:[%s4] sm:$0xff]
        %v1648 = vld [vmem:[%s4 + $0x8] sm:$0xff]
        %v1649 = vld [vmem:[%s4 + $0x10] sm:$0xff]
        %v1650 = vld [vmem:[%s4 + $0x18] sm:$0xff]
        %1652 = vset.pattern.permute.xlu0 0
        %1653 = vperm.xlu0 %1652, %v1647
        %v1654 = vpop.permute.xlu0 %1653
        %1657 = vset.pattern.permute.xlu0 0
        %1658 = vperm.xlu0 %1657, %v1648
        %v1659 = vpop.permute.xlu0 %1658
        %1662 = vset.pattern.permute.xlu0 0
        %1663 = vperm.xlu0 %1662, %v1649
        %v1664 = vpop.permute.xlu0 %1663
        %1667 = vset.pattern.permute.xlu0 0
        %1668 = vperm.xlu0 %1667, %v1650
        %v1669 = vpop.permute.xlu0 %1668
        %vm1671 = vcmask 261120
        %v1673 = vsel %vm1671, %v1643, 0
        %v1676 = vsel %vm1671, %v1644, 0
        %v1679 = vsel %vm1671, %v1645, 0
        %v1682 = vsel %vm1671, %v1646, 0
        %1684 = vmatprep.subr.mxu0 0.0
        %1685 = vmatpush1.msra.mxu0 0.0
        %1686 = vmatprep.subr.mxu0 0.0
        %1687 = vmatpush1.msra.mxu0 0.0
        %1688 = vmatprep.subr.mxu0 0.0
        %1689 = vmatpush1.msra.mxu0 0.0
        %1690 = vmatprep.subr.mxu0 0.0
        %1691 = vmatpush1.msra.mxu0 0.0
        %1692 = vmatprep.subr.mxu0 0.0
        %1693 = vmatpush1.msra.mxu0 0.0
        %1694 = vmatprep.subr.mxu0 0.0
        %1695 = vmatpush1.msra.mxu0 0.0
        %1696 = vmatprep.subr.mxu0 0.0
        %1697 = vmatpush1.msra.mxu0 0.0
        %1698 = vmatprep.subr.mxu0 0.0
        %1699 = vmatpush1.msra.mxu0 0.0
        %1700 = vmatprep.subr.mxu0 0.0
        %1701 = vmatpush1.msra.mxu0 0.0
        %1702 = vmatprep.subr.mxu0 0.0
        %1703 = vmatpush1.msra.mxu0 0.0
        %1704 = vmatprep.subr.mxu0 0.0
        %1705 = vmatpush1.msra.mxu0 0.0
        %1706 = vmatprep.subr.mxu0 0.0
        %1707 = vmatpush1.msra.mxu0 0.0
        %v1708 = vand.u32 %v1640, 4294901760
        %1709 = vmatprep.subr.mxu0 %v1708
        %v1710 = vand.u32 %v1639, 4294901760
        %1711 = vmatpush1.msra.mxu0 %v1710
        %v1712 = vand.u32 %v1636, 4294901760
        %1713 = vmatprep.subr.mxu0 %v1712
        %v1714 = vand.u32 %v1635, 4294901760
        %1715 = vmatpush1.msra.mxu0 %v1714
        %v1716 = vand.u32 %v1632, 4294901760
        %1717 = vmatprep.subr.mxu0 %v1716
        %v1718 = vand.u32 %v1631, 4294901760
        %1719 = vmatpush1.msra.mxu0 %v1718
        %v1720 = vand.u32 %v1628, 4294901760
        %1721 = vmatprep.subr.mxu0 %v1720
        %v1722 = vand.u32 %v1627, 4294901760
        %1723 = vmatpush1.msra.mxu0 %v1722
        %1724 = vmatprep.subr.mxu0 0.0
        %1725 = vmatpush2.msra.mxu0 0.0
        %1726 = vmatprep.subr.mxu0 0.0
        %1727 = vmatpush2.msra.mxu0 0.0
        %1728 = vmatprep.subr.mxu0 0.0
        %1729 = vmatpush2.msra.mxu0 0.0
        %1730 = vmatprep.subr.mxu0 0.0
        %1731 = vmatpush2.msra.mxu0 0.0
        %1732 = vmatprep.subr.mxu0 0.0
        %1733 = vmatpush2.msra.mxu0 0.0
        %1734 = vmatprep.subr.mxu0 0.0
        %1735 = vmatpush2.msra.mxu0 0.0
        %1736 = vmatprep.subr.mxu0 0.0
        %1737 = vmatpush2.msra.mxu0 0.0
        %1738 = vmatprep.subr.mxu0 0.0
        %1739 = vmatpush2.msra.mxu0 0.0
        %1740 = vmatprep.subr.mxu0 0.0
        %1741 = vmatpush2.msra.mxu0 0.0
        %1742 = vmatprep.subr.mxu0 0.0
        %1743 = vmatpush2.msra.mxu0 0.0
        %1744 = vmatprep.subr.mxu0 0.0
        %1745 = vmatpush2.msra.mxu0 0.0
        %1746 = vmatprep.subr.mxu0 0.0
        %1747 = vmatpush2.msra.mxu0 0.0
        %1748 = vmatprep.subr.mxu0 0.0
        %1749 = vmatpush2.msra.mxu0 0.0
        %1750 = vmatprep.subr.mxu0 0.0
        %1751 = vmatpush2.msra.mxu0 0.0
        %1752 = vmatprep.subr.mxu0 0.0
        %1753 = vmatpush2.msra.mxu0 0.0
        %1754 = vmatprep.subr.mxu0 0.0
        %1755 = vmatpush2.msra.mxu0 0.0
        %1756 = vmatprep.mubr.f32.mxu0 0.0
        %v1757 = vand.u32 %v1673, 4294901760
        %v1758 = vsub.f32 %v1673, %v1757
        %v1759 = vand.u32 %v1758, 4294901760
        %v1760 = vsub.f32 %v1758, %v1759
        %v1761 = vand.u32 %v1760, 4294901760
        %1762 = vmatmul.mubr.f32.gmra.mxu0 %v1761
        %v1763 = vpop.f32.mrf.mxu0
        %v1764 = vadd.f32 %v1654, %v1763
        %v1765 = vpop.f32.mrf.mxu0
        %v1766 = vadd.f32 %v1654, %v1765
        %1767 = vmatprep.mubr.f32.mxu0 0.0
        %v1768 = vand.u32 %v1676, 4294901760
        %v1769 = vsub.f32 %v1676, %v1768
        %v1770 = vand.u32 %v1769, 4294901760
        %v1771 = vsub.f32 %v1769, %v1770
        %v1772 = vand.u32 %v1771, 4294901760
        %1773 = vmatmul.mubr.f32.gmra.mxu0 %v1772
        %v1774 = vpop.f32.mrf.mxu0
        %v1775 = vadd.f32 %v1659, %v1774
        %v1776 = vpop.f32.mrf.mxu0
        %v1777 = vadd.f32 %v1659, %v1776
        %1778 = vmatprep.mubr.f32.mxu0 0.0
        %v1779 = vand.u32 %v1679, 4294901760
        %v1780 = vsub.f32 %v1679, %v1779
        %v1781 = vand.u32 %v1780, 4294901760
        %v1782 = vsub.f32 %v1780, %v1781
        %v1783 = vand.u32 %v1782, 4294901760
        %1784 = vmatmul.mubr.f32.gmra.mxu0 %v1783
        %v1785 = vpop.f32.mrf.mxu0
        %v1786 = vadd.f32 %v1664, %v1785
        %v1787 = vpop.f32.mrf.mxu0
        %v1788 = vadd.f32 %v1664, %v1787
        %1789 = vmatprep.mubr.f32.mxu0 0.0
        %v1790 = vand.u32 %v1682, 4294901760
        %v1791 = vsub.f32 %v1682, %v1790
        %v1792 = vand.u32 %v1791, 4294901760
        %v1793 = vsub.f32 %v1791, %v1792
        %v1794 = vand.u32 %v1793, 4294901760
        %1795 = vmatmul.mubr.f32.gmra.mxu0 %v1794
        %v1796 = vpop.f32.mrf.mxu0
        %v1797 = vadd.f32 %v1669, %v1796
        %v1798 = vpop.f32.mrf.mxu0
        %v1799 = vadd.f32 %v1669, %v1798
        %1800 = vdwg.mxu0
        %1801 = vmatprep.subr.mxu0 0.0
        %1802 = vmatpush1.msra.mxu0 0.0
        %1803 = vmatprep.subr.mxu0 0.0
        %1804 = vmatpush1.msra.mxu0 0.0
        %1805 = vmatprep.subr.mxu0 0.0
        %1806 = vmatpush1.msra.mxu0 0.0
        %1807 = vmatprep.subr.mxu0 0.0
        %1808 = vmatpush1.msra.mxu0 0.0
        %1809 = vmatprep.subr.mxu0 0.0
        %1810 = vmatpush1.msra.mxu0 0.0
        %1811 = vmatprep.subr.mxu0 0.0
        %1812 = vmatpush1.msra.mxu0 0.0
        %1813 = vmatprep.subr.mxu0 0.0
        %1814 = vmatpush1.msra.mxu0 0.0
        %1815 = vmatprep.subr.mxu0 0.0
        %1816 = vmatpush1.msra.mxu0 0.0
        %1817 = vmatprep.subr.mxu0 0.0
        %1818 = vmatpush1.msra.mxu0 0.0
        %1819 = vmatprep.subr.mxu0 0.0
        %1820 = vmatpush1.msra.mxu0 0.0
        %1821 = vmatprep.subr.mxu0 0.0
        %1822 = vmatpush1.msra.mxu0 0.0
        %1823 = vmatprep.subr.mxu0 0.0
        %1824 = vmatpush1.msra.mxu0 0.0
        %v1825 = vand.u32 %v1640, 4294901760
        %v1826 = vsub.f32 %v1640, %v1825
        %v1827 = vand.u32 %v1826, 4294901760
        %v1828 = vsub.f32 %v1826, %v1827
        %v1829 = vand.u32 %v1828, 4294901760
        %1830 = vmatprep.subr.mxu0 %v1829
        %v1831 = vand.u32 %v1639, 4294901760
        %v1832 = vsub.f32 %v1639, %v1831
        %v1833 = vand.u32 %v1832, 4294901760
        %v1834 = vsub.f32 %v1832, %v1833
        %v1835 = vand.u32 %v1834, 4294901760
        %1836 = vmatpush1.msra.mxu0 %v1835
        %v1837 = vand.u32 %v1636, 4294901760
        %v1838 = vsub.f32 %v1636, %v1837
        %v1839 = vand.u32 %v1838, 4294901760
        %v1840 = vsub.f32 %v1838, %v1839
        %v1841 = vand.u32 %v1840, 4294901760
        %1842 = vmatprep.subr.mxu0 %v1841
        %v1843 = vand.u32 %v1635, 4294901760
        %v1844 = vsub.f32 %v1635, %v1843
        %v1845 = vand.u32 %v1844, 4294901760
        %v1846 = vsub.f32 %v1844, %v1845
        %v1847 = vand.u32 %v1846, 4294901760
        %1848 = vmatpush1.msra.mxu0 %v1847
        %v1849 = vand.u32 %v1632, 4294901760
        %v1850 = vsub.f32 %v1632, %v1849
        %v1851 = vand.u32 %v1850, 4294901760
        %v1852 = vsub.f32 %v1850, %v1851
        %v1853 = vand.u32 %v1852, 4294901760
        %1854 = vmatprep.subr.mxu0 %v1853
        %v1855 = vand.u32 %v1631, 4294901760
        %v1856 = vsub.f32 %v1631, %v1855
        %v1857 = vand.u32 %v1856, 4294901760
        %v1858 = vsub.f32 %v1856, %v1857
        %v1859 = vand.u32 %v1858, 4294901760
        %1860 = vmatpush1.msra.mxu0 %v1859
        %v1861 = vand.u32 %v1628, 4294901760
        %v1862 = vsub.f32 %v1628, %v1861
        %v1863 = vand.u32 %v1862, 4294901760
        %v1864 = vsub.f32 %v1862, %v1863
        %v1865 = vand.u32 %v1864, 4294901760
        %1866 = vmatprep.subr.mxu0 %v1865
        %v1867 = vand.u32 %v1627, 4294901760
        %v1868 = vsub.f32 %v1627, %v1867
        %v1869 = vand.u32 %v1868, 4294901760
        %v1870 = vsub.f32 %v1868, %v1869
        %v1871 = vand.u32 %v1870, 4294901760
        %1872 = vmatpush1.msra.mxu0 %v1871
        %1873 = vmatprep.subr.mxu0 0.0
        %1874 = vmatpush2.msra.mxu0 0.0
        %1875 = vmatprep.subr.mxu0 0.0
        %1876 = vmatpush2.msra.mxu0 0.0
        %1877 = vmatprep.subr.mxu0 0.0
        %1878 = vmatpush2.msra.mxu0 0.0
        %1879 = vmatprep.subr.mxu0 0.0
        %1880 = vmatpush2.msra.mxu0 0.0
        %1881 = vmatprep.subr.mxu0 0.0
        %1882 = vmatpush2.msra.mxu0 0.0
        %1883 = vmatprep.subr.mxu0 0.0
        %1884 = vmatpush2.msra.mxu0 0.0
        %1885 = vmatprep.subr.mxu0 0.0
        %1886 = vmatpush2.msra.mxu0 0.0
        %1887 = vmatprep.subr.mxu0 0.0
        %1888 = vmatpush2.msra.mxu0 0.0
        %1889 = vmatprep.subr.mxu0 0.0
        %1890 = vmatpush2.msra.mxu0 0.0
        %1891 = vmatprep.subr.mxu0 0.0
        %1892 = vmatpush2.msra.mxu0 0.0
        %1893 = vmatprep.subr.mxu0 0.0
        %1894 = vmatpush2.msra.mxu0 0.0
        %1895 = vmatprep.subr.mxu0 0.0
        %1896 = vmatpush2.msra.mxu0 0.0
        %1897 = vmatprep.subr.mxu0 0.0
        %1898 = vmatpush2.msra.mxu0 0.0
        %1899 = vmatprep.subr.mxu0 0.0
        %1900 = vmatpush2.msra.mxu0 0.0
        %1901 = vmatprep.subr.mxu0 0.0
        %1902 = vmatpush2.msra.mxu0 0.0
        %1903 = vmatprep.subr.mxu0 0.0
        %1904 = vmatpush2.msra.mxu0 0.0
        %1905 = vmatprep.mubr.f32.mxu0 0.0
        %v1906 = vand.u32 %v1673, 4294901760
        %1907 = vmatmul.mubr.f32.gmra.mxu0 %v1906
        %v1908 = vpop.f32.mrf.mxu0
        %v1909 = vadd.f32 %v1764, %v1908
        %v1910 = vpop.f32.mrf.mxu0
        %v1911 = vadd.f32 %v1766, %v1910
        %1912 = vmatprep.mubr.f32.mxu0 0.0
        %v1913 = vand.u32 %v1676, 4294901760
        %1914 = vmatmul.mubr.f32.gmra.mxu0 %v1913
        %v1915 = vpop.f32.mrf.mxu0
        %v1916 = vadd.f32 %v1775, %v1915
        %v1917 = vpop.f32.mrf.mxu0
        %v1918 = vadd.f32 %v1777, %v1917
        %1919 = vmatprep.mubr.f32.mxu0 0.0
        %v1920 = vand.u32 %v1679, 4294901760
        %1921 = vmatmul.mubr.f32.gmra.mxu0 %v1920
        %v1922 = vpop.f32.mrf.mxu0
        %v1923 = vadd.f32 %v1786, %v1922
        %v1924 = vpop.f32.mrf.mxu0
        %v1925 = vadd.f32 %v1788, %v1924
        %1926 = vmatprep.mubr.f32.mxu0 0.0
        %v1927 = vand.u32 %v1682, 4294901760
        %1928 = vmatmul.mubr.f32.gmra.mxu0 %v1927
        %v1929 = vpop.f32.mrf.mxu0
        %v1930 = vadd.f32 %v1797, %v1929
        %v1931 = vpop.f32.mrf.mxu0
        %v1932 = vadd.f32 %v1799, %v1931
        %1933 = vdwg.mxu0
        %1934 = vmatprep.subr.mxu0 0.0
        %1935 = vmatpush1.msra.mxu0 0.0
        %1936 = vmatprep.subr.mxu0 0.0
        %1937 = vmatpush1.msra.mxu0 0.0
        %1938 = vmatprep.subr.mxu0 0.0
        %1939 = vmatpush1.msra.mxu0 0.0
        %1940 = vmatprep.subr.mxu0 0.0
        %1941 = vmatpush1.msra.mxu0 0.0
        %1942 = vmatprep.subr.mxu0 0.0
        %1943 = vmatpush1.msra.mxu0 0.0
        %1944 = vmatprep.subr.mxu0 0.0
        %1945 = vmatpush1.msra.mxu0 0.0
        %1946 = vmatprep.subr.mxu0 0.0
        %1947 = vmatpush1.msra.mxu0 0.0
        %1948 = vmatprep.subr.mxu0 0.0
        %1949 = vmatpush1.msra.mxu0 0.0
        %1950 = vmatprep.subr.mxu0 0.0
        %1951 = vmatpush1.msra.mxu0 0.0
        %1952 = vmatprep.subr.mxu0 0.0
        %1953 = vmatpush1.msra.mxu0 0.0
        %1954 = vmatprep.subr.mxu0 0.0
        %1955 = vmatpush1.msra.mxu0 0.0
        %1956 = vmatprep.subr.mxu0 0.0
        %1957 = vmatpush1.msra.mxu0 0.0
        %v1958 = vand.u32 %v1640, 4294901760
        %v1959 = vsub.f32 %v1640, %v1958
        %1960 = vmatprep.subr.mxu0 %v1959
        %v1961 = vand.u32 %v1639, 4294901760
        %v1962 = vsub.f32 %v1639, %v1961
        %1963 = vmatpush1.msra.mxu0 %v1962
        %v1964 = vand.u32 %v1636, 4294901760
        %v1965 = vsub.f32 %v1636, %v1964
        %1966 = vmatprep.subr.mxu0 %v1965
        %v1967 = vand.u32 %v1635, 4294901760
        %v1968 = vsub.f32 %v1635, %v1967
        %1969 = vmatpush1.msra.mxu0 %v1968
        %v1970 = vand.u32 %v1632, 4294901760
        %v1971 = vsub.f32 %v1632, %v1970
        %1972 = vmatprep.subr.mxu0 %v1971
        %v1973 = vand.u32 %v1631, 4294901760
        %v1974 = vsub.f32 %v1631, %v1973
        %1975 = vmatpush1.msra.mxu0 %v1974
        %v1976 = vand.u32 %v1628, 4294901760
        %v1977 = vsub.f32 %v1628, %v1976
        %1978 = vmatprep.subr.mxu0 %v1977
        %v1979 = vand.u32 %v1627, 4294901760
        %v1980 = vsub.f32 %v1627, %v1979
        %1981 = vmatpush1.msra.mxu0 %v1980
        %1982 = vmatprep.subr.mxu0 0.0
        %1983 = vmatpush2.msra.mxu0 0.0
        %1984 = vmatprep.subr.mxu0 0.0
        %1985 = vmatpush2.msra.mxu0 0.0
        %1986 = vmatprep.subr.mxu0 0.0
        %1987 = vmatpush2.msra.mxu0 0.0
        %1988 = vmatprep.subr.mxu0 0.0
        %1989 = vmatpush2.msra.mxu0 0.0
        %1990 = vmatprep.subr.mxu0 0.0
        %1991 = vmatpush2.msra.mxu0 0.0
        %1992 = vmatprep.subr.mxu0 0.0
        %1993 = vmatpush2.msra.mxu0 0.0
        %1994 = vmatprep.subr.mxu0 0.0
        %1995 = vmatpush2.msra.mxu0 0.0
        %1996 = vmatprep.subr.mxu0 0.0
        %1997 = vmatpush2.msra.mxu0 0.0
        %1998 = vmatprep.subr.mxu0 0.0
        %1999 = vmatpush2.msra.mxu0 0.0
        %2000 = vmatprep.subr.mxu0 0.0
        %2001 = vmatpush2.msra.mxu0 0.0
        %2002 = vmatprep.subr.mxu0 0.0
        %2003 = vmatpush2.msra.mxu0 0.0
        %2004 = vmatprep.subr.mxu0 0.0
        %2005 = vmatpush2.msra.mxu0 0.0
        %2006 = vmatprep.subr.mxu0 0.0
        %2007 = vmatpush2.msra.mxu0 0.0
        %2008 = vmatprep.subr.mxu0 0.0
        %2009 = vmatpush2.msra.mxu0 0.0
        %2010 = vmatprep.subr.mxu0 0.0
        %2011 = vmatpush2.msra.mxu0 0.0
        %2012 = vmatprep.subr.mxu0 0.0
        %2013 = vmatpush2.msra.mxu0 0.0
        %2014 = vmatprep.mubr.f32.mxu0 0.0
        %v2015 = vand.u32 %v1673, 4294901760
        %v2016 = vsub.f32 %v1673, %v2015
        %2017 = vmatmul.mubr.f32.gmra.mxu0 %v2016
        %v2018 = vpop.f32.mrf.mxu0
        %v2019 = vadd.f32 %v1909, %v2018
        %v2020 = vpop.f32.mrf.mxu0
        %v2021 = vadd.f32 %v1911, %v2020
        %2022 = vmatprep.mubr.f32.mxu0 0.0
        %v2023 = vand.u32 %v1676, 4294901760
        %v2024 = vsub.f32 %v1676, %v2023
        %2025 = vmatmul.mubr.f32.gmra.mxu0 %v2024
        %v2026 = vpop.f32.mrf.mxu0
        %v2027 = vadd.f32 %v1916, %v2026
        %v2028 = vpop.f32.mrf.mxu0
        %v2029 = vadd.f32 %v1918, %v2028
        %2030 = vmatprep.mubr.f32.mxu0 0.0
        %v2031 = vand.u32 %v1679, 4294901760
        %v2032 = vsub.f32 %v1679, %v2031
        %2033 = vmatmul.mubr.f32.gmra.mxu0 %v2032
        %v2034 = vpop.f32.mrf.mxu0
        %v2035 = vadd.f32 %v1923, %v2034
        %v2036 = vpop.f32.mrf.mxu0
        %v2037 = vadd.f32 %v1925, %v2036
        %2038 = vmatprep.mubr.f32.mxu0 0.0
        %v2039 = vand.u32 %v1682, 4294901760
        %v2040 = vsub.f32 %v1682, %v2039
        %2041 = vmatmul.mubr.f32.gmra.mxu0 %v2040
        %v2042 = vpop.f32.mrf.mxu0
        %v2043 = vadd.f32 %v1930, %v2042
        %v2044 = vpop.f32.mrf.mxu0
        %v2045 = vadd.f32 %v1932, %v2044
        %2046 = vdwg.mxu0
        %2047 = vmatprep.subr.mxu0 0.0
        %2048 = vmatpush1.msra.mxu0 0.0
        %2049 = vmatprep.subr.mxu0 0.0
        %2050 = vmatpush1.msra.mxu0 0.0
        %2051 = vmatprep.subr.mxu0 0.0
        %2052 = vmatpush1.msra.mxu0 0.0
        %2053 = vmatprep.subr.mxu0 0.0
        %2054 = vmatpush1.msra.mxu0 0.0
        %2055 = vmatprep.subr.mxu0 0.0
        %2056 = vmatpush1.msra.mxu0 0.0
        %2057 = vmatprep.subr.mxu0 0.0
        %2058 = vmatpush1.msra.mxu0 0.0
        %2059 = vmatprep.subr.mxu0 0.0
        %2060 = vmatpush1.msra.mxu0 0.0
        %2061 = vmatprep.subr.mxu0 0.0
        %2062 = vmatpush1.msra.mxu0 0.0
        %2063 = vmatprep.subr.mxu0 0.0
        %2064 = vmatpush1.msra.mxu0 0.0
        %2065 = vmatprep.subr.mxu0 0.0
        %2066 = vmatpush1.msra.mxu0 0.0
        %2067 = vmatprep.subr.mxu0 0.0
        %2068 = vmatpush1.msra.mxu0 0.0
        %2069 = vmatprep.subr.mxu0 0.0
        %2070 = vmatpush1.msra.mxu0 0.0
        %v2071 = vand.u32 %v1640, 4294901760
        %2072 = vmatprep.subr.mxu0 %v2071
        %v2073 = vand.u32 %v1639, 4294901760
        %2074 = vmatpush1.msra.mxu0 %v2073
        %v2075 = vand.u32 %v1636, 4294901760
        %2076 = vmatprep.subr.mxu0 %v2075
        %v2077 = vand.u32 %v1635, 4294901760
        %2078 = vmatpush1.msra.mxu0 %v2077
        %v2079 = vand.u32 %v1632, 4294901760
        %2080 = vmatprep.subr.mxu0 %v2079
        %v2081 = vand.u32 %v1631, 4294901760
        %2082 = vmatpush1.msra.mxu0 %v2081
        %v2083 = vand.u32 %v1628, 4294901760
        %2084 = vmatprep.subr.mxu0 %v2083
        %v2085 = vand.u32 %v1627, 4294901760
        %2086 = vmatpush1.msra.mxu0 %v2085
        %2087 = vmatprep.subr.mxu0 0.0
        %2088 = vmatpush2.msra.mxu0 0.0
        %2089 = vmatprep.subr.mxu0 0.0
        %2090 = vmatpush2.msra.mxu0 0.0
        %2091 = vmatprep.subr.mxu0 0.0
        %2092 = vmatpush2.msra.mxu0 0.0
        %2093 = vmatprep.subr.mxu0 0.0
        %2094 = vmatpush2.msra.mxu0 0.0
        %2095 = vmatprep.subr.mxu0 0.0
        %2096 = vmatpush2.msra.mxu0 0.0
        %2097 = vmatprep.subr.mxu0 0.0
        %2098 = vmatpush2.msra.mxu0 0.0
        %2099 = vmatprep.subr.mxu0 0.0
        %2100 = vmatpush2.msra.mxu0 0.0
        %2101 = vmatprep.subr.mxu0 0.0
        %2102 = vmatpush2.msra.mxu0 0.0
        %2103 = vmatprep.subr.mxu0 0.0
        %2104 = vmatpush2.msra.mxu0 0.0
        %2105 = vmatprep.subr.mxu0 0.0
        %2106 = vmatpush2.msra.mxu0 0.0
        %2107 = vmatprep.subr.mxu0 0.0
        %2108 = vmatpush2.msra.mxu0 0.0
        %2109 = vmatprep.subr.mxu0 0.0
        %2110 = vmatpush2.msra.mxu0 0.0
        %2111 = vmatprep.subr.mxu0 0.0
        %2112 = vmatpush2.msra.mxu0 0.0
        %2113 = vmatprep.subr.mxu0 0.0
        %2114 = vmatpush2.msra.mxu0 0.0
        %2115 = vmatprep.subr.mxu0 0.0
        %2116 = vmatpush2.msra.mxu0 0.0
        %2117 = vmatprep.subr.mxu0 0.0
        %2118 = vmatpush2.msra.mxu0 0.0
        %2119 = vmatprep.mubr.f32.mxu0 0.0
        %v2120 = vand.u32 %v1673, 4294901760
        %v2121 = vsub.f32 %v1673, %v2120
        %v2122 = vand.u32 %v2121, 4294901760
        %2123 = vmatmul.mubr.f32.gmra.mxu0 %v2122
        %v2124 = vpop.f32.mrf.mxu0
        %v2125 = vadd.f32 %v2019, %v2124
        %v2126 = vpop.f32.mrf.mxu0
        %v2127 = vadd.f32 %v2021, %v2126
        %2128 = vmatprep.mubr.f32.mxu0 0.0
        %v2129 = vand.u32 %v1676, 4294901760
        %v2130 = vsub.f32 %v1676, %v2129
        %v2131 = vand.u32 %v2130, 4294901760
        %2132 = vmatmul.mubr.f32.gmra.mxu0 %v2131
        %v2133 = vpop.f32.mrf.mxu0
        %v2134 = vadd.f32 %v2027, %v2133
        %v2135 = vpop.f32.mrf.mxu0
        %v2136 = vadd.f32 %v2029, %v2135
        %2137 = vmatprep.mubr.f32.mxu0 0.0
        %v2138 = vand.u32 %v1679, 4294901760
        %v2139 = vsub.f32 %v1679, %v2138
        %v2140 = vand.u32 %v2139, 4294901760
        %2141 = vmatmul.mubr.f32.gmra.mxu0 %v2140
        %v2142 = vpop.f32.mrf.mxu0
        %v2143 = vadd.f32 %v2035, %v2142
        %v2144 = vpop.f32.mrf.mxu0
        %v2145 = vadd.f32 %v2037, %v2144
        %2146 = vmatprep.mubr.f32.mxu0 0.0
        %v2147 = vand.u32 %v1682, 4294901760
        %v2148 = vsub.f32 %v1682, %v2147
        %v2149 = vand.u32 %v2148, 4294901760
        %2150 = vmatmul.mubr.f32.gmra.mxu0 %v2149
        %v2151 = vpop.f32.mrf.mxu0
        %v2152 = vadd.f32 %v2043, %v2151
        %v2153 = vpop.f32.mrf.mxu0
        %v2154 = vadd.f32 %v2045, %v2153
        %2155 = vdwg.mxu0
        %2156 = vmatprep.subr.mxu0 0.0
        %2157 = vmatpush1.msra.mxu0 0.0
        %2158 = vmatprep.subr.mxu0 0.0
        %2159 = vmatpush1.msra.mxu0 0.0
        %2160 = vmatprep.subr.mxu0 0.0
        %2161 = vmatpush1.msra.mxu0 0.0
        %2162 = vmatprep.subr.mxu0 0.0
        %2163 = vmatpush1.msra.mxu0 0.0
        %2164 = vmatprep.subr.mxu0 0.0
        %2165 = vmatpush1.msra.mxu0 0.0
        %2166 = vmatprep.subr.mxu0 0.0
        %2167 = vmatpush1.msra.mxu0 0.0
        %2168 = vmatprep.subr.mxu0 0.0
        %2169 = vmatpush1.msra.mxu0 0.0
        %2170 = vmatprep.subr.mxu0 0.0
        %2171 = vmatpush1.msra.mxu0 0.0
        %2172 = vmatprep.subr.mxu0 0.0
        %2173 = vmatpush1.msra.mxu0 0.0
        %2174 = vmatprep.subr.mxu0 0.0
        %2175 = vmatpush1.msra.mxu0 0.0
        %2176 = vmatprep.subr.mxu0 0.0
        %2177 = vmatpush1.msra.mxu0 0.0
        %2178 = vmatprep.subr.mxu0 0.0
        %2179 = vmatpush1.msra.mxu0 0.0
        %v2180 = vand.u32 %v1640, 4294901760
        %v2181 = vsub.f32 %v1640, %v2180
        %v2182 = vand.u32 %v2181, 4294901760
        %2183 = vmatprep.subr.mxu0 %v2182
        %v2184 = vand.u32 %v1639, 4294901760
        %v2185 = vsub.f32 %v1639, %v2184
        %v2186 = vand.u32 %v2185, 4294901760
        %2187 = vmatpush1.msra.mxu0 %v2186
        %v2188 = vand.u32 %v1636, 4294901760
        %v2189 = vsub.f32 %v1636, %v2188
        %v2190 = vand.u32 %v2189, 4294901760
        %2191 = vmatprep.subr.mxu0 %v2190
        %v2192 = vand.u32 %v1635, 4294901760
        %v2193 = vsub.f32 %v1635, %v2192
        %v2194 = vand.u32 %v2193, 4294901760
        %2195 = vmatpush1.msra.mxu0 %v2194
        %v2196 = vand.u32 %v1632, 4294901760
        %v2197 = vsub.f32 %v1632, %v2196
        %v2198 = vand.u32 %v2197, 4294901760
        %2199 = vmatprep.subr.mxu0 %v2198
        %v2200 = vand.u32 %v1631, 4294901760
        %v2201 = vsub.f32 %v1631, %v2200
        %v2202 = vand.u32 %v2201, 4294901760
        %2203 = vmatpush1.msra.mxu0 %v2202
        %v2204 = vand.u32 %v1628, 4294901760
        %v2205 = vsub.f32 %v1628, %v2204
        %v2206 = vand.u32 %v2205, 4294901760
        %2207 = vmatprep.subr.mxu0 %v2206
        %v2208 = vand.u32 %v1627, 4294901760
        %v2209 = vsub.f32 %v1627, %v2208
        %v2210 = vand.u32 %v2209, 4294901760
        %2211 = vmatpush1.msra.mxu0 %v2210
        %2212 = vmatprep.subr.mxu0 0.0
        %2213 = vmatpush2.msra.mxu0 0.0
        %2214 = vmatprep.subr.mxu0 0.0
        %2215 = vmatpush2.msra.mxu0 0.0
        %2216 = vmatprep.subr.mxu0 0.0
        %2217 = vmatpush2.msra.mxu0 0.0
        %2218 = vmatprep.subr.mxu0 0.0
        %2219 = vmatpush2.msra.mxu0 0.0
        %2220 = vmatprep.subr.mxu0 0.0
        %2221 = vmatpush2.msra.mxu0 0.0
        %2222 = vmatprep.subr.mxu0 0.0
        %2223 = vmatpush2.msra.mxu0 0.0
        %2224 = vmatprep.subr.mxu0 0.0
        %2225 = vmatpush2.msra.mxu0 0.0
        %2226 = vmatprep.subr.mxu0 0.0
        %2227 = vmatpush2.msra.mxu0 0.0
        %2228 = vmatprep.subr.mxu0 0.0
        %2229 = vmatpush2.msra.mxu0 0.0
        %2230 = vmatprep.subr.mxu0 0.0
        %2231 = vmatpush2.msra.mxu0 0.0
        %2232 = vmatprep.subr.mxu0 0.0
        %2233 = vmatpush2.msra.mxu0 0.0
        %2234 = vmatprep.subr.mxu0 0.0
        %2235 = vmatpush2.msra.mxu0 0.0
        %2236 = vmatprep.subr.mxu0 0.0
        %2237 = vmatpush2.msra.mxu0 0.0
        %2238 = vmatprep.subr.mxu0 0.0
        %2239 = vmatpush2.msra.mxu0 0.0
        %2240 = vmatprep.subr.mxu0 0.0
        %2241 = vmatpush2.msra.mxu0 0.0
        %2242 = vmatprep.subr.mxu0 0.0
        %2243 = vmatpush2.msra.mxu0 0.0
        %2244 = vmatprep.mubr.f32.mxu0 0.0
        %v2245 = vand.u32 %v1673, 4294901760
        %2246 = vmatmul.mubr.f32.gmra.mxu0 %v2245
        %v2247 = vpop.f32.mrf.mxu0
        %v2248 = vadd.f32 %v2125, %v2247
        %v2249 = vpop.f32.mrf.mxu0
        %v2250 = vadd.f32 %v2127, %v2249
        %2251 = vmatprep.mubr.f32.mxu0 0.0
        %v2252 = vand.u32 %v1676, 4294901760
        %2253 = vmatmul.mubr.f32.gmra.mxu0 %v2252
        %v2254 = vpop.f32.mrf.mxu0
        %v2255 = vadd.f32 %v2134, %v2254
        %v2256 = vpop.f32.mrf.mxu0
        %v2257 = vadd.f32 %v2136, %v2256
        %2258 = vmatprep.mubr.f32.mxu0 0.0
        %v2259 = vand.u32 %v1679, 4294901760
        %2260 = vmatmul.mubr.f32.gmra.mxu0 %v2259
        %v2261 = vpop.f32.mrf.mxu0
        %v2262 = vadd.f32 %v2143, %v2261
        %v2263 = vpop.f32.mrf.mxu0
        %v2264 = vadd.f32 %v2145, %v2263
        %2265 = vmatprep.mubr.f32.mxu0 0.0
        %v2266 = vand.u32 %v1682, 4294901760
        %2267 = vmatmul.mubr.f32.gmra.mxu0 %v2266
        %v2268 = vpop.f32.mrf.mxu0
        %v2269 = vadd.f32 %v2152, %v2268
        %v2270 = vpop.f32.mrf.mxu0
        %v2271 = vadd.f32 %v2154, %v2270
        %2272 = vdwg.mxu0
        %2273 = vmatprep.subr.mxu0 0.0
        %2274 = vmatpush1.msra.mxu0 0.0
        %2275 = vmatprep.subr.mxu0 0.0
        %2276 = vmatpush1.msra.mxu0 0.0
        %2277 = vmatprep.subr.mxu0 0.0
        %2278 = vmatpush1.msra.mxu0 0.0
        %2279 = vmatprep.subr.mxu0 0.0
        %2280 = vmatpush1.msra.mxu0 0.0
        %2281 = vmatprep.subr.mxu0 0.0
        %2282 = vmatpush1.msra.mxu0 0.0
        %2283 = vmatprep.subr.mxu0 0.0
        %2284 = vmatpush1.msra.mxu0 0.0
        %2285 = vmatprep.subr.mxu0 0.0
        %2286 = vmatpush1.msra.mxu0 0.0
        %2287 = vmatprep.subr.mxu0 0.0
        %2288 = vmatpush1.msra.mxu0 0.0
        %2289 = vmatprep.subr.mxu0 0.0
        %2290 = vmatpush1.msra.mxu0 0.0
        %2291 = vmatprep.subr.mxu0 0.0
        %2292 = vmatpush1.msra.mxu0 0.0
        %2293 = vmatprep.subr.mxu0 0.0
        %2294 = vmatpush1.msra.mxu0 0.0
        %2295 = vmatprep.subr.mxu0 0.0
        %2296 = vmatpush1.msra.mxu0 0.0
        %v2297 = vand.u32 %v1640, 4294901760
        %2298 = vmatprep.subr.mxu0 %v2297
        %v2299 = vand.u32 %v1639, 4294901760
        %2300 = vmatpush1.msra.mxu0 %v2299
        %v2301 = vand.u32 %v1636, 4294901760
        %2302 = vmatprep.subr.mxu0 %v2301
        %v2303 = vand.u32 %v1635, 4294901760
        %2304 = vmatpush1.msra.mxu0 %v2303
        %v2305 = vand.u32 %v1632, 4294901760
        %2306 = vmatprep.subr.mxu0 %v2305
        %v2307 = vand.u32 %v1631, 4294901760
        %2308 = vmatpush1.msra.mxu0 %v2307
        %v2309 = vand.u32 %v1628, 4294901760
        %2310 = vmatprep.subr.mxu0 %v2309
        %v2311 = vand.u32 %v1627, 4294901760
        %2312 = vmatpush1.msra.mxu0 %v2311
        %2313 = vmatprep.subr.mxu0 0.0
        %2314 = vmatpush2.msra.mxu0 0.0
        %2315 = vmatprep.subr.mxu0 0.0
        %2316 = vmatpush2.msra.mxu0 0.0
        %2317 = vmatprep.subr.mxu0 0.0
        %2318 = vmatpush2.msra.mxu0 0.0
        %2319 = vmatprep.subr.mxu0 0.0
        %2320 = vmatpush2.msra.mxu0 0.0
        %2321 = vmatprep.subr.mxu0 0.0
        %2322 = vmatpush2.msra.mxu0 0.0
        %2323 = vmatprep.subr.mxu0 0.0
        %2324 = vmatpush2.msra.mxu0 0.0
        %2325 = vmatprep.subr.mxu0 0.0
        %2326 = vmatpush2.msra.mxu0 0.0
        %2327 = vmatprep.subr.mxu0 0.0
        %2328 = vmatpush2.msra.mxu0 0.0
        %2329 = vmatprep.subr.mxu0 0.0
        %2330 = vmatpush2.msra.mxu0 0.0
        %2331 = vmatprep.subr.mxu0 0.0
        %2332 = vmatpush2.msra.mxu0 0.0
        %2333 = vmatprep.subr.mxu0 0.0
        %2334 = vmatpush2.msra.mxu0 0.0
        %2335 = vmatprep.subr.mxu0 0.0
        %2336 = vmatpush2.msra.mxu0 0.0
        %2337 = vmatprep.subr.mxu0 0.0
        %2338 = vmatpush2.msra.mxu0 0.0
        %2339 = vmatprep.subr.mxu0 0.0
        %2340 = vmatpush2.msra.mxu0 0.0
        %2341 = vmatprep.subr.mxu0 0.0
        %2342 = vmatpush2.msra.mxu0 0.0
        %2343 = vmatprep.subr.mxu0 0.0
        %2344 = vmatpush2.msra.mxu0 0.0
        %2345 = vmatprep.mubr.f32.mxu0 0.0
        %v2346 = vand.u32 %v1673, 4294901760
        %2347 = vmatmul.mubr.f32.gmra.mxu0 %v2346
        %v2348 = vpop.f32.mrf.mxu0
        %v2349 = vadd.f32 %v2248, %v2348
        %v2350 = vpop.f32.mrf.mxu0
        %v2351 = vadd.f32 %v2250, %v2350
        %2352 = vmatprep.mubr.f32.mxu0 0.0
        %v2353 = vand.u32 %v1676, 4294901760
        %2354 = vmatmul.mubr.f32.gmra.mxu0 %v2353
        %v2355 = vpop.f32.mrf.mxu0
        %v2356 = vadd.f32 %v2255, %v2355
        %v2357 = vpop.f32.mrf.mxu0
        %v2358 = vadd.f32 %v2257, %v2357
        %2359 = vmatprep.mubr.f32.mxu0 0.0
        %v2360 = vand.u32 %v1679, 4294901760
        %2361 = vmatmul.mubr.f32.gmra.mxu0 %v2360
        %v2362 = vpop.f32.mrf.mxu0
        %v2363 = vadd.f32 %v2262, %v2362
        %v2364 = vpop.f32.mrf.mxu0
        %v2365 = vadd.f32 %v2264, %v2364
        %2366 = vmatprep.mubr.f32.mxu0 0.0
        %v2367 = vand.u32 %v1682, 4294901760
        %2368 = vmatmul.mubr.f32.gmra.mxu0 %v2367
        %v2369 = vpop.f32.mrf.mxu0
        %v2370 = vadd.f32 %v2269, %v2369
        %v2371 = vpop.f32.mrf.mxu0
        %v2372 = vadd.f32 %v2271, %v2371
        %2373 = vdwg.mxu0
        %2374 = vmatprep.subr.mxu0 0.0
        %2375 = vmatpush1.msra.mxu0 0.0
        %2376 = vmatprep.subr.mxu0 0.0
        %2377 = vmatpush1.msra.mxu0 0.0
        %2378 = vmatprep.subr.mxu0 0.0
        %2379 = vmatpush1.msra.mxu0 0.0
        %2380 = vmatprep.subr.mxu0 0.0
        %2381 = vmatpush1.msra.mxu0 0.0
        %2382 = vmatprep.subr.mxu0 0.0
        %2383 = vmatpush1.msra.mxu0 0.0
        %2384 = vmatprep.subr.mxu0 0.0
        %2385 = vmatpush1.msra.mxu0 0.0
        %2386 = vmatprep.subr.mxu0 0.0
        %2387 = vmatpush1.msra.mxu0 0.0
        %2388 = vmatprep.subr.mxu0 0.0
        %2389 = vmatpush1.msra.mxu0 0.0
        %2390 = vmatprep.subr.mxu0 0.0
        %2391 = vmatpush1.msra.mxu0 0.0
        %2392 = vmatprep.subr.mxu0 0.0
        %2393 = vmatpush1.msra.mxu0 0.0
        %2394 = vmatprep.subr.mxu0 0.0
        %2395 = vmatpush1.msra.mxu0 0.0
        %2396 = vmatprep.subr.mxu0 0.0
        %2397 = vmatpush1.msra.mxu0 0.0
        %v2398 = vand.u32 %v1642, 4294901760
        %2399 = vmatprep.subr.mxu0 %v2398
        %v2400 = vand.u32 %v1641, 4294901760
        %2401 = vmatpush1.msra.mxu0 %v2400
        %v2402 = vand.u32 %v1638, 4294901760
        %2403 = vmatprep.subr.mxu0 %v2402
        %v2404 = vand.u32 %v1637, 4294901760
        %2405 = vmatpush1.msra.mxu0 %v2404
        %v2406 = vand.u32 %v1634, 4294901760
        %2407 = vmatprep.subr.mxu0 %v2406
        %v2408 = vand.u32 %v1633, 4294901760
        %2409 = vmatpush1.msra.mxu0 %v2408
        %v2410 = vand.u32 %v1630, 4294901760
        %2411 = vmatprep.subr.mxu0 %v2410
        %v2412 = vand.u32 %v1629, 4294901760
        %2413 = vmatpush1.msra.mxu0 %v2412
        %2414 = vmatprep.subr.mxu0 0.0
        %2415 = vmatpush2.msra.mxu0 0.0
        %2416 = vmatprep.subr.mxu0 0.0
        %2417 = vmatpush2.msra.mxu0 0.0
        %2418 = vmatprep.subr.mxu0 0.0
        %2419 = vmatpush2.msra.mxu0 0.0
        %2420 = vmatprep.subr.mxu0 0.0
        %2421 = vmatpush2.msra.mxu0 0.0
        %2422 = vmatprep.subr.mxu0 0.0
        %2423 = vmatpush2.msra.mxu0 0.0
        %2424 = vmatprep.subr.mxu0 0.0
        %2425 = vmatpush2.msra.mxu0 0.0
        %2426 = vmatprep.subr.mxu0 0.0
        %2427 = vmatpush2.msra.mxu0 0.0
        %2428 = vmatprep.subr.mxu0 0.0
        %2429 = vmatpush2.msra.mxu0 0.0
        %2430 = vmatprep.subr.mxu0 0.0
        %2431 = vmatpush2.msra.mxu0 0.0
        %2432 = vmatprep.subr.mxu0 0.0
        %2433 = vmatpush2.msra.mxu0 0.0
        %2434 = vmatprep.subr.mxu0 0.0
        %2435 = vmatpush2.msra.mxu0 0.0
        %2436 = vmatprep.subr.mxu0 0.0
        %2437 = vmatpush2.msra.mxu0 0.0
        %2438 = vmatprep.subr.mxu0 0.0
        %2439 = vmatpush2.msra.mxu0 0.0
        %2440 = vmatprep.subr.mxu0 0.0
        %2441 = vmatpush2.msra.mxu0 0.0
        %2442 = vmatprep.subr.mxu0 0.0
        %2443 = vmatpush2.msra.mxu0 0.0
        %2444 = vmatprep.subr.mxu0 0.0
        %2445 = vmatpush2.msra.mxu0 0.0
        %2446 = vmatprep.mubr.f32.mxu0 0.0
        %v2447 = vand.u32 %v1673, 4294901760
        %v2448 = vsub.f32 %v1673, %v2447
        %v2449 = vand.u32 %v2448, 4294901760
        %v2450 = vsub.f32 %v2448, %v2449
        %v2451 = vand.u32 %v2450, 4294901760
        %2452 = vmatmul.mubr.f32.gmra.mxu0 %v2451
        %v2453 = vpop.f32.mrf.mxu0
        %v2454 = vadd.f32 %v1654, %v2453
        %v2455 = vpop.f32.mrf.mxu0
        %v2456 = vadd.f32 %v1654, %v2455
        %2457 = vmatprep.mubr.f32.mxu0 0.0
        %v2458 = vand.u32 %v1676, 4294901760
        %v2459 = vsub.f32 %v1676, %v2458
        %v2460 = vand.u32 %v2459, 4294901760
        %v2461 = vsub.f32 %v2459, %v2460
        %v2462 = vand.u32 %v2461, 4294901760
        %2463 = vmatmul.mubr.f32.gmra.mxu0 %v2462
        %v2464 = vpop.f32.mrf.mxu0
        %v2465 = vadd.f32 %v1659, %v2464
        %v2466 = vpop.f32.mrf.mxu0
        %v2467 = vadd.f32 %v1659, %v2466
        %2468 = vmatprep.mubr.f32.mxu0 0.0
        %v2469 = vand.u32 %v1679, 4294901760
        %v2470 = vsub.f32 %v1679, %v2469
        %v2471 = vand.u32 %v2470, 4294901760
        %v2472 = vsub.f32 %v2470, %v2471
        %v2473 = vand.u32 %v2472, 4294901760
        %2474 = vmatmul.mubr.f32.gmra.mxu0 %v2473
        %v2475 = vpop.f32.mrf.mxu0
        %v2476 = vadd.f32 %v1664, %v2475
        %v2477 = vpop.f32.mrf.mxu0
        %v2478 = vadd.f32 %v1664, %v2477
        %2479 = vmatprep.mubr.f32.mxu0 0.0
        %v2480 = vand.u32 %v1682, 4294901760
        %v2481 = vsub.f32 %v1682, %v2480
        %v2482 = vand.u32 %v2481, 4294901760
        %v2483 = vsub.f32 %v2481, %v2482
        %v2484 = vand.u32 %v2483, 4294901760
        %2485 = vmatmul.mubr.f32.gmra.mxu0 %v2484
        %v2486 = vpop.f32.mrf.mxu0
        %v2487 = vadd.f32 %v1669, %v2486
        %v2488 = vpop.f32.mrf.mxu0
        %v2489 = vadd.f32 %v1669, %v2488
        %2490 = vdwg.mxu0
        %2491 = vmatprep.subr.mxu0 0.0
        %2492 = vmatpush1.msra.mxu0 0.0
        %2493 = vmatprep.subr.mxu0 0.0
        %2494 = vmatpush1.msra.mxu0 0.0
        %2495 = vmatprep.subr.mxu0 0.0
        %2496 = vmatpush1.msra.mxu0 0.0
        %2497 = vmatprep.subr.mxu0 0.0
        %2498 = vmatpush1.msra.mxu0 0.0
        %2499 = vmatprep.subr.mxu0 0.0
        %2500 = vmatpush1.msra.mxu0 0.0
        %2501 = vmatprep.subr.mxu0 0.0
        %2502 = vmatpush1.msra.mxu0 0.0
        %2503 = vmatprep.subr.mxu0 0.0
        %2504 = vmatpush1.msra.mxu0 0.0
        %2505 = vmatprep.subr.mxu0 0.0
        %2506 = vmatpush1.msra.mxu0 0.0
        %2507 = vmatprep.subr.mxu0 0.0
        %2508 = vmatpush1.msra.mxu0 0.0
        %2509 = vmatprep.subr.mxu0 0.0
        %2510 = vmatpush1.msra.mxu0 0.0
        %2511 = vmatprep.subr.mxu0 0.0
        %2512 = vmatpush1.msra.mxu0 0.0
        %2513 = vmatprep.subr.mxu0 0.0
        %2514 = vmatpush1.msra.mxu0 0.0
        %v2515 = vand.u32 %v1642, 4294901760
        %v2516 = vsub.f32 %v1642, %v2515
        %v2517 = vand.u32 %v2516, 4294901760
        %v2518 = vsub.f32 %v2516, %v2517
        %v2519 = vand.u32 %v2518, 4294901760
        %2520 = vmatprep.subr.mxu0 %v2519
        %v2521 = vand.u32 %v1641, 4294901760
        %v2522 = vsub.f32 %v1641, %v2521
        %v2523 = vand.u32 %v2522, 4294901760
        %v2524 = vsub.f32 %v2522, %v2523
        %v2525 = vand.u32 %v2524, 4294901760
        %2526 = vmatpush1.msra.mxu0 %v2525
        %v2527 = vand.u32 %v1638, 4294901760
        %v2528 = vsub.f32 %v1638, %v2527
        %v2529 = vand.u32 %v2528, 4294901760
        %v2530 = vsub.f32 %v2528, %v2529
        %v2531 = vand.u32 %v2530, 4294901760
        %2532 = vmatprep.subr.mxu0 %v2531
        %v2533 = vand.u32 %v1637, 4294901760
        %v2534 = vsub.f32 %v1637, %v2533
        %v2535 = vand.u32 %v2534, 4294901760
        %v2536 = vsub.f32 %v2534, %v2535
        %v2537 = vand.u32 %v2536, 4294901760
        %2538 = vmatpush1.msra.mxu0 %v2537
        %v2539 = vand.u32 %v1634, 4294901760
        %v2540 = vsub.f32 %v1634, %v2539
        %v2541 = vand.u32 %v2540, 4294901760
        %v2542 = vsub.f32 %v2540, %v2541
        %v2543 = vand.u32 %v2542, 4294901760
        %2544 = vmatprep.subr.mxu0 %v2543
        %v2545 = vand.u32 %v1633, 4294901760
        %v2546 = vsub.f32 %v1633, %v2545
        %v2547 = vand.u32 %v2546, 4294901760
        %v2548 = vsub.f32 %v2546, %v2547
        %v2549 = vand.u32 %v2548, 4294901760
        %2550 = vmatpush1.msra.mxu0 %v2549
        %v2551 = vand.u32 %v1630, 4294901760
        %v2552 = vsub.f32 %v1630, %v2551
        %v2553 = vand.u32 %v2552, 4294901760
        %v2554 = vsub.f32 %v2552, %v2553
        %v2555 = vand.u32 %v2554, 4294901760
        %2556 = vmatprep.subr.mxu0 %v2555
        %v2557 = vand.u32 %v1629, 4294901760
        %v2558 = vsub.f32 %v1629, %v2557
        %v2559 = vand.u32 %v2558, 4294901760
        %v2560 = vsub.f32 %v2558, %v2559
        %v2561 = vand.u32 %v2560, 4294901760
        %2562 = vmatpush1.msra.mxu0 %v2561
        %2563 = vmatprep.subr.mxu0 0.0
        %2564 = vmatpush2.msra.mxu0 0.0
        %2565 = vmatprep.subr.mxu0 0.0
        %2566 = vmatpush2.msra.mxu0 0.0
        %2567 = vmatprep.subr.mxu0 0.0
        %2568 = vmatpush2.msra.mxu0 0.0
        %2569 = vmatprep.subr.mxu0 0.0
        %2570 = vmatpush2.msra.mxu0 0.0
        %2571 = vmatprep.subr.mxu0 0.0
        %2572 = vmatpush2.msra.mxu0 0.0
        %2573 = vmatprep.subr.mxu0 0.0
        %2574 = vmatpush2.msra.mxu0 0.0
        %2575 = vmatprep.subr.mxu0 0.0
        %2576 = vmatpush2.msra.mxu0 0.0
        %2577 = vmatprep.subr.mxu0 0.0
        %2578 = vmatpush2.msra.mxu0 0.0
        %2579 = vmatprep.subr.mxu0 0.0
        %2580 = vmatpush2.msra.mxu0 0.0
        %2581 = vmatprep.subr.mxu0 0.0
        %2582 = vmatpush2.msra.mxu0 0.0
        %2583 = vmatprep.subr.mxu0 0.0
        %2584 = vmatpush2.msra.mxu0 0.0
        %2585 = vmatprep.subr.mxu0 0.0
        %2586 = vmatpush2.msra.mxu0 0.0
        %2587 = vmatprep.subr.mxu0 0.0
        %2588 = vmatpush2.msra.mxu0 0.0
        %2589 = vmatprep.subr.mxu0 0.0
        %2590 = vmatpush2.msra.mxu0 0.0
        %2591 = vmatprep.subr.mxu0 0.0
        %2592 = vmatpush2.msra.mxu0 0.0
        %2593 = vmatprep.subr.mxu0 0.0
        %2594 = vmatpush2.msra.mxu0 0.0
        %2595 = vmatprep.mubr.f32.mxu0 0.0
        %v2596 = vand.u32 %v1673, 4294901760
        %2597 = vmatmul.mubr.f32.gmra.mxu0 %v2596
        %v2598 = vpop.f32.mrf.mxu0
        %v2599 = vadd.f32 %v2454, %v2598
        %v2600 = vpop.f32.mrf.mxu0
        %v2601 = vadd.f32 %v2456, %v2600
        %2602 = vmatprep.mubr.f32.mxu0 0.0
        %v2603 = vand.u32 %v1676, 4294901760
        %2604 = vmatmul.mubr.f32.gmra.mxu0 %v2603
        %v2605 = vpop.f32.mrf.mxu0
        %v2606 = vadd.f32 %v2465, %v2605
        %v2607 = vpop.f32.mrf.mxu0
        %v2608 = vadd.f32 %v2467, %v2607
        %2609 = vmatprep.mubr.f32.mxu0 0.0
        %v2610 = vand.u32 %v1679, 4294901760
        %2611 = vmatmul.mubr.f32.gmra.mxu0 %v2610
        %v2612 = vpop.f32.mrf.mxu0
        %v2613 = vadd.f32 %v2476, %v2612
        %v2614 = vpop.f32.mrf.mxu0
        %v2615 = vadd.f32 %v2478, %v2614
        %2616 = vmatprep.mubr.f32.mxu0 0.0
        %v2617 = vand.u32 %v1682, 4294901760
        %2618 = vmatmul.mubr.f32.gmra.mxu0 %v2617
        %v2619 = vpop.f32.mrf.mxu0
        %v2620 = vadd.f32 %v2487, %v2619
        %v2621 = vpop.f32.mrf.mxu0
        %v2622 = vadd.f32 %v2489, %v2621
        %2623 = vdwg.mxu0
        %2624 = vmatprep.subr.mxu0 0.0
        %2625 = vmatpush1.msra.mxu0 0.0
        %2626 = vmatprep.subr.mxu0 0.0
        %2627 = vmatpush1.msra.mxu0 0.0
        %2628 = vmatprep.subr.mxu0 0.0
        %2629 = vmatpush1.msra.mxu0 0.0
        %2630 = vmatprep.subr.mxu0 0.0
        %2631 = vmatpush1.msra.mxu0 0.0
        %2632 = vmatprep.subr.mxu0 0.0
        %2633 = vmatpush1.msra.mxu0 0.0
        %2634 = vmatprep.subr.mxu0 0.0
        %2635 = vmatpush1.msra.mxu0 0.0
        %2636 = vmatprep.subr.mxu0 0.0
        %2637 = vmatpush1.msra.mxu0 0.0
        %2638 = vmatprep.subr.mxu0 0.0
        %2639 = vmatpush1.msra.mxu0 0.0
        %2640 = vmatprep.subr.mxu0 0.0
        %2641 = vmatpush1.msra.mxu0 0.0
        %2642 = vmatprep.subr.mxu0 0.0
        %2643 = vmatpush1.msra.mxu0 0.0
        %2644 = vmatprep.subr.mxu0 0.0
        %2645 = vmatpush1.msra.mxu0 0.0
        %2646 = vmatprep.subr.mxu0 0.0
        %2647 = vmatpush1.msra.mxu0 0.0
        %v2648 = vand.u32 %v1642, 4294901760
        %v2649 = vsub.f32 %v1642, %v2648
        %2650 = vmatprep.subr.mxu0 %v2649
        %v2651 = vand.u32 %v1641, 4294901760
        %v2652 = vsub.f32 %v1641, %v2651
        %2653 = vmatpush1.msra.mxu0 %v2652
        %v2654 = vand.u32 %v1638, 4294901760
        %v2655 = vsub.f32 %v1638, %v2654
        %2656 = vmatprep.subr.mxu0 %v2655
        %v2657 = vand.u32 %v1637, 4294901760
        %v2658 = vsub.f32 %v1637, %v2657
        %2659 = vmatpush1.msra.mxu0 %v2658
        %v2660 = vand.u32 %v1634, 4294901760
        %v2661 = vsub.f32 %v1634, %v2660
        %2662 = vmatprep.subr.mxu0 %v2661
        %v2663 = vand.u32 %v1633, 4294901760
        %v2664 = vsub.f32 %v1633, %v2663
        %2665 = vmatpush1.msra.mxu0 %v2664
        %v2666 = vand.u32 %v1630, 4294901760
        %v2667 = vsub.f32 %v1630, %v2666
        %2668 = vmatprep.subr.mxu0 %v2667
        %v2669 = vand.u32 %v1629, 4294901760
        %v2670 = vsub.f32 %v1629, %v2669
        %2671 = vmatpush1.msra.mxu0 %v2670
        %2672 = vmatprep.subr.mxu0 0.0
        %2673 = vmatpush2.msra.mxu0 0.0
        %2674 = vmatprep.subr.mxu0 0.0
        %2675 = vmatpush2.msra.mxu0 0.0
        %2676 = vmatprep.subr.mxu0 0.0
        %2677 = vmatpush2.msra.mxu0 0.0
        %2678 = vmatprep.subr.mxu0 0.0
        %2679 = vmatpush2.msra.mxu0 0.0
        %2680 = vmatprep.subr.mxu0 0.0
        %2681 = vmatpush2.msra.mxu0 0.0
        %2682 = vmatprep.subr.mxu0 0.0
        %2683 = vmatpush2.msra.mxu0 0.0
        %2684 = vmatprep.subr.mxu0 0.0
        %2685 = vmatpush2.msra.mxu0 0.0
        %2686 = vmatprep.subr.mxu0 0.0
        %2687 = vmatpush2.msra.mxu0 0.0
        %2688 = vmatprep.subr.mxu0 0.0
        %2689 = vmatpush2.msra.mxu0 0.0
        %2690 = vmatprep.subr.mxu0 0.0
        %2691 = vmatpush2.msra.mxu0 0.0
        %2692 = vmatprep.subr.mxu0 0.0
        %2693 = vmatpush2.msra.mxu0 0.0
        %2694 = vmatprep.subr.mxu0 0.0
        %2695 = vmatpush2.msra.mxu0 0.0
        %2696 = vmatprep.subr.mxu0 0.0
        %2697 = vmatpush2.msra.mxu0 0.0
        %2698 = vmatprep.subr.mxu0 0.0
        %2699 = vmatpush2.msra.mxu0 0.0
        %2700 = vmatprep.subr.mxu0 0.0
        %2701 = vmatpush2.msra.mxu0 0.0
        %2702 = vmatprep.subr.mxu0 0.0
        %2703 = vmatpush2.msra.mxu0 0.0
        %2704 = vmatprep.mubr.f32.mxu0 0.0
        %v2705 = vand.u32 %v1673, 4294901760
        %v2706 = vsub.f32 %v1673, %v2705
        %2707 = vmatmul.mubr.f32.gmra.mxu0 %v2706
        %v2708 = vpop.f32.mrf.mxu0
        %v2709 = vadd.f32 %v2599, %v2708
        %v2710 = vpop.f32.mrf.mxu0
        %v2711 = vadd.f32 %v2601, %v2710
        %2712 = vmatprep.mubr.f32.mxu0 0.0
        %v2713 = vand.u32 %v1676, 4294901760
        %v2714 = vsub.f32 %v1676, %v2713
        %2715 = vmatmul.mubr.f32.gmra.mxu0 %v2714
        %v2716 = vpop.f32.mrf.mxu0
        %v2717 = vadd.f32 %v2606, %v2716
        %v2718 = vpop.f32.mrf.mxu0
        %v2719 = vadd.f32 %v2608, %v2718
        %2720 = vmatprep.mubr.f32.mxu0 0.0
        %v2721 = vand.u32 %v1679, 4294901760
        %v2722 = vsub.f32 %v1679, %v2721
        %2723 = vmatmul.mubr.f32.gmra.mxu0 %v2722
        %v2724 = vpop.f32.mrf.mxu0
        %v2725 = vadd.f32 %v2613, %v2724
        %v2726 = vpop.f32.mrf.mxu0
        %v2727 = vadd.f32 %v2615, %v2726
        %2728 = vmatprep.mubr.f32.mxu0 0.0
        %v2729 = vand.u32 %v1682, 4294901760
        %v2730 = vsub.f32 %v1682, %v2729
        %2731 = vmatmul.mubr.f32.gmra.mxu0 %v2730
        %v2732 = vpop.f32.mrf.mxu0
        %v2733 = vadd.f32 %v2620, %v2732
        %v2734 = vpop.f32.mrf.mxu0
        %v2735 = vadd.f32 %v2622, %v2734
        %2736 = vdwg.mxu0
        %2737 = vmatprep.subr.mxu0 0.0
        %2738 = vmatpush1.msra.mxu0 0.0
        %2739 = vmatprep.subr.mxu0 0.0
        %2740 = vmatpush1.msra.mxu0 0.0
        %2741 = vmatprep.subr.mxu0 0.0
        %2742 = vmatpush1.msra.mxu0 0.0
        %2743 = vmatprep.subr.mxu0 0.0
        %2744 = vmatpush1.msra.mxu0 0.0
        %2745 = vmatprep.subr.mxu0 0.0
        %2746 = vmatpush1.msra.mxu0 0.0
        %2747 = vmatprep.subr.mxu0 0.0
        %2748 = vmatpush1.msra.mxu0 0.0
        %2749 = vmatprep.subr.mxu0 0.0
        %2750 = vmatpush1.msra.mxu0 0.0
        %2751 = vmatprep.subr.mxu0 0.0
        %2752 = vmatpush1.msra.mxu0 0.0
        %2753 = vmatprep.subr.mxu0 0.0
        %2754 = vmatpush1.msra.mxu0 0.0
        %2755 = vmatprep.subr.mxu0 0.0
        %2756 = vmatpush1.msra.mxu0 0.0
        %2757 = vmatprep.subr.mxu0 0.0
        %2758 = vmatpush1.msra.mxu0 0.0
        %2759 = vmatprep.subr.mxu0 0.0
        %2760 = vmatpush1.msra.mxu0 0.0
        %v2761 = vand.u32 %v1642, 4294901760
        %2762 = vmatprep.subr.mxu0 %v2761
        %v2763 = vand.u32 %v1641, 4294901760
        %2764 = vmatpush1.msra.mxu0 %v2763
        %v2765 = vand.u32 %v1638, 4294901760
        %2766 = vmatprep.subr.mxu0 %v2765
        %v2767 = vand.u32 %v1637, 4294901760
        %2768 = vmatpush1.msra.mxu0 %v2767
        %v2769 = vand.u32 %v1634, 4294901760
        %2770 = vmatprep.subr.mxu0 %v2769
        %v2771 = vand.u32 %v1633, 4294901760
        %2772 = vmatpush1.msra.mxu0 %v2771
        %v2773 = vand.u32 %v1630, 4294901760
        %2774 = vmatprep.subr.mxu0 %v2773
        %v2775 = vand.u32 %v1629, 4294901760
        %2776 = vmatpush1.msra.mxu0 %v2775
        %2777 = vmatprep.subr.mxu0 0.0
        %2778 = vmatpush2.msra.mxu0 0.0
        %2779 = vmatprep.subr.mxu0 0.0
        %2780 = vmatpush2.msra.mxu0 0.0
        %2781 = vmatprep.subr.mxu0 0.0
        %2782 = vmatpush2.msra.mxu0 0.0
        %2783 = vmatprep.subr.mxu0 0.0
        %2784 = vmatpush2.msra.mxu0 0.0
        %2785 = vmatprep.subr.mxu0 0.0
        %2786 = vmatpush2.msra.mxu0 0.0
        %2787 = vmatprep.subr.mxu0 0.0
        %2788 = vmatpush2.msra.mxu0 0.0
        %2789 = vmatprep.subr.mxu0 0.0
        %2790 = vmatpush2.msra.mxu0 0.0
        %2791 = vmatprep.subr.mxu0 0.0
        %2792 = vmatpush2.msra.mxu0 0.0
        %2793 = vmatprep.subr.mxu0 0.0
        %2794 = vmatpush2.msra.mxu0 0.0
        %2795 = vmatprep.subr.mxu0 0.0
        %2796 = vmatpush2.msra.mxu0 0.0
        %2797 = vmatprep.subr.mxu0 0.0
        %2798 = vmatpush2.msra.mxu0 0.0
        %2799 = vmatprep.subr.mxu0 0.0
        %2800 = vmatpush2.msra.mxu0 0.0
        %2801 = vmatprep.subr.mxu0 0.0
        %2802 = vmatpush2.msra.mxu0 0.0
        %2803 = vmatprep.subr.mxu0 0.0
        %2804 = vmatpush2.msra.mxu0 0.0
        %2805 = vmatprep.subr.mxu0 0.0
        %2806 = vmatpush2.msra.mxu0 0.0
        %2807 = vmatprep.subr.mxu0 0.0
        %2808 = vmatpush2.msra.mxu0 0.0
        %2809 = vmatprep.mubr.f32.mxu0 0.0
        %v2810 = vand.u32 %v1673, 4294901760
        %v2811 = vsub.f32 %v1673, %v2810
        %v2812 = vand.u32 %v2811, 4294901760
        %2813 = vmatmul.mubr.f32.gmra.mxu0 %v2812
        %v2814 = vpop.f32.mrf.mxu0
        %v2815 = vadd.f32 %v2709, %v2814
        %v2816 = vpop.f32.mrf.mxu0
        %v2817 = vadd.f32 %v2711, %v2816
        %2818 = vmatprep.mubr.f32.mxu0 0.0
        %v2819 = vand.u32 %v1676, 4294901760
        %v2820 = vsub.f32 %v1676, %v2819
        %v2821 = vand.u32 %v2820, 4294901760
        %2822 = vmatmul.mubr.f32.gmra.mxu0 %v2821
        %v2823 = vpop.f32.mrf.mxu0
        %v2824 = vadd.f32 %v2717, %v2823
        %v2825 = vpop.f32.mrf.mxu0
        %v2826 = vadd.f32 %v2719, %v2825
        %2827 = vmatprep.mubr.f32.mxu0 0.0
        %v2828 = vand.u32 %v1679, 4294901760
        %v2829 = vsub.f32 %v1679, %v2828
        %v2830 = vand.u32 %v2829, 4294901760
        %2831 = vmatmul.mubr.f32.gmra.mxu0 %v2830
        %v2832 = vpop.f32.mrf.mxu0
        %v2833 = vadd.f32 %v2725, %v2832
        %v2834 = vpop.f32.mrf.mxu0
        %v2835 = vadd.f32 %v2727, %v2834
        %2836 = vmatprep.mubr.f32.mxu0 0.0
        %v2837 = vand.u32 %v1682, 4294901760
        %v2838 = vsub.f32 %v1682, %v2837
        %v2839 = vand.u32 %v2838, 4294901760
        %2840 = vmatmul.mubr.f32.gmra.mxu0 %v2839
        %v2841 = vpop.f32.mrf.mxu0
        %v2842 = vadd.f32 %v2733, %v2841
        %v2843 = vpop.f32.mrf.mxu0
        %v2844 = vadd.f32 %v2735, %v2843
        %2845 = vdwg.mxu0
        %2846 = vmatprep.subr.mxu0 0.0
        %2847 = vmatpush1.msra.mxu0 0.0
        %2848 = vmatprep.subr.mxu0 0.0
        %2849 = vmatpush1.msra.mxu0 0.0
        %2850 = vmatprep.subr.mxu0 0.0
        %2851 = vmatpush1.msra.mxu0 0.0
        %2852 = vmatprep.subr.mxu0 0.0
        %2853 = vmatpush1.msra.mxu0 0.0
        %2854 = vmatprep.subr.mxu0 0.0
        %2855 = vmatpush1.msra.mxu0 0.0
        %2856 = vmatprep.subr.mxu0 0.0
        %2857 = vmatpush1.msra.mxu0 0.0
        %2858 = vmatprep.subr.mxu0 0.0
        %2859 = vmatpush1.msra.mxu0 0.0
        %2860 = vmatprep.subr.mxu0 0.0
        %2861 = vmatpush1.msra.mxu0 0.0
        %2862 = vmatprep.subr.mxu0 0.0
        %2863 = vmatpush1.msra.mxu0 0.0
        %2864 = vmatprep.subr.mxu0 0.0
        %2865 = vmatpush1.msra.mxu0 0.0
        %2866 = vmatprep.subr.mxu0 0.0
        %2867 = vmatpush1.msra.mxu0 0.0
        %2868 = vmatprep.subr.mxu0 0.0
        %2869 = vmatpush1.msra.mxu0 0.0
        %v2870 = vand.u32 %v1642, 4294901760
        %v2871 = vsub.f32 %v1642, %v2870
        %v2872 = vand.u32 %v2871, 4294901760
        %2873 = vmatprep.subr.mxu0 %v2872
        %v2874 = vand.u32 %v1641, 4294901760
        %v2875 = vsub.f32 %v1641, %v2874
        %v2876 = vand.u32 %v2875, 4294901760
        %2877 = vmatpush1.msra.mxu0 %v2876
        %v2878 = vand.u32 %v1638, 4294901760
        %v2879 = vsub.f32 %v1638, %v2878
        %v2880 = vand.u32 %v2879, 4294901760
        %2881 = vmatprep.subr.mxu0 %v2880
        %v2882 = vand.u32 %v1637, 4294901760
        %v2883 = vsub.f32 %v1637, %v2882
        %v2884 = vand.u32 %v2883, 4294901760
        %2885 = vmatpush1.msra.mxu0 %v2884
        %v2886 = vand.u32 %v1634, 4294901760
        %v2887 = vsub.f32 %v1634, %v2886
        %v2888 = vand.u32 %v2887, 4294901760
        %2889 = vmatprep.subr.mxu0 %v2888
        %v2890 = vand.u32 %v1633, 4294901760
        %v2891 = vsub.f32 %v1633, %v2890
        %v2892 = vand.u32 %v2891, 4294901760
        %2893 = vmatpush1.msra.mxu0 %v2892
        %v2894 = vand.u32 %v1630, 4294901760
        %v2895 = vsub.f32 %v1630, %v2894
        %v2896 = vand.u32 %v2895, 4294901760
        %2897 = vmatprep.subr.mxu0 %v2896
        %v2898 = vand.u32 %v1629, 4294901760
        %v2899 = vsub.f32 %v1629, %v2898
        %v2900 = vand.u32 %v2899, 4294901760
        %2901 = vmatpush1.msra.mxu0 %v2900
        %2902 = vmatprep.subr.mxu0 0.0
        %2903 = vmatpush2.msra.mxu0 0.0
        %2904 = vmatprep.subr.mxu0 0.0
        %2905 = vmatpush2.msra.mxu0 0.0
        %2906 = vmatprep.subr.mxu0 0.0
        %2907 = vmatpush2.msra.mxu0 0.0
        %2908 = vmatprep.subr.mxu0 0.0
        %2909 = vmatpush2.msra.mxu0 0.0
        %2910 = vmatprep.subr.mxu0 0.0
        %2911 = vmatpush2.msra.mxu0 0.0
        %2912 = vmatprep.subr.mxu0 0.0
        %2913 = vmatpush2.msra.mxu0 0.0
        %2914 = vmatprep.subr.mxu0 0.0
        %2915 = vmatpush2.msra.mxu0 0.0
        %2916 = vmatprep.subr.mxu0 0.0
        %2917 = vmatpush2.msra.mxu0 0.0
        %2918 = vmatprep.subr.mxu0 0.0
        %2919 = vmatpush2.msra.mxu0 0.0
        %2920 = vmatprep.subr.mxu0 0.0
        %2921 = vmatpush2.msra.mxu0 0.0
        %2922 = vmatprep.subr.mxu0 0.0
        %2923 = vmatpush2.msra.mxu0 0.0
        %2924 = vmatprep.subr.mxu0 0.0
        %2925 = vmatpush2.msra.mxu0 0.0
        %2926 = vmatprep.subr.mxu0 0.0
        %2927 = vmatpush2.msra.mxu0 0.0
        %2928 = vmatprep.subr.mxu0 0.0
        %2929 = vmatpush2.msra.mxu0 0.0
        %2930 = vmatprep.subr.mxu0 0.0
        %2931 = vmatpush2.msra.mxu0 0.0
        %2932 = vmatprep.subr.mxu0 0.0
        %2933 = vmatpush2.msra.mxu0 0.0
        %2934 = vmatprep.mubr.f32.mxu0 0.0
        %v2935 = vand.u32 %v1673, 4294901760
        %2936 = vmatmul.mubr.f32.gmra.mxu0 %v2935
        %v2937 = vpop.f32.mrf.mxu0
        %v2938 = vadd.f32 %v2815, %v2937
        %v2939 = vpop.f32.mrf.mxu0
        %v2940 = vadd.f32 %v2817, %v2939
        %2941 = vmatprep.mubr.f32.mxu0 0.0
        %v2942 = vand.u32 %v1676, 4294901760
        %2943 = vmatmul.mubr.f32.gmra.mxu0 %v2942
        %v2944 = vpop.f32.mrf.mxu0
        %v2945 = vadd.f32 %v2824, %v2944
        %v2946 = vpop.f32.mrf.mxu0
        %v2947 = vadd.f32 %v2826, %v2946
        %2948 = vmatprep.mubr.f32.mxu0 0.0
        %v2949 = vand.u32 %v1679, 4294901760
        %2950 = vmatmul.mubr.f32.gmra.mxu0 %v2949
        %v2951 = vpop.f32.mrf.mxu0
        %v2952 = vadd.f32 %v2833, %v2951
        %v2953 = vpop.f32.mrf.mxu0
        %v2954 = vadd.f32 %v2835, %v2953
        %2955 = vmatprep.mubr.f32.mxu0 0.0
        %v2956 = vand.u32 %v1682, 4294901760
        %2957 = vmatmul.mubr.f32.gmra.mxu0 %v2956
        %v2958 = vpop.f32.mrf.mxu0
        %v2959 = vadd.f32 %v2842, %v2958
        %v2960 = vpop.f32.mrf.mxu0
        %v2961 = vadd.f32 %v2844, %v2960
        %2962 = vdwg.mxu0
        %2963 = vmatprep.subr.mxu0 0.0
        %2964 = vmatpush1.msra.mxu0 0.0
        %2965 = vmatprep.subr.mxu0 0.0
        %2966 = vmatpush1.msra.mxu0 0.0
        %2967 = vmatprep.subr.mxu0 0.0
        %2968 = vmatpush1.msra.mxu0 0.0
        %2969 = vmatprep.subr.mxu0 0.0
        %2970 = vmatpush1.msra.mxu0 0.0
        %2971 = vmatprep.subr.mxu0 0.0
        %2972 = vmatpush1.msra.mxu0 0.0
        %2973 = vmatprep.subr.mxu0 0.0
        %2974 = vmatpush1.msra.mxu0 0.0
        %2975 = vmatprep.subr.mxu0 0.0
        %2976 = vmatpush1.msra.mxu0 0.0
        %2977 = vmatprep.subr.mxu0 0.0
        %2978 = vmatpush1.msra.mxu0 0.0
        %2979 = vmatprep.subr.mxu0 0.0
        %2980 = vmatpush1.msra.mxu0 0.0
        %2981 = vmatprep.subr.mxu0 0.0
        %2982 = vmatpush1.msra.mxu0 0.0
        %2983 = vmatprep.subr.mxu0 0.0
        %2984 = vmatpush1.msra.mxu0 0.0
        %2985 = vmatprep.subr.mxu0 0.0
        %2986 = vmatpush1.msra.mxu0 0.0
        %v2987 = vand.u32 %v1642, 4294901760
        %2988 = vmatprep.subr.mxu0 %v2987
        %v2989 = vand.u32 %v1641, 4294901760
        %2990 = vmatpush1.msra.mxu0 %v2989
        %v2991 = vand.u32 %v1638, 4294901760
        %2992 = vmatprep.subr.mxu0 %v2991
        %v2993 = vand.u32 %v1637, 4294901760
        %2994 = vmatpush1.msra.mxu0 %v2993
        %v2995 = vand.u32 %v1634, 4294901760
        %2996 = vmatprep.subr.mxu0 %v2995
        %v2997 = vand.u32 %v1633, 4294901760
        %2998 = vmatpush1.msra.mxu0 %v2997
        %v2999 = vand.u32 %v1630, 4294901760
        %3000 = vmatprep.subr.mxu0 %v2999
        %v3001 = vand.u32 %v1629, 4294901760
        %3002 = vmatpush1.msra.mxu0 %v3001
        %3003 = vmatprep.subr.mxu0 0.0
        %3004 = vmatpush2.msra.mxu0 0.0
        %3005 = vmatprep.subr.mxu0 0.0
        %3006 = vmatpush2.msra.mxu0 0.0
        %3007 = vmatprep.subr.mxu0 0.0
        %3008 = vmatpush2.msra.mxu0 0.0
        %3009 = vmatprep.subr.mxu0 0.0
        %3010 = vmatpush2.msra.mxu0 0.0
        %3011 = vmatprep.subr.mxu0 0.0
        %3012 = vmatpush2.msra.mxu0 0.0
        %3013 = vmatprep.subr.mxu0 0.0
        %3014 = vmatpush2.msra.mxu0 0.0
        %3015 = vmatprep.subr.mxu0 0.0
        %3016 = vmatpush2.msra.mxu0 0.0
        %3017 = vmatprep.subr.mxu0 0.0
        %3018 = vmatpush2.msra.mxu0 0.0
        %3019 = vmatprep.subr.mxu0 0.0
        %3020 = vmatpush2.msra.mxu0 0.0
        %3021 = vmatprep.subr.mxu0 0.0
        %3022 = vmatpush2.msra.mxu0 0.0
        %3023 = vmatprep.subr.mxu0 0.0
        %3024 = vmatpush2.msra.mxu0 0.0
        %3025 = vmatprep.subr.mxu0 0.0
        %3026 = vmatpush2.msra.mxu0 0.0
        %3027 = vmatprep.subr.mxu0 0.0
        %3028 = vmatpush2.msra.mxu0 0.0
        %3029 = vmatprep.subr.mxu0 0.0
        %3030 = vmatpush2.msra.mxu0 0.0
        %3031 = vmatprep.subr.mxu0 0.0
        %3032 = vmatpush2.msra.mxu0 0.0
        %3033 = vmatprep.subr.mxu0 0.0
        %3034 = vmatpush2.msra.mxu0 0.0
        %3035 = vmatprep.mubr.f32.mxu0 0.0
        %v3036 = vand.u32 %v1673, 4294901760
        %3037 = vmatmul.mubr.f32.gmra.mxu0 %v3036
        %v3038 = vpop.f32.mrf.mxu0
        %v3039 = vadd.f32 %v2938, %v3038
        %v3040 = vpop.f32.mrf.mxu0
        %v3041 = vadd.f32 %v2940, %v3040
        %3042 = vmatprep.mubr.f32.mxu0 0.0
        %v3043 = vand.u32 %v1676, 4294901760
        %3044 = vmatmul.mubr.f32.gmra.mxu0 %v3043
        %v3045 = vpop.f32.mrf.mxu0
        %v3046 = vadd.f32 %v2945, %v3045
        %v3047 = vpop.f32.mrf.mxu0
        %v3048 = vadd.f32 %v2947, %v3047
        %3049 = vmatprep.mubr.f32.mxu0 0.0
        %v3050 = vand.u32 %v1679, 4294901760
        %3051 = vmatmul.mubr.f32.gmra.mxu0 %v3050
        %v3052 = vpop.f32.mrf.mxu0
        %v3053 = vadd.f32 %v2952, %v3052
        %v3054 = vpop.f32.mrf.mxu0
        %v3055 = vadd.f32 %v2954, %v3054
        %3056 = vmatprep.mubr.f32.mxu0 0.0
        %v3057 = vand.u32 %v1682, 4294901760
        %3058 = vmatmul.mubr.f32.gmra.mxu0 %v3057
        %v3059 = vpop.f32.mrf.mxu0
        %v3060 = vadd.f32 %v2959, %v3059
        %v3061 = vpop.f32.mrf.mxu0
        %v3062 = vadd.f32 %v2961, %v3061
        %3063 = vdwg.mxu0
        %v3064 = vmax.f32 %v2349, 0.0
        %v3065 = vmax.f32 %v2351, 0.0
        %v3066 = vmax.f32 %v3039, 0.0
        %v3067 = vmax.f32 %v3041, 0.0
        %v3068 = vmax.f32 %v2356, 0.0
        %v3069 = vmax.f32 %v2358, 0.0
        %v3070 = vmax.f32 %v3046, 0.0
        %v3071 = vmax.f32 %v3048, 0.0
        %v3072 = vmax.f32 %v2363, 0.0
        %v3073 = vmax.f32 %v2365, 0.0
        %v3074 = vmax.f32 %v3053, 0.0
        %v3075 = vmax.f32 %v3055, 0.0
        %v3076 = vmax.f32 %v2370, 0.0
        %v3077 = vmax.f32 %v2372, 0.0
        %v3078 = vmax.f32 %v3060, 0.0
        %v3079 = vmax.f32 %v3062, 0.0
        %v3080 = vld [vmem:[%s5] sm:$0xff]
        %v3081 = vld [vmem:[%s5 + $0x8] sm:$0xff]
        %v3082 = vld [vmem:[%s5 + $0x10] sm:$0xff]
        %v3083 = vld [vmem:[%s5 + $0x18] sm:$0xff]
        %v3084 = vld [vmem:[%s6] sm:$0xff]
        %v3085 = vld [vmem:[%s6 + $0x8] sm:$0xff]
        %v3086 = vld [vmem:[%s6 + $0x10] sm:$0xff]
        %v3087 = vld [vmem:[%s6 + $0x18] sm:$0xff]
        %3089 = vset.pattern.permute.xlu0 0
        %3090 = vperm.xlu0 %3089, %v3084
        %v3091 = vpop.permute.xlu0 %3090
        %3094 = vset.pattern.permute.xlu0 0
        %3095 = vperm.xlu0 %3094, %v3085
        %v3096 = vpop.permute.xlu0 %3095
        %3099 = vset.pattern.permute.xlu0 0
        %3100 = vperm.xlu0 %3099, %v3086
        %v3101 = vpop.permute.xlu0 %3100
        %3104 = vset.pattern.permute.xlu0 0
        %3105 = vperm.xlu0 %3104, %v3087
        %v3106 = vpop.permute.xlu0 %3105
        %v3109 = vsel %vm1671, %v3080, 0
        %v3112 = vsel %vm1671, %v3081, 0
        %v3115 = vsel %vm1671, %v3082, 0
        %v3118 = vsel %vm1671, %v3083, 0
        %3120 = vmatprep.subr.mxu0 0.0
        %3121 = vmatpush1.msra.mxu0 0.0
        %3122 = vmatprep.subr.mxu0 0.0
        %3123 = vmatpush1.msra.mxu0 0.0
        %3124 = vmatprep.subr.mxu0 0.0
        %3125 = vmatpush1.msra.mxu0 0.0
        %3126 = vmatprep.subr.mxu0 0.0
        %3127 = vmatpush1.msra.mxu0 0.0
        %3128 = vmatprep.subr.mxu0 0.0
        %3129 = vmatpush1.msra.mxu0 0.0
        %3130 = vmatprep.subr.mxu0 0.0
        %3131 = vmatpush1.msra.mxu0 0.0
        %3132 = vmatprep.subr.mxu0 0.0
        %3133 = vmatpush1.msra.mxu0 0.0
        %3134 = vmatprep.subr.mxu0 0.0
        %3135 = vmatpush1.msra.mxu0 0.0
        %3136 = vmatprep.subr.mxu0 0.0
        %3137 = vmatpush1.msra.mxu0 0.0
        %3138 = vmatprep.subr.mxu0 0.0
        %3139 = vmatpush1.msra.mxu0 0.0
        %3140 = vmatprep.subr.mxu0 0.0
        %3141 = vmatpush1.msra.mxu0 0.0
        %3142 = vmatprep.subr.mxu0 0.0
        %3143 = vmatpush1.msra.mxu0 0.0
        %v3144 = vand.u32 %v3077, 4294901760
        %3145 = vmatprep.subr.mxu0 %v3144
        %v3146 = vand.u32 %v3076, 4294901760
        %3147 = vmatpush1.msra.mxu0 %v3146
        %v3148 = vand.u32 %v3073, 4294901760
        %3149 = vmatprep.subr.mxu0 %v3148
        %v3150 = vand.u32 %v3072, 4294901760
        %3151 = vmatpush1.msra.mxu0 %v3150
        %v3152 = vand.u32 %v3069, 4294901760
        %3153 = vmatprep.subr.mxu0 %v3152
        %v3154 = vand.u32 %v3068, 4294901760
        %3155 = vmatpush1.msra.mxu0 %v3154
        %v3156 = vand.u32 %v3065, 4294901760
        %3157 = vmatprep.subr.mxu0 %v3156
        %v3158 = vand.u32 %v3064, 4294901760
        %3159 = vmatpush1.msra.mxu0 %v3158
        %3160 = vmatprep.subr.mxu0 0.0
        %3161 = vmatpush2.msra.mxu0 0.0
        %3162 = vmatprep.subr.mxu0 0.0
        %3163 = vmatpush2.msra.mxu0 0.0
        %3164 = vmatprep.subr.mxu0 0.0
        %3165 = vmatpush2.msra.mxu0 0.0
        %3166 = vmatprep.subr.mxu0 0.0
        %3167 = vmatpush2.msra.mxu0 0.0
        %3168 = vmatprep.subr.mxu0 0.0
        %3169 = vmatpush2.msra.mxu0 0.0
        %3170 = vmatprep.subr.mxu0 0.0
        %3171 = vmatpush2.msra.mxu0 0.0
        %3172 = vmatprep.subr.mxu0 0.0
        %3173 = vmatpush2.msra.mxu0 0.0
        %3174 = vmatprep.subr.mxu0 0.0
        %3175 = vmatpush2.msra.mxu0 0.0
        %3176 = vmatprep.subr.mxu0 0.0
        %3177 = vmatpush2.msra.mxu0 0.0
        %3178 = vmatprep.subr.mxu0 0.0
        %3179 = vmatpush2.msra.mxu0 0.0
        %3180 = vmatprep.subr.mxu0 0.0
        %3181 = vmatpush2.msra.mxu0 0.0
        %3182 = vmatprep.subr.mxu0 0.0
        %3183 = vmatpush2.msra.mxu0 0.0
        %3184 = vmatprep.subr.mxu0 0.0
        %3185 = vmatpush2.msra.mxu0 0.0
        %3186 = vmatprep.subr.mxu0 0.0
        %3187 = vmatpush2.msra.mxu0 0.0
        %3188 = vmatprep.subr.mxu0 0.0
        %3189 = vmatpush2.msra.mxu0 0.0
        %3190 = vmatprep.subr.mxu0 0.0
        %3191 = vmatpush2.msra.mxu0 0.0
        %3192 = vmatprep.mubr.f32.mxu0 0.0
        %v3193 = vand.u32 %v3109, 4294901760
        %v3194 = vsub.f32 %v3109, %v3193
        %v3195 = vand.u32 %v3194, 4294901760
        %v3196 = vsub.f32 %v3194, %v3195
        %v3197 = vand.u32 %v3196, 4294901760
        %3198 = vmatmul.mubr.f32.gmra.mxu0 %v3197
        %v3199 = vpop.f32.mrf.mxu0
        %v3200 = vadd.f32 %v3091, %v3199
        %v3201 = vpop.f32.mrf.mxu0
        %v3202 = vadd.f32 %v3091, %v3201
        %3203 = vmatprep.mubr.f32.mxu0 0.0
        %v3204 = vand.u32 %v3112, 4294901760
        %v3205 = vsub.f32 %v3112, %v3204
        %v3206 = vand.u32 %v3205, 4294901760
        %v3207 = vsub.f32 %v3205, %v3206
        %v3208 = vand.u32 %v3207, 4294901760
        %3209 = vmatmul.mubr.f32.gmra.mxu0 %v3208
        %v3210 = vpop.f32.mrf.mxu0
        %v3211 = vadd.f32 %v3096, %v3210
        %v3212 = vpop.f32.mrf.mxu0
        %v3213 = vadd.f32 %v3096, %v3212
        %3214 = vmatprep.mubr.f32.mxu0 0.0
        %v3215 = vand.u32 %v3115, 4294901760
        %v3216 = vsub.f32 %v3115, %v3215
        %v3217 = vand.u32 %v3216, 4294901760
        %v3218 = vsub.f32 %v3216, %v3217
        %v3219 = vand.u32 %v3218, 4294901760
        %3220 = vmatmul.mubr.f32.gmra.mxu0 %v3219
        %v3221 = vpop.f32.mrf.mxu0
        %v3222 = vadd.f32 %v3101, %v3221
        %v3223 = vpop.f32.mrf.mxu0
        %v3224 = vadd.f32 %v3101, %v3223
        %3225 = vmatprep.mubr.f32.mxu0 0.0
        %v3226 = vand.u32 %v3118, 4294901760
        %v3227 = vsub.f32 %v3118, %v3226
        %v3228 = vand.u32 %v3227, 4294901760
        %v3229 = vsub.f32 %v3227, %v3228
        %v3230 = vand.u32 %v3229, 4294901760
        %3231 = vmatmul.mubr.f32.gmra.mxu0 %v3230
        %v3232 = vpop.f32.mrf.mxu0
        %v3233 = vadd.f32 %v3106, %v3232
        %v3234 = vpop.f32.mrf.mxu0
        %v3235 = vadd.f32 %v3106, %v3234
        %3236 = vdwg.mxu0
        %3237 = vmatprep.subr.mxu0 0.0
        %3238 = vmatpush1.msra.mxu0 0.0
        %3239 = vmatprep.subr.mxu0 0.0
        %3240 = vmatpush1.msra.mxu0 0.0
        %3241 = vmatprep.subr.mxu0 0.0
        %3242 = vmatpush1.msra.mxu0 0.0
        %3243 = vmatprep.subr.mxu0 0.0
        %3244 = vmatpush1.msra.mxu0 0.0
        %3245 = vmatprep.subr.mxu0 0.0
        %3246 = vmatpush1.msra.mxu0 0.0
        %3247 = vmatprep.subr.mxu0 0.0
        %3248 = vmatpush1.msra.mxu0 0.0
        %3249 = vmatprep.subr.mxu0 0.0
        %3250 = vmatpush1.msra.mxu0 0.0
        %3251 = vmatprep.subr.mxu0 0.0
        %3252 = vmatpush1.msra.mxu0 0.0
        %3253 = vmatprep.subr.mxu0 0.0
        %3254 = vmatpush1.msra.mxu0 0.0
        %3255 = vmatprep.subr.mxu0 0.0
        %3256 = vmatpush1.msra.mxu0 0.0
        %3257 = vmatprep.subr.mxu0 0.0
        %3258 = vmatpush1.msra.mxu0 0.0
        %3259 = vmatprep.subr.mxu0 0.0
        %3260 = vmatpush1.msra.mxu0 0.0
        %v3261 = vand.u32 %v3077, 4294901760
        %v3262 = vsub.f32 %v3077, %v3261
        %v3263 = vand.u32 %v3262, 4294901760
        %v3264 = vsub.f32 %v3262, %v3263
        %v3265 = vand.u32 %v3264, 4294901760
        %3266 = vmatprep.subr.mxu0 %v3265
        %v3267 = vand.u32 %v3076, 4294901760
        %v3268 = vsub.f32 %v3076, %v3267
        %v3269 = vand.u32 %v3268, 4294901760
        %v3270 = vsub.f32 %v3268, %v3269
        %v3271 = vand.u32 %v3270, 4294901760
        %3272 = vmatpush1.msra.mxu0 %v3271
        %v3273 = vand.u32 %v3073, 4294901760
        %v3274 = vsub.f32 %v3073, %v3273
        %v3275 = vand.u32 %v3274, 4294901760
        %v3276 = vsub.f32 %v3274, %v3275
        %v3277 = vand.u32 %v3276, 4294901760
        %3278 = vmatprep.subr.mxu0 %v3277
        %v3279 = vand.u32 %v3072, 4294901760
        %v3280 = vsub.f32 %v3072, %v3279
        %v3281 = vand.u32 %v3280, 4294901760
        %v3282 = vsub.f32 %v3280, %v3281
        %v3283 = vand.u32 %v3282, 4294901760
        %3284 = vmatpush1.msra.mxu0 %v3283
        %v3285 = vand.u32 %v3069, 4294901760
        %v3286 = vsub.f32 %v3069, %v3285
        %v3287 = vand.u32 %v3286, 4294901760
        %v3288 = vsub.f32 %v3286, %v3287
        %v3289 = vand.u32 %v3288, 4294901760
        %3290 = vmatprep.subr.mxu0 %v3289
        %v3291 = vand.u32 %v3068, 4294901760
        %v3292 = vsub.f32 %v3068, %v3291
        %v3293 = vand.u32 %v3292, 4294901760
        %v3294 = vsub.f32 %v3292, %v3293
        %v3295 = vand.u32 %v3294, 4294901760
        %3296 = vmatpush1.msra.mxu0 %v3295
        %v3297 = vand.u32 %v3065, 4294901760
        %v3298 = vsub.f32 %v3065, %v3297
        %v3299 = vand.u32 %v3298, 4294901760
        %v3300 = vsub.f32 %v3298, %v3299
        %v3301 = vand.u32 %v3300, 4294901760
        %3302 = vmatprep.subr.mxu0 %v3301
        %v3303 = vand.u32 %v3064, 4294901760
        %v3304 = vsub.f32 %v3064, %v3303
        %v3305 = vand.u32 %v3304, 4294901760
        %v3306 = vsub.f32 %v3304, %v3305
        %v3307 = vand.u32 %v3306, 4294901760
        %3308 = vmatpush1.msra.mxu0 %v3307
        %3309 = vmatprep.subr.mxu0 0.0
        %3310 = vmatpush2.msra.mxu0 0.0
        %3311 = vmatprep.subr.mxu0 0.0
        %3312 = vmatpush2.msra.mxu0 0.0
        %3313 = vmatprep.subr.mxu0 0.0
        %3314 = vmatpush2.msra.mxu0 0.0
        %3315 = vmatprep.subr.mxu0 0.0
        %3316 = vmatpush2.msra.mxu0 0.0
        %3317 = vmatprep.subr.mxu0 0.0
        %3318 = vmatpush2.msra.mxu0 0.0
        %3319 = vmatprep.subr.mxu0 0.0
        %3320 = vmatpush2.msra.mxu0 0.0
        %3321 = vmatprep.subr.mxu0 0.0
        %3322 = vmatpush2.msra.mxu0 0.0
        %3323 = vmatprep.subr.mxu0 0.0
        %3324 = vmatpush2.msra.mxu0 0.0
        %3325 = vmatprep.subr.mxu0 0.0
        %3326 = vmatpush2.msra.mxu0 0.0
        %3327 = vmatprep.subr.mxu0 0.0
        %3328 = vmatpush2.msra.mxu0 0.0
        %3329 = vmatprep.subr.mxu0 0.0
        %3330 = vmatpush2.msra.mxu0 0.0
        %3331 = vmatprep.subr.mxu0 0.0
        %3332 = vmatpush2.msra.mxu0 0.0
        %3333 = vmatprep.subr.mxu0 0.0
        %3334 = vmatpush2.msra.mxu0 0.0
        %3335 = vmatprep.subr.mxu0 0.0
        %3336 = vmatpush2.msra.mxu0 0.0
        %3337 = vmatprep.subr.mxu0 0.0
        %3338 = vmatpush2.msra.mxu0 0.0
        %3339 = vmatprep.subr.mxu0 0.0
        %3340 = vmatpush2.msra.mxu0 0.0
        %3341 = vmatprep.mubr.f32.mxu0 0.0
        %v3342 = vand.u32 %v3109, 4294901760
        %3343 = vmatmul.mubr.f32.gmra.mxu0 %v3342
        %v3344 = vpop.f32.mrf.mxu0
        %v3345 = vadd.f32 %v3200, %v3344
        %v3346 = vpop.f32.mrf.mxu0
        %v3347 = vadd.f32 %v3202, %v3346
        %3348 = vmatprep.mubr.f32.mxu0 0.0
        %v3349 = vand.u32 %v3112, 4294901760
        %3350 = vmatmul.mubr.f32.gmra.mxu0 %v3349
        %v3351 = vpop.f32.mrf.mxu0
        %v3352 = vadd.f32 %v3211, %v3351
        %v3353 = vpop.f32.mrf.mxu0
        %v3354 = vadd.f32 %v3213, %v3353
        %3355 = vmatprep.mubr.f32.mxu0 0.0
        %v3356 = vand.u32 %v3115, 4294901760
        %3357 = vmatmul.mubr.f32.gmra.mxu0 %v3356
        %v3358 = vpop.f32.mrf.mxu0
        %v3359 = vadd.f32 %v3222, %v3358
        %v3360 = vpop.f32.mrf.mxu0
        %v3361 = vadd.f32 %v3224, %v3360
        %3362 = vmatprep.mubr.f32.mxu0 0.0
        %v3363 = vand.u32 %v3118, 4294901760
        %3364 = vmatmul.mubr.f32.gmra.mxu0 %v3363
        %v3365 = vpop.f32.mrf.mxu0
        %v3366 = vadd.f32 %v3233, %v3365
        %v3367 = vpop.f32.mrf.mxu0
        %v3368 = vadd.f32 %v3235, %v3367
        %3369 = vdwg.mxu0
        %3370 = vmatprep.subr.mxu0 0.0
        %3371 = vmatpush1.msra.mxu0 0.0
        %3372 = vmatprep.subr.mxu0 0.0
        %3373 = vmatpush1.msra.mxu0 0.0
        %3374 = vmatprep.subr.mxu0 0.0
        %3375 = vmatpush1.msra.mxu0 0.0
        %3376 = vmatprep.subr.mxu0 0.0
        %3377 = vmatpush1.msra.mxu0 0.0
        %3378 = vmatprep.subr.mxu0 0.0
        %3379 = vmatpush1.msra.mxu0 0.0
        %3380 = vmatprep.subr.mxu0 0.0
        %3381 = vmatpush1.msra.mxu0 0.0
        %3382 = vmatprep.subr.mxu0 0.0
        %3383 = vmatpush1.msra.mxu0 0.0
        %3384 = vmatprep.subr.mxu0 0.0
        %3385 = vmatpush1.msra.mxu0 0.0
        %3386 = vmatprep.subr.mxu0 0.0
        %3387 = vmatpush1.msra.mxu0 0.0
        %3388 = vmatprep.subr.mxu0 0.0
        %3389 = vmatpush1.msra.mxu0 0.0
        %3390 = vmatprep.subr.mxu0 0.0
        %3391 = vmatpush1.msra.mxu0 0.0
        %3392 = vmatprep.subr.mxu0 0.0
        %3393 = vmatpush1.msra.mxu0 0.0
        %v3394 = vand.u32 %v3077, 4294901760
        %v3395 = vsub.f32 %v3077, %v3394
        %3396 = vmatprep.subr.mxu0 %v3395
        %v3397 = vand.u32 %v3076, 4294901760
        %v3398 = vsub.f32 %v3076, %v3397
        %3399 = vmatpush1.msra.mxu0 %v3398
        %v3400 = vand.u32 %v3073, 4294901760
        %v3401 = vsub.f32 %v3073, %v3400
        %3402 = vmatprep.subr.mxu0 %v3401
        %v3403 = vand.u32 %v3072, 4294901760
        %v3404 = vsub.f32 %v3072, %v3403
        %3405 = vmatpush1.msra.mxu0 %v3404
        %v3406 = vand.u32 %v3069, 4294901760
        %v3407 = vsub.f32 %v3069, %v3406
        %3408 = vmatprep.subr.mxu0 %v3407
        %v3409 = vand.u32 %v3068, 4294901760
        %v3410 = vsub.f32 %v3068, %v3409
        %3411 = vmatpush1.msra.mxu0 %v3410
        %v3412 = vand.u32 %v3065, 4294901760
        %v3413 = vsub.f32 %v3065, %v3412
        %3414 = vmatprep.subr.mxu0 %v3413
        %v3415 = vand.u32 %v3064, 4294901760
        %v3416 = vsub.f32 %v3064, %v3415
        %3417 = vmatpush1.msra.mxu0 %v3416
        %3418 = vmatprep.subr.mxu0 0.0
        %3419 = vmatpush2.msra.mxu0 0.0
        %3420 = vmatprep.subr.mxu0 0.0
        %3421 = vmatpush2.msra.mxu0 0.0
        %3422 = vmatprep.subr.mxu0 0.0
        %3423 = vmatpush2.msra.mxu0 0.0
        %3424 = vmatprep.subr.mxu0 0.0
        %3425 = vmatpush2.msra.mxu0 0.0
        %3426 = vmatprep.subr.mxu0 0.0
        %3427 = vmatpush2.msra.mxu0 0.0
        %3428 = vmatprep.subr.mxu0 0.0
        %3429 = vmatpush2.msra.mxu0 0.0
        %3430 = vmatprep.subr.mxu0 0.0
        %3431 = vmatpush2.msra.mxu0 0.0
        %3432 = vmatprep.subr.mxu0 0.0
        %3433 = vmatpush2.msra.mxu0 0.0
        %3434 = vmatprep.subr.mxu0 0.0
        %3435 = vmatpush2.msra.mxu0 0.0
        %3436 = vmatprep.subr.mxu0 0.0
        %3437 = vmatpush2.msra.mxu0 0.0
        %3438 = vmatprep.subr.mxu0 0.0
        %3439 = vmatpush2.msra.mxu0 0.0
        %3440 = vmatprep.subr.mxu0 0.0
        %3441 = vmatpush2.msra.mxu0 0.0
        %3442 = vmatprep.subr.mxu0 0.0
        %3443 = vmatpush2.msra.mxu0 0.0
        %3444 = vmatprep.subr.mxu0 0.0
        %3445 = vmatpush2.msra.mxu0 0.0
        %3446 = vmatprep.subr.mxu0 0.0
        %3447 = vmatpush2.msra.mxu0 0.0
        %3448 = vmatprep.subr.mxu0 0.0
        %3449 = vmatpush2.msra.mxu0 0.0
        %3450 = vmatprep.mubr.f32.mxu0 0.0
        %v3451 = vand.u32 %v3109, 4294901760
        %v3452 = vsub.f32 %v3109, %v3451
        %3453 = vmatmul.mubr.f32.gmra.mxu0 %v3452
        %v3454 = vpop.f32.mrf.mxu0
        %v3455 = vadd.f32 %v3345, %v3454
        %v3456 = vpop.f32.mrf.mxu0
        %v3457 = vadd.f32 %v3347, %v3456
        %3458 = vmatprep.mubr.f32.mxu0 0.0
        %v3459 = vand.u32 %v3112, 4294901760
        %v3460 = vsub.f32 %v3112, %v3459
        %3461 = vmatmul.mubr.f32.gmra.mxu0 %v3460
        %v3462 = vpop.f32.mrf.mxu0
        %v3463 = vadd.f32 %v3352, %v3462
        %v3464 = vpop.f32.mrf.mxu0
        %v3465 = vadd.f32 %v3354, %v3464
        %3466 = vmatprep.mubr.f32.mxu0 0.0
        %v3467 = vand.u32 %v3115, 4294901760
        %v3468 = vsub.f32 %v3115, %v3467
        %3469 = vmatmul.mubr.f32.gmra.mxu0 %v3468
        %v3470 = vpop.f32.mrf.mxu0
        %v3471 = vadd.f32 %v3359, %v3470
        %v3472 = vpop.f32.mrf.mxu0
        %v3473 = vadd.f32 %v3361, %v3472
        %3474 = vmatprep.mubr.f32.mxu0 0.0
        %v3475 = vand.u32 %v3118, 4294901760
        %v3476 = vsub.f32 %v3118, %v3475
        %3477 = vmatmul.mubr.f32.gmra.mxu0 %v3476
        %v3478 = vpop.f32.mrf.mxu0
        %v3479 = vadd.f32 %v3366, %v3478
        %v3480 = vpop.f32.mrf.mxu0
        %v3481 = vadd.f32 %v3368, %v3480
        %3482 = vdwg.mxu0
        %3483 = vmatprep.subr.mxu0 0.0
        %3484 = vmatpush1.msra.mxu0 0.0
        %3485 = vmatprep.subr.mxu0 0.0
        %3486 = vmatpush1.msra.mxu0 0.0
        %3487 = vmatprep.subr.mxu0 0.0
        %3488 = vmatpush1.msra.mxu0 0.0
        %3489 = vmatprep.subr.mxu0 0.0
        %3490 = vmatpush1.msra.mxu0 0.0
        %3491 = vmatprep.subr.mxu0 0.0
        %3492 = vmatpush1.msra.mxu0 0.0
        %3493 = vmatprep.subr.mxu0 0.0
        %3494 = vmatpush1.msra.mxu0 0.0
        %3495 = vmatprep.subr.mxu0 0.0
        %3496 = vmatpush1.msra.mxu0 0.0
        %3497 = vmatprep.subr.mxu0 0.0
        %3498 = vmatpush1.msra.mxu0 0.0
        %3499 = vmatprep.subr.mxu0 0.0
        %3500 = vmatpush1.msra.mxu0 0.0
        %3501 = vmatprep.subr.mxu0 0.0
        %3502 = vmatpush1.msra.mxu0 0.0
        %3503 = vmatprep.subr.mxu0 0.0
        %3504 = vmatpush1.msra.mxu0 0.0
        %3505 = vmatprep.subr.mxu0 0.0
        %3506 = vmatpush1.msra.mxu0 0.0
        %v3507 = vand.u32 %v3077, 4294901760
        %3508 = vmatprep.subr.mxu0 %v3507
        %v3509 = vand.u32 %v3076, 4294901760
        %3510 = vmatpush1.msra.mxu0 %v3509
        %v3511 = vand.u32 %v3073, 4294901760
        %3512 = vmatprep.subr.mxu0 %v3511
        %v3513 = vand.u32 %v3072, 4294901760
        %3514 = vmatpush1.msra.mxu0 %v3513
        %v3515 = vand.u32 %v3069, 4294901760
        %3516 = vmatprep.subr.mxu0 %v3515
        %v3517 = vand.u32 %v3068, 4294901760
        %3518 = vmatpush1.msra.mxu0 %v3517
        %v3519 = vand.u32 %v3065, 4294901760
        %3520 = vmatprep.subr.mxu0 %v3519
        %v3521 = vand.u32 %v3064, 4294901760
        %3522 = vmatpush1.msra.mxu0 %v3521
        %3523 = vmatprep.subr.mxu0 0.0
        %3524 = vmatpush2.msra.mxu0 0.0
        %3525 = vmatprep.subr.mxu0 0.0
        %3526 = vmatpush2.msra.mxu0 0.0
        %3527 = vmatprep.subr.mxu0 0.0
        %3528 = vmatpush2.msra.mxu0 0.0
        %3529 = vmatprep.subr.mxu0 0.0
        %3530 = vmatpush2.msra.mxu0 0.0
        %3531 = vmatprep.subr.mxu0 0.0
        %3532 = vmatpush2.msra.mxu0 0.0
        %3533 = vmatprep.subr.mxu0 0.0
        %3534 = vmatpush2.msra.mxu0 0.0
        %3535 = vmatprep.subr.mxu0 0.0
        %3536 = vmatpush2.msra.mxu0 0.0
        %3537 = vmatprep.subr.mxu0 0.0
        %3538 = vmatpush2.msra.mxu0 0.0
        %3539 = vmatprep.subr.mxu0 0.0
        %3540 = vmatpush2.msra.mxu0 0.0
        %3541 = vmatprep.subr.mxu0 0.0
        %3542 = vmatpush2.msra.mxu0 0.0
        %3543 = vmatprep.subr.mxu0 0.0
        %3544 = vmatpush2.msra.mxu0 0.0
        %3545 = vmatprep.subr.mxu0 0.0
        %3546 = vmatpush2.msra.mxu0 0.0
        %3547 = vmatprep.subr.mxu0 0.0
        %3548 = vmatpush2.msra.mxu0 0.0
        %3549 = vmatprep.subr.mxu0 0.0
        %3550 = vmatpush2.msra.mxu0 0.0
        %3551 = vmatprep.subr.mxu0 0.0
        %3552 = vmatpush2.msra.mxu0 0.0
        %3553 = vmatprep.subr.mxu0 0.0
        %3554 = vmatpush2.msra.mxu0 0.0
        %3555 = vmatprep.mubr.f32.mxu0 0.0
        %v3556 = vand.u32 %v3109, 4294901760
        %v3557 = vsub.f32 %v3109, %v3556
        %v3558 = vand.u32 %v3557, 4294901760
        %3559 = vmatmul.mubr.f32.gmra.mxu0 %v3558
        %v3560 = vpop.f32.mrf.mxu0
        %v3561 = vadd.f32 %v3455, %v3560
        %v3562 = vpop.f32.mrf.mxu0
        %v3563 = vadd.f32 %v3457, %v3562
        %3564 = vmatprep.mubr.f32.mxu0 0.0
        %v3565 = vand.u32 %v3112, 4294901760
        %v3566 = vsub.f32 %v3112, %v3565
        %v3567 = vand.u32 %v3566, 4294901760
        %3568 = vmatmul.mubr.f32.gmra.mxu0 %v3567
        %v3569 = vpop.f32.mrf.mxu0
        %v3570 = vadd.f32 %v3463, %v3569
        %v3571 = vpop.f32.mrf.mxu0
        %v3572 = vadd.f32 %v3465, %v3571
        %3573 = vmatprep.mubr.f32.mxu0 0.0
        %v3574 = vand.u32 %v3115, 4294901760
        %v3575 = vsub.f32 %v3115, %v3574
        %v3576 = vand.u32 %v3575, 4294901760
        %3577 = vmatmul.mubr.f32.gmra.mxu0 %v3576
        %v3578 = vpop.f32.mrf.mxu0
        %v3579 = vadd.f32 %v3471, %v3578
        %v3580 = vpop.f32.mrf.mxu0
        %v3581 = vadd.f32 %v3473, %v3580
        %3582 = vmatprep.mubr.f32.mxu0 0.0
        %v3583 = vand.u32 %v3118, 4294901760
        %v3584 = vsub.f32 %v3118, %v3583
        %v3585 = vand.u32 %v3584, 4294901760
        %3586 = vmatmul.mubr.f32.gmra.mxu0 %v3585
        %v3587 = vpop.f32.mrf.mxu0
        %v3588 = vadd.f32 %v3479, %v3587
        %v3589 = vpop.f32.mrf.mxu0
        %v3590 = vadd.f32 %v3481, %v3589
        %3591 = vdwg.mxu0
        %3592 = vmatprep.subr.mxu0 0.0
        %3593 = vmatpush1.msra.mxu0 0.0
        %3594 = vmatprep.subr.mxu0 0.0
        %3595 = vmatpush1.msra.mxu0 0.0
        %3596 = vmatprep.subr.mxu0 0.0
        %3597 = vmatpush1.msra.mxu0 0.0
        %3598 = vmatprep.subr.mxu0 0.0
        %3599 = vmatpush1.msra.mxu0 0.0
        %3600 = vmatprep.subr.mxu0 0.0
        %3601 = vmatpush1.msra.mxu0 0.0
        %3602 = vmatprep.subr.mxu0 0.0
        %3603 = vmatpush1.msra.mxu0 0.0
        %3604 = vmatprep.subr.mxu0 0.0
        %3605 = vmatpush1.msra.mxu0 0.0
        %3606 = vmatprep.subr.mxu0 0.0
        %3607 = vmatpush1.msra.mxu0 0.0
        %3608 = vmatprep.subr.mxu0 0.0
        %3609 = vmatpush1.msra.mxu0 0.0
        %3610 = vmatprep.subr.mxu0 0.0
        %3611 = vmatpush1.msra.mxu0 0.0
        %3612 = vmatprep.subr.mxu0 0.0
        %3613 = vmatpush1.msra.mxu0 0.0
        %3614 = vmatprep.subr.mxu0 0.0
        %3615 = vmatpush1.msra.mxu0 0.0
        %v3616 = vand.u32 %v3077, 4294901760
        %v3617 = vsub.f32 %v3077, %v3616
        %v3618 = vand.u32 %v3617, 4294901760
        %3619 = vmatprep.subr.mxu0 %v3618
        %v3620 = vand.u32 %v3076, 4294901760
        %v3621 = vsub.f32 %v3076, %v3620
        %v3622 = vand.u32 %v3621, 4294901760
        %3623 = vmatpush1.msra.mxu0 %v3622
        %v3624 = vand.u32 %v3073, 4294901760
        %v3625 = vsub.f32 %v3073, %v3624
        %v3626 = vand.u32 %v3625, 4294901760
        %3627 = vmatprep.subr.mxu0 %v3626
        %v3628 = vand.u32 %v3072, 4294901760
        %v3629 = vsub.f32 %v3072, %v3628
        %v3630 = vand.u32 %v3629, 4294901760
        %3631 = vmatpush1.msra.mxu0 %v3630
        %v3632 = vand.u32 %v3069, 4294901760
        %v3633 = vsub.f32 %v3069, %v3632
        %v3634 = vand.u32 %v3633, 4294901760
        %3635 = vmatprep.subr.mxu0 %v3634
        %v3636 = vand.u32 %v3068, 4294901760
        %v3637 = vsub.f32 %v3068, %v3636
        %v3638 = vand.u32 %v3637, 4294901760
        %3639 = vmatpush1.msra.mxu0 %v3638
        %v3640 = vand.u32 %v3065, 4294901760
        %v3641 = vsub.f32 %v3065, %v3640
        %v3642 = vand.u32 %v3641, 4294901760
        %3643 = vmatprep.subr.mxu0 %v3642
        %v3644 = vand.u32 %v3064, 4294901760
        %v3645 = vsub.f32 %v3064, %v3644
        %v3646 = vand.u32 %v3645, 4294901760
        %3647 = vmatpush1.msra.mxu0 %v3646
        %3648 = vmatprep.subr.mxu0 0.0
        %3649 = vmatpush2.msra.mxu0 0.0
        %3650 = vmatprep.subr.mxu0 0.0
        %3651 = vmatpush2.msra.mxu0 0.0
        %3652 = vmatprep.subr.mxu0 0.0
        %3653 = vmatpush2.msra.mxu0 0.0
        %3654 = vmatprep.subr.mxu0 0.0
        %3655 = vmatpush2.msra.mxu0 0.0
        %3656 = vmatprep.subr.mxu0 0.0
        %3657 = vmatpush2.msra.mxu0 0.0
        %3658 = vmatprep.subr.mxu0 0.0
        %3659 = vmatpush2.msra.mxu0 0.0
        %3660 = vmatprep.subr.mxu0 0.0
        %3661 = vmatpush2.msra.mxu0 0.0
        %3662 = vmatprep.subr.mxu0 0.0
        %3663 = vmatpush2.msra.mxu0 0.0
        %3664 = vmatprep.subr.mxu0 0.0
        %3665 = vmatpush2.msra.mxu0 0.0
        %3666 = vmatprep.subr.mxu0 0.0
        %3667 = vmatpush2.msra.mxu0 0.0
        %3668 = vmatprep.subr.mxu0 0.0
        %3669 = vmatpush2.msra.mxu0 0.0
        %3670 = vmatprep.subr.mxu0 0.0
        %3671 = vmatpush2.msra.mxu0 0.0
        %3672 = vmatprep.subr.mxu0 0.0
        %3673 = vmatpush2.msra.mxu0 0.0
        %3674 = vmatprep.subr.mxu0 0.0
        %3675 = vmatpush2.msra.mxu0 0.0
        %3676 = vmatprep.subr.mxu0 0.0
        %3677 = vmatpush2.msra.mxu0 0.0
        %3678 = vmatprep.subr.mxu0 0.0
        %3679 = vmatpush2.msra.mxu0 0.0
        %3680 = vmatprep.mubr.f32.mxu0 0.0
        %v3681 = vand.u32 %v3109, 4294901760
        %3682 = vmatmul.mubr.f32.gmra.mxu0 %v3681
        %v3683 = vpop.f32.mrf.mxu0
        %v3684 = vadd.f32 %v3561, %v3683
        %v3685 = vpop.f32.mrf.mxu0
        %v3686 = vadd.f32 %v3563, %v3685
        %3687 = vmatprep.mubr.f32.mxu0 0.0
        %v3688 = vand.u32 %v3112, 4294901760
        %3689 = vmatmul.mubr.f32.gmra.mxu0 %v3688
        %v3690 = vpop.f32.mrf.mxu0
        %v3691 = vadd.f32 %v3570, %v3690
        %v3692 = vpop.f32.mrf.mxu0
        %v3693 = vadd.f32 %v3572, %v3692
        %3694 = vmatprep.mubr.f32.mxu0 0.0
        %v3695 = vand.u32 %v3115, 4294901760
        %3696 = vmatmul.mubr.f32.gmra.mxu0 %v3695
        %v3697 = vpop.f32.mrf.mxu0
        %v3698 = vadd.f32 %v3579, %v3697
        %v3699 = vpop.f32.mrf.mxu0
        %v3700 = vadd.f32 %v3581, %v3699
        %3701 = vmatprep.mubr.f32.mxu0 0.0
        %v3702 = vand.u32 %v3118, 4294901760
        %3703 = vmatmul.mubr.f32.gmra.mxu0 %v3702
        %v3704 = vpop.f32.mrf.mxu0
        %v3705 = vadd.f32 %v3588, %v3704
        %v3706 = vpop.f32.mrf.mxu0
        %v3707 = vadd.f32 %v3590, %v3706
        %3708 = vdwg.mxu0
        %3709 = vmatprep.subr.mxu0 0.0
        %3710 = vmatpush1.msra.mxu0 0.0
        %3711 = vmatprep.subr.mxu0 0.0
        %3712 = vmatpush1.msra.mxu0 0.0
        %3713 = vmatprep.subr.mxu0 0.0
        %3714 = vmatpush1.msra.mxu0 0.0
        %3715 = vmatprep.subr.mxu0 0.0
        %3716 = vmatpush1.msra.mxu0 0.0
        %3717 = vmatprep.subr.mxu0 0.0
        %3718 = vmatpush1.msra.mxu0 0.0
        %3719 = vmatprep.subr.mxu0 0.0
        %3720 = vmatpush1.msra.mxu0 0.0
        %3721 = vmatprep.subr.mxu0 0.0
        %3722 = vmatpush1.msra.mxu0 0.0
        %3723 = vmatprep.subr.mxu0 0.0
        %3724 = vmatpush1.msra.mxu0 0.0
        %3725 = vmatprep.subr.mxu0 0.0
        %3726 = vmatpush1.msra.mxu0 0.0
        %3727 = vmatprep.subr.mxu0 0.0
        %3728 = vmatpush1.msra.mxu0 0.0
        %3729 = vmatprep.subr.mxu0 0.0
        %3730 = vmatpush1.msra.mxu0 0.0
        %3731 = vmatprep.subr.mxu0 0.0
        %3732 = vmatpush1.msra.mxu0 0.0
        %v3733 = vand.u32 %v3077, 4294901760
        %3734 = vmatprep.subr.mxu0 %v3733
        %v3735 = vand.u32 %v3076, 4294901760
        %3736 = vmatpush1.msra.mxu0 %v3735
        %v3737 = vand.u32 %v3073, 4294901760
        %3738 = vmatprep.subr.mxu0 %v3737
        %v3739 = vand.u32 %v3072, 4294901760
        %3740 = vmatpush1.msra.mxu0 %v3739
        %v3741 = vand.u32 %v3069, 4294901760
        %3742 = vmatprep.subr.mxu0 %v3741
        %v3743 = vand.u32 %v3068, 4294901760
        %3744 = vmatpush1.msra.mxu0 %v3743
        %v3745 = vand.u32 %v3065, 4294901760
        %3746 = vmatprep.subr.mxu0 %v3745
        %v3747 = vand.u32 %v3064, 4294901760
        %3748 = vmatpush1.msra.mxu0 %v3747
        %3749 = vmatprep.subr.mxu0 0.0
        %3750 = vmatpush2.msra.mxu0 0.0
        %3751 = vmatprep.subr.mxu0 0.0
        %3752 = vmatpush2.msra.mxu0 0.0
        %3753 = vmatprep.subr.mxu0 0.0
        %3754 = vmatpush2.msra.mxu0 0.0
        %3755 = vmatprep.subr.mxu0 0.0
        %3756 = vmatpush2.msra.mxu0 0.0
        %3757 = vmatprep.subr.mxu0 0.0
        %3758 = vmatpush2.msra.mxu0 0.0
        %3759 = vmatprep.subr.mxu0 0.0
        %3760 = vmatpush2.msra.mxu0 0.0
        %3761 = vmatprep.subr.mxu0 0.0
        %3762 = vmatpush2.msra.mxu0 0.0
        %3763 = vmatprep.subr.mxu0 0.0
        %3764 = vmatpush2.msra.mxu0 0.0
        %3765 = vmatprep.subr.mxu0 0.0
        %3766 = vmatpush2.msra.mxu0 0.0
        %3767 = vmatprep.subr.mxu0 0.0
        %3768 = vmatpush2.msra.mxu0 0.0
        %3769 = vmatprep.subr.mxu0 0.0
        %3770 = vmatpush2.msra.mxu0 0.0
        %3771 = vmatprep.subr.mxu0 0.0
        %3772 = vmatpush2.msra.mxu0 0.0
        %3773 = vmatprep.subr.mxu0 0.0
        %3774 = vmatpush2.msra.mxu0 0.0
        %3775 = vmatprep.subr.mxu0 0.0
        %3776 = vmatpush2.msra.mxu0 0.0
        %3777 = vmatprep.subr.mxu0 0.0
        %3778 = vmatpush2.msra.mxu0 0.0
        %3779 = vmatprep.subr.mxu0 0.0
        %3780 = vmatpush2.msra.mxu0 0.0
        %3781 = vmatprep.mubr.f32.mxu0 0.0
        %v3782 = vand.u32 %v3109, 4294901760
        %3783 = vmatmul.mubr.f32.gmra.mxu0 %v3782
        %v3784 = vpop.f32.mrf.mxu0
        %v3785 = vadd.f32 %v3684, %v3784
        %v3786 = vpop.f32.mrf.mxu0
        %v3787 = vadd.f32 %v3686, %v3786
        %3788 = vmatprep.mubr.f32.mxu0 0.0
        %v3789 = vand.u32 %v3112, 4294901760
        %3790 = vmatmul.mubr.f32.gmra.mxu0 %v3789
        %v3791 = vpop.f32.mrf.mxu0
        %v3792 = vadd.f32 %v3691, %v3791
        %v3793 = vpop.f32.mrf.mxu0
        %v3794 = vadd.f32 %v3693, %v3793
        %3795 = vmatprep.mubr.f32.mxu0 0.0
        %v3796 = vand.u32 %v3115, 4294901760
        %3797 = vmatmul.mubr.f32.gmra.mxu0 %v3796
        %v3798 = vpop.f32.mrf.mxu0
        %v3799 = vadd.f32 %v3698, %v3798
        %v3800 = vpop.f32.mrf.mxu0
        %v3801 = vadd.f32 %v3700, %v3800
        %3802 = vmatprep.mubr.f32.mxu0 0.0
        %v3803 = vand.u32 %v3118, 4294901760
        %3804 = vmatmul.mubr.f32.gmra.mxu0 %v3803
        %v3805 = vpop.f32.mrf.mxu0
        %v3806 = vadd.f32 %v3705, %v3805
        %v3807 = vpop.f32.mrf.mxu0
        %v3808 = vadd.f32 %v3707, %v3807
        %3809 = vdwg.mxu0
        %3810 = vmatprep.subr.mxu0 0.0
        %3811 = vmatpush1.msra.mxu0 0.0
        %3812 = vmatprep.subr.mxu0 0.0
        %3813 = vmatpush1.msra.mxu0 0.0
        %3814 = vmatprep.subr.mxu0 0.0
        %3815 = vmatpush1.msra.mxu0 0.0
        %3816 = vmatprep.subr.mxu0 0.0
        %3817 = vmatpush1.msra.mxu0 0.0
        %3818 = vmatprep.subr.mxu0 0.0
        %3819 = vmatpush1.msra.mxu0 0.0
        %3820 = vmatprep.subr.mxu0 0.0
        %3821 = vmatpush1.msra.mxu0 0.0
        %3822 = vmatprep.subr.mxu0 0.0
        %3823 = vmatpush1.msra.mxu0 0.0
        %3824 = vmatprep.subr.mxu0 0.0
        %3825 = vmatpush1.msra.mxu0 0.0
        %3826 = vmatprep.subr.mxu0 0.0
        %3827 = vmatpush1.msra.mxu0 0.0
        %3828 = vmatprep.subr.mxu0 0.0
        %3829 = vmatpush1.msra.mxu0 0.0
        %3830 = vmatprep.subr.mxu0 0.0
        %3831 = vmatpush1.msra.mxu0 0.0
        %3832 = vmatprep.subr.mxu0 0.0
        %3833 = vmatpush1.msra.mxu0 0.0
        %v3834 = vand.u32 %v3079, 4294901760
        %3835 = vmatprep.subr.mxu0 %v3834
        %v3836 = vand.u32 %v3078, 4294901760
        %3837 = vmatpush1.msra.mxu0 %v3836
        %v3838 = vand.u32 %v3075, 4294901760
        %3839 = vmatprep.subr.mxu0 %v3838
        %v3840 = vand.u32 %v3074, 4294901760
        %3841 = vmatpush1.msra.mxu0 %v3840
        %v3842 = vand.u32 %v3071, 4294901760
        %3843 = vmatprep.subr.mxu0 %v3842
        %v3844 = vand.u32 %v3070, 4294901760
        %3845 = vmatpush1.msra.mxu0 %v3844
        %v3846 = vand.u32 %v3067, 4294901760
        %3847 = vmatprep.subr.mxu0 %v3846
        %v3848 = vand.u32 %v3066, 4294901760
        %3849 = vmatpush1.msra.mxu0 %v3848
        %3850 = vmatprep.subr.mxu0 0.0
        %3851 = vmatpush2.msra.mxu0 0.0
        %3852 = vmatprep.subr.mxu0 0.0
        %3853 = vmatpush2.msra.mxu0 0.0
        %3854 = vmatprep.subr.mxu0 0.0
        %3855 = vmatpush2.msra.mxu0 0.0
        %3856 = vmatprep.subr.mxu0 0.0
        %3857 = vmatpush2.msra.mxu0 0.0
        %3858 = vmatprep.subr.mxu0 0.0
        %3859 = vmatpush2.msra.mxu0 0.0
        %3860 = vmatprep.subr.mxu0 0.0
        %3861 = vmatpush2.msra.mxu0 0.0
        %3862 = vmatprep.subr.mxu0 0.0
        %3863 = vmatpush2.msra.mxu0 0.0
        %3864 = vmatprep.subr.mxu0 0.0
        %3865 = vmatpush2.msra.mxu0 0.0
        %3866 = vmatprep.subr.mxu0 0.0
        %3867 = vmatpush2.msra.mxu0 0.0
        %3868 = vmatprep.subr.mxu0 0.0
        %3869 = vmatpush2.msra.mxu0 0.0
        %3870 = vmatprep.subr.mxu0 0.0
        %3871 = vmatpush2.msra.mxu0 0.0
        %3872 = vmatprep.subr.mxu0 0.0
        %3873 = vmatpush2.msra.mxu0 0.0
        %3874 = vmatprep.subr.mxu0 0.0
        %3875 = vmatpush2.msra.mxu0 0.0
        %3876 = vmatprep.subr.mxu0 0.0
        %3877 = vmatpush2.msra.mxu0 0.0
        %3878 = vmatprep.subr.mxu0 0.0
        %3879 = vmatpush2.msra.mxu0 0.0
        %3880 = vmatprep.subr.mxu0 0.0
        %3881 = vmatpush2.msra.mxu0 0.0
        %3882 = vmatprep.mubr.f32.mxu0 0.0
        %v3883 = vand.u32 %v3109, 4294901760
        %v3884 = vsub.f32 %v3109, %v3883
        %v3885 = vand.u32 %v3884, 4294901760
        %v3886 = vsub.f32 %v3884, %v3885
        %v3887 = vand.u32 %v3886, 4294901760
        %3888 = vmatmul.mubr.f32.gmra.mxu0 %v3887
        %v3889 = vpop.f32.mrf.mxu0
        %v3890 = vadd.f32 %v3091, %v3889
        %v3891 = vpop.f32.mrf.mxu0
        %v3892 = vadd.f32 %v3091, %v3891
        %3893 = vmatprep.mubr.f32.mxu0 0.0
        %v3894 = vand.u32 %v3112, 4294901760
        %v3895 = vsub.f32 %v3112, %v3894
        %v3896 = vand.u32 %v3895, 4294901760
        %v3897 = vsub.f32 %v3895, %v3896
        %v3898 = vand.u32 %v3897, 4294901760
        %3899 = vmatmul.mubr.f32.gmra.mxu0 %v3898
        %v3900 = vpop.f32.mrf.mxu0
        %v3901 = vadd.f32 %v3096, %v3900
        %v3902 = vpop.f32.mrf.mxu0
        %v3903 = vadd.f32 %v3096, %v3902
        %3904 = vmatprep.mubr.f32.mxu0 0.0
        %v3905 = vand.u32 %v3115, 4294901760
        %v3906 = vsub.f32 %v3115, %v3905
        %v3907 = vand.u32 %v3906, 4294901760
        %v3908 = vsub.f32 %v3906, %v3907
        %v3909 = vand.u32 %v3908, 4294901760
        %3910 = vmatmul.mubr.f32.gmra.mxu0 %v3909
        %v3911 = vpop.f32.mrf.mxu0
        %v3912 = vadd.f32 %v3101, %v3911
        %v3913 = vpop.f32.mrf.mxu0
        %v3914 = vadd.f32 %v3101, %v3913
        %3915 = vmatprep.mubr.f32.mxu0 0.0
        %v3916 = vand.u32 %v3118, 4294901760
        %v3917 = vsub.f32 %v3118, %v3916
        %v3918 = vand.u32 %v3917, 4294901760
        %v3919 = vsub.f32 %v3917, %v3918
        %v3920 = vand.u32 %v3919, 4294901760
        %3921 = vmatmul.mubr.f32.gmra.mxu0 %v3920
        %v3922 = vpop.f32.mrf.mxu0
        %v3923 = vadd.f32 %v3106, %v3922
        %v3924 = vpop.f32.mrf.mxu0
        %v3925 = vadd.f32 %v3106, %v3924
        %3926 = vdwg.mxu0
        %3927 = vmatprep.subr.mxu0 0.0
        %3928 = vmatpush1.msra.mxu0 0.0
        %3929 = vmatprep.subr.mxu0 0.0
        %3930 = vmatpush1.msra.mxu0 0.0
        %3931 = vmatprep.subr.mxu0 0.0
        %3932 = vmatpush1.msra.mxu0 0.0
        %3933 = vmatprep.subr.mxu0 0.0
        %3934 = vmatpush1.msra.mxu0 0.0
        %3935 = vmatprep.subr.mxu0 0.0
        %3936 = vmatpush1.msra.mxu0 0.0
        %3937 = vmatprep.subr.mxu0 0.0
        %3938 = vmatpush1.msra.mxu0 0.0
        %3939 = vmatprep.subr.mxu0 0.0
        %3940 = vmatpush1.msra.mxu0 0.0
        %3941 = vmatprep.subr.mxu0 0.0
        %3942 = vmatpush1.msra.mxu0 0.0
        %3943 = vmatprep.subr.mxu0 0.0
        %3944 = vmatpush1.msra.mxu0 0.0
        %3945 = vmatprep.subr.mxu0 0.0
        %3946 = vmatpush1.msra.mxu0 0.0
        %3947 = vmatprep.subr.mxu0 0.0
        %3948 = vmatpush1.msra.mxu0 0.0
        %3949 = vmatprep.subr.mxu0 0.0
        %3950 = vmatpush1.msra.mxu0 0.0
        %v3951 = vand.u32 %v3079, 4294901760
        %v3952 = vsub.f32 %v3079, %v3951
        %v3953 = vand.u32 %v3952, 4294901760
        %v3954 = vsub.f32 %v3952, %v3953
        %v3955 = vand.u32 %v3954, 4294901760
        %3956 = vmatprep.subr.mxu0 %v3955
        %v3957 = vand.u32 %v3078, 4294901760
        %v3958 = vsub.f32 %v3078, %v3957
        %v3959 = vand.u32 %v3958, 4294901760
        %v3960 = vsub.f32 %v3958, %v3959
        %v3961 = vand.u32 %v3960, 4294901760
        %3962 = vmatpush1.msra.mxu0 %v3961
        %v3963 = vand.u32 %v3075, 4294901760
        %v3964 = vsub.f32 %v3075, %v3963
        %v3965 = vand.u32 %v3964, 4294901760
        %v3966 = vsub.f32 %v3964, %v3965
        %v3967 = vand.u32 %v3966, 4294901760
        %3968 = vmatprep.subr.mxu0 %v3967
        %v3969 = vand.u32 %v3074, 4294901760
        %v3970 = vsub.f32 %v3074, %v3969
        %v3971 = vand.u32 %v3970, 4294901760
        %v3972 = vsub.f32 %v3970, %v3971
        %v3973 = vand.u32 %v3972, 4294901760
        %3974 = vmatpush1.msra.mxu0 %v3973
        %v3975 = vand.u32 %v3071, 4294901760
        %v3976 = vsub.f32 %v3071, %v3975
        %v3977 = vand.u32 %v3976, 4294901760
        %v3978 = vsub.f32 %v3976, %v3977
        %v3979 = vand.u32 %v3978, 4294901760
        %3980 = vmatprep.subr.mxu0 %v3979
        %v3981 = vand.u32 %v3070, 4294901760
        %v3982 = vsub.f32 %v3070, %v3981
        %v3983 = vand.u32 %v3982, 4294901760
        %v3984 = vsub.f32 %v3982, %v3983
        %v3985 = vand.u32 %v3984, 4294901760
        %3986 = vmatpush1.msra.mxu0 %v3985
        %v3987 = vand.u32 %v3067, 4294901760
        %v3988 = vsub.f32 %v3067, %v3987
        %v3989 = vand.u32 %v3988, 4294901760
        %v3990 = vsub.f32 %v3988, %v3989
        %v3991 = vand.u32 %v3990, 4294901760
        %3992 = vmatprep.subr.mxu0 %v3991
        %v3993 = vand.u32 %v3066, 4294901760
        %v3994 = vsub.f32 %v3066, %v3993
        %v3995 = vand.u32 %v3994, 4294901760
        %v3996 = vsub.f32 %v3994, %v3995
        %v3997 = vand.u32 %v3996, 4294901760
        %3998 = vmatpush1.msra.mxu0 %v3997
        %3999 = vmatprep.subr.mxu0 0.0
        %4000 = vmatpush2.msra.mxu0 0.0
        %4001 = vmatprep.subr.mxu0 0.0
        %4002 = vmatpush2.msra.mxu0 0.0
        %4003 = vmatprep.subr.mxu0 0.0
        %4004 = vmatpush2.msra.mxu0 0.0
        %4005 = vmatprep.subr.mxu0 0.0
        %4006 = vmatpush2.msra.mxu0 0.0
        %4007 = vmatprep.subr.mxu0 0.0
        %4008 = vmatpush2.msra.mxu0 0.0
        %4009 = vmatprep.subr.mxu0 0.0
        %4010 = vmatpush2.msra.mxu0 0.0
        %4011 = vmatprep.subr.mxu0 0.0
        %4012 = vmatpush2.msra.mxu0 0.0
        %4013 = vmatprep.subr.mxu0 0.0
        %4014 = vmatpush2.msra.mxu0 0.0
        %4015 = vmatprep.subr.mxu0 0.0
        %4016 = vmatpush2.msra.mxu0 0.0
        %4017 = vmatprep.subr.mxu0 0.0
        %4018 = vmatpush2.msra.mxu0 0.0
        %4019 = vmatprep.subr.mxu0 0.0
        %4020 = vmatpush2.msra.mxu0 0.0
        %4021 = vmatprep.subr.mxu0 0.0
        %4022 = vmatpush2.msra.mxu0 0.0
        %4023 = vmatprep.subr.mxu0 0.0
        %4024 = vmatpush2.msra.mxu0 0.0
        %4025 = vmatprep.subr.mxu0 0.0
        %4026 = vmatpush2.msra.mxu0 0.0
        %4027 = vmatprep.subr.mxu0 0.0
        %4028 = vmatpush2.msra.mxu0 0.0
        %4029 = vmatprep.subr.mxu0 0.0
        %4030 = vmatpush2.msra.mxu0 0.0
        %4031 = vmatprep.mubr.f32.mxu0 0.0
        %v4032 = vand.u32 %v3109, 4294901760
        %4033 = vmatmul.mubr.f32.gmra.mxu0 %v4032
        %v4034 = vpop.f32.mrf.mxu0
        %v4035 = vadd.f32 %v3890, %v4034
        %v4036 = vpop.f32.mrf.mxu0
        %v4037 = vadd.f32 %v3892, %v4036
        %4038 = vmatprep.mubr.f32.mxu0 0.0
        %v4039 = vand.u32 %v3112, 4294901760
        %4040 = vmatmul.mubr.f32.gmra.mxu0 %v4039
        %v4041 = vpop.f32.mrf.mxu0
        %v4042 = vadd.f32 %v3901, %v4041
        %v4043 = vpop.f32.mrf.mxu0
        %v4044 = vadd.f32 %v3903, %v4043
        %4045 = vmatprep.mubr.f32.mxu0 0.0
        %v4046 = vand.u32 %v3115, 4294901760
        %4047 = vmatmul.mubr.f32.gmra.mxu0 %v4046
        %v4048 = vpop.f32.mrf.mxu0
        %v4049 = vadd.f32 %v3912, %v4048
        %v4050 = vpop.f32.mrf.mxu0
        %v4051 = vadd.f32 %v3914, %v4050
        %4052 = vmatprep.mubr.f32.mxu0 0.0
        %v4053 = vand.u32 %v3118, 4294901760
        %4054 = vmatmul.mubr.f32.gmra.mxu0 %v4053
        %v4055 = vpop.f32.mrf.mxu0
        %v4056 = vadd.f32 %v3923, %v4055
        %v4057 = vpop.f32.mrf.mxu0
        %v4058 = vadd.f32 %v3925, %v4057
        %4059 = vdwg.mxu0
        %4060 = vmatprep.subr.mxu0 0.0
        %4061 = vmatpush1.msra.mxu0 0.0
        %4062 = vmatprep.subr.mxu0 0.0
        %4063 = vmatpush1.msra.mxu0 0.0
        %4064 = vmatprep.subr.mxu0 0.0
        %4065 = vmatpush1.msra.mxu0 0.0
        %4066 = vmatprep.subr.mxu0 0.0
        %4067 = vmatpush1.msra.mxu0 0.0
        %4068 = vmatprep.subr.mxu0 0.0
        %4069 = vmatpush1.msra.mxu0 0.0
        %4070 = vmatprep.subr.mxu0 0.0
        %4071 = vmatpush1.msra.mxu0 0.0
        %4072 = vmatprep.subr.mxu0 0.0
        %4073 = vmatpush1.msra.mxu0 0.0
        %4074 = vmatprep.subr.mxu0 0.0
        %4075 = vmatpush1.msra.mxu0 0.0
        %4076 = vmatprep.subr.mxu0 0.0
        %4077 = vmatpush1.msra.mxu0 0.0
        %4078 = vmatprep.subr.mxu0 0.0
        %4079 = vmatpush1.msra.mxu0 0.0
        %4080 = vmatprep.subr.mxu0 0.0
        %4081 = vmatpush1.msra.mxu0 0.0
        %4082 = vmatprep.subr.mxu0 0.0
        %4083 = vmatpush1.msra.mxu0 0.0
        %v4084 = vand.u32 %v3079, 4294901760
        %v4085 = vsub.f32 %v3079, %v4084
        %4086 = vmatprep.subr.mxu0 %v4085
        %v4087 = vand.u32 %v3078, 4294901760
        %v4088 = vsub.f32 %v3078, %v4087
        %4089 = vmatpush1.msra.mxu0 %v4088
        %v4090 = vand.u32 %v3075, 4294901760
        %v4091 = vsub.f32 %v3075, %v4090
        %4092 = vmatprep.subr.mxu0 %v4091
        %v4093 = vand.u32 %v3074, 4294901760
        %v4094 = vsub.f32 %v3074, %v4093
        %4095 = vmatpush1.msra.mxu0 %v4094
        %v4096 = vand.u32 %v3071, 4294901760
        %v4097 = vsub.f32 %v3071, %v4096
        %4098 = vmatprep.subr.mxu0 %v4097
        %v4099 = vand.u32 %v3070, 4294901760
        %v4100 = vsub.f32 %v3070, %v4099
        %4101 = vmatpush1.msra.mxu0 %v4100
        %v4102 = vand.u32 %v3067, 4294901760
        %v4103 = vsub.f32 %v3067, %v4102
        %4104 = vmatprep.subr.mxu0 %v4103
        %v4105 = vand.u32 %v3066, 4294901760
        %v4106 = vsub.f32 %v3066, %v4105
        %4107 = vmatpush1.msra.mxu0 %v4106
        %4108 = vmatprep.subr.mxu0 0.0
        %4109 = vmatpush2.msra.mxu0 0.0
        %4110 = vmatprep.subr.mxu0 0.0
        %4111 = vmatpush2.msra.mxu0 0.0
        %4112 = vmatprep.subr.mxu0 0.0
        %4113 = vmatpush2.msra.mxu0 0.0
        %4114 = vmatprep.subr.mxu0 0.0
        %4115 = vmatpush2.msra.mxu0 0.0
        %4116 = vmatprep.subr.mxu0 0.0
        %4117 = vmatpush2.msra.mxu0 0.0
        %4118 = vmatprep.subr.mxu0 0.0
        %4119 = vmatpush2.msra.mxu0 0.0
        %4120 = vmatprep.subr.mxu0 0.0
        %4121 = vmatpush2.msra.mxu0 0.0
        %4122 = vmatprep.subr.mxu0 0.0
        %4123 = vmatpush2.msra.mxu0 0.0
        %4124 = vmatprep.subr.mxu0 0.0
        %4125 = vmatpush2.msra.mxu0 0.0
        %4126 = vmatprep.subr.mxu0 0.0
        %4127 = vmatpush2.msra.mxu0 0.0
        %4128 = vmatprep.subr.mxu0 0.0
        %4129 = vmatpush2.msra.mxu0 0.0
        %4130 = vmatprep.subr.mxu0 0.0
        %4131 = vmatpush2.msra.mxu0 0.0
        %4132 = vmatprep.subr.mxu0 0.0
        %4133 = vmatpush2.msra.mxu0 0.0
        %4134 = vmatprep.subr.mxu0 0.0
        %4135 = vmatpush2.msra.mxu0 0.0
        %4136 = vmatprep.subr.mxu0 0.0
        %4137 = vmatpush2.msra.mxu0 0.0
        %4138 = vmatprep.subr.mxu0 0.0
        %4139 = vmatpush2.msra.mxu0 0.0
        %4140 = vmatprep.mubr.f32.mxu0 0.0
        %v4141 = vand.u32 %v3109, 4294901760
        %v4142 = vsub.f32 %v3109, %v4141
        %4143 = vmatmul.mubr.f32.gmra.mxu0 %v4142
        %v4144 = vpop.f32.mrf.mxu0
        %v4145 = vadd.f32 %v4035, %v4144
        %v4146 = vpop.f32.mrf.mxu0
        %v4147 = vadd.f32 %v4037, %v4146
        %4148 = vmatprep.mubr.f32.mxu0 0.0
        %v4149 = vand.u32 %v3112, 4294901760
        %v4150 = vsub.f32 %v3112, %v4149
        %4151 = vmatmul.mubr.f32.gmra.mxu0 %v4150
        %v4152 = vpop.f32.mrf.mxu0
        %v4153 = vadd.f32 %v4042, %v4152
        %v4154 = vpop.f32.mrf.mxu0
        %v4155 = vadd.f32 %v4044, %v4154
        %4156 = vmatprep.mubr.f32.mxu0 0.0
        %v4157 = vand.u32 %v3115, 4294901760
        %v4158 = vsub.f32 %v3115, %v4157
        %4159 = vmatmul.mubr.f32.gmra.mxu0 %v4158
        %v4160 = vpop.f32.mrf.mxu0
        %v4161 = vadd.f32 %v4049, %v4160
        %v4162 = vpop.f32.mrf.mxu0
        %v4163 = vadd.f32 %v4051, %v4162
        %4164 = vmatprep.mubr.f32.mxu0 0.0
        %v4165 = vand.u32 %v3118, 4294901760
        %v4166 = vsub.f32 %v3118, %v4165
        %4167 = vmatmul.mubr.f32.gmra.mxu0 %v4166
        %v4168 = vpop.f32.mrf.mxu0
        %v4169 = vadd.f32 %v4056, %v4168
        %v4170 = vpop.f32.mrf.mxu0
        %v4171 = vadd.f32 %v4058, %v4170
        %4172 = vdwg.mxu0
        %4173 = vmatprep.subr.mxu0 0.0
        %4174 = vmatpush1.msra.mxu0 0.0
        %4175 = vmatprep.subr.mxu0 0.0
        %4176 = vmatpush1.msra.mxu0 0.0
        %4177 = vmatprep.subr.mxu0 0.0
        %4178 = vmatpush1.msra.mxu0 0.0
        %4179 = vmatprep.subr.mxu0 0.0
        %4180 = vmatpush1.msra.mxu0 0.0
        %4181 = vmatprep.subr.mxu0 0.0
        %4182 = vmatpush1.msra.mxu0 0.0
        %4183 = vmatprep.subr.mxu0 0.0
        %4184 = vmatpush1.msra.mxu0 0.0
        %4185 = vmatprep.subr.mxu0 0.0
        %4186 = vmatpush1.msra.mxu0 0.0
        %4187 = vmatprep.subr.mxu0 0.0
        %4188 = vmatpush1.msra.mxu0 0.0
        %4189 = vmatprep.subr.mxu0 0.0
        %4190 = vmatpush1.msra.mxu0 0.0
        %4191 = vmatprep.subr.mxu0 0.0
        %4192 = vmatpush1.msra.mxu0 0.0
        %4193 = vmatprep.subr.mxu0 0.0
        %4194 = vmatpush1.msra.mxu0 0.0
        %4195 = vmatprep.subr.mxu0 0.0
        %4196 = vmatpush1.msra.mxu0 0.0
        %v4197 = vand.u32 %v3079, 4294901760
        %4198 = vmatprep.subr.mxu0 %v4197
        %v4199 = vand.u32 %v3078, 4294901760
        %4200 = vmatpush1.msra.mxu0 %v4199
        %v4201 = vand.u32 %v3075, 4294901760
        %4202 = vmatprep.subr.mxu0 %v4201
        %v4203 = vand.u32 %v3074, 4294901760
        %4204 = vmatpush1.msra.mxu0 %v4203
        %v4205 = vand.u32 %v3071, 4294901760
        %4206 = vmatprep.subr.mxu0 %v4205
        %v4207 = vand.u32 %v3070, 4294901760
        %4208 = vmatpush1.msra.mxu0 %v4207
        %v4209 = vand.u32 %v3067, 4294901760
        %4210 = vmatprep.subr.mxu0 %v4209
        %v4211 = vand.u32 %v3066, 4294901760
        %4212 = vmatpush1.msra.mxu0 %v4211
        %4213 = vmatprep.subr.mxu0 0.0
        %4214 = vmatpush2.msra.mxu0 0.0
        %4215 = vmatprep.subr.mxu0 0.0
        %4216 = vmatpush2.msra.mxu0 0.0
        %4217 = vmatprep.subr.mxu0 0.0
        %4218 = vmatpush2.msra.mxu0 0.0
        %4219 = vmatprep.subr.mxu0 0.0
        %4220 = vmatpush2.msra.mxu0 0.0
        %4221 = vmatprep.subr.mxu0 0.0
        %4222 = vmatpush2.msra.mxu0 0.0
        %4223 = vmatprep.subr.mxu0 0.0
        %4224 = vmatpush2.msra.mxu0 0.0
        %4225 = vmatprep.subr.mxu0 0.0
        %4226 = vmatpush2.msra.mxu0 0.0
        %4227 = vmatprep.subr.mxu0 0.0
        %4228 = vmatpush2.msra.mxu0 0.0
        %4229 = vmatprep.subr.mxu0 0.0
        %4230 = vmatpush2.msra.mxu0 0.0
        %4231 = vmatprep.subr.mxu0 0.0
        %4232 = vmatpush2.msra.mxu0 0.0
        %4233 = vmatprep.subr.mxu0 0.0
        %4234 = vmatpush2.msra.mxu0 0.0
        %4235 = vmatprep.subr.mxu0 0.0
        %4236 = vmatpush2.msra.mxu0 0.0
        %4237 = vmatprep.subr.mxu0 0.0
        %4238 = vmatpush2.msra.mxu0 0.0
        %4239 = vmatprep.subr.mxu0 0.0
        %4240 = vmatpush2.msra.mxu0 0.0
        %4241 = vmatprep.subr.mxu0 0.0
        %4242 = vmatpush2.msra.mxu0 0.0
        %4243 = vmatprep.subr.mxu0 0.0
        %4244 = vmatpush2.msra.mxu0 0.0
        %4245 = vmatprep.mubr.f32.mxu0 0.0
        %v4246 = vand.u32 %v3109, 4294901760
        %v4247 = vsub.f32 %v3109, %v4246
        %v4248 = vand.u32 %v4247, 4294901760
        %4249 = vmatmul.mubr.f32.gmra.mxu0 %v4248
        %v4250 = vpop.f32.mrf.mxu0
        %v4251 = vadd.f32 %v4145, %v4250
        %v4252 = vpop.f32.mrf.mxu0
        %v4253 = vadd.f32 %v4147, %v4252
        %4254 = vmatprep.mubr.f32.mxu0 0.0
        %v4255 = vand.u32 %v3112, 4294901760
        %v4256 = vsub.f32 %v3112, %v4255
        %v4257 = vand.u32 %v4256, 4294901760
        %4258 = vmatmul.mubr.f32.gmra.mxu0 %v4257
        %v4259 = vpop.f32.mrf.mxu0
        %v4260 = vadd.f32 %v4153, %v4259
        %v4261 = vpop.f32.mrf.mxu0
        %v4262 = vadd.f32 %v4155, %v4261
        %4263 = vmatprep.mubr.f32.mxu0 0.0
        %v4264 = vand.u32 %v3115, 4294901760
        %v4265 = vsub.f32 %v3115, %v4264
        %v4266 = vand.u32 %v4265, 4294901760
        %4267 = vmatmul.mubr.f32.gmra.mxu0 %v4266
        %v4268 = vpop.f32.mrf.mxu0
        %v4269 = vadd.f32 %v4161, %v4268
        %v4270 = vpop.f32.mrf.mxu0
        %v4271 = vadd.f32 %v4163, %v4270
        %4272 = vmatprep.mubr.f32.mxu0 0.0
        %v4273 = vand.u32 %v3118, 4294901760
        %v4274 = vsub.f32 %v3118, %v4273
        %v4275 = vand.u32 %v4274, 4294901760
        %4276 = vmatmul.mubr.f32.gmra.mxu0 %v4275
        %v4277 = vpop.f32.mrf.mxu0
        %v4278 = vadd.f32 %v4169, %v4277
        %v4279 = vpop.f32.mrf.mxu0
        %v4280 = vadd.f32 %v4171, %v4279
        %4281 = vdwg.mxu0
        %4282 = vmatprep.subr.mxu0 0.0
        %4283 = vmatpush1.msra.mxu0 0.0
        %4284 = vmatprep.subr.mxu0 0.0
        %4285 = vmatpush1.msra.mxu0 0.0
        %4286 = vmatprep.subr.mxu0 0.0
        %4287 = vmatpush1.msra.mxu0 0.0
        %4288 = vmatprep.subr.mxu0 0.0
        %4289 = vmatpush1.msra.mxu0 0.0
        %4290 = vmatprep.subr.mxu0 0.0
        %4291 = vmatpush1.msra.mxu0 0.0
        %4292 = vmatprep.subr.mxu0 0.0
        %4293 = vmatpush1.msra.mxu0 0.0
        %4294 = vmatprep.subr.mxu0 0.0
        %4295 = vmatpush1.msra.mxu0 0.0
        %4296 = vmatprep.subr.mxu0 0.0
        %4297 = vmatpush1.msra.mxu0 0.0
        %4298 = vmatprep.subr.mxu0 0.0
        %4299 = vmatpush1.msra.mxu0 0.0
        %4300 = vmatprep.subr.mxu0 0.0
        %4301 = vmatpush1.msra.mxu0 0.0
        %4302 = vmatprep.subr.mxu0 0.0
        %4303 = vmatpush1.msra.mxu0 0.0
        %4304 = vmatprep.subr.mxu0 0.0
        %4305 = vmatpush1.msra.mxu0 0.0
        %v4306 = vand.u32 %v3079, 4294901760
        %v4307 = vsub.f32 %v3079, %v4306
        %v4308 = vand.u32 %v4307, 4294901760
        %4309 = vmatprep.subr.mxu0 %v4308
        %v4310 = vand.u32 %v3078, 4294901760
        %v4311 = vsub.f32 %v3078, %v4310
        %v4312 = vand.u32 %v4311, 4294901760
        %4313 = vmatpush1.msra.mxu0 %v4312
        %v4314 = vand.u32 %v3075, 4294901760
        %v4315 = vsub.f32 %v3075, %v4314
        %v4316 = vand.u32 %v4315, 4294901760
        %4317 = vmatprep.subr.mxu0 %v4316
        %v4318 = vand.u32 %v3074, 4294901760
        %v4319 = vsub.f32 %v3074, %v4318
        %v4320 = vand.u32 %v4319, 4294901760
        %4321 = vmatpush1.msra.mxu0 %v4320
        %v4322 = vand.u32 %v3071, 4294901760
        %v4323 = vsub.f32 %v3071, %v4322
        %v4324 = vand.u32 %v4323, 4294901760
        %4325 = vmatprep.subr.mxu0 %v4324
        %v4326 = vand.u32 %v3070, 4294901760
        %v4327 = vsub.f32 %v3070, %v4326
        %v4328 = vand.u32 %v4327, 4294901760
        %4329 = vmatpush1.msra.mxu0 %v4328
        %v4330 = vand.u32 %v3067, 4294901760
        %v4331 = vsub.f32 %v3067, %v4330
        %v4332 = vand.u32 %v4331, 4294901760
        %4333 = vmatprep.subr.mxu0 %v4332
        %v4334 = vand.u32 %v3066, 4294901760
        %v4335 = vsub.f32 %v3066, %v4334
        %v4336 = vand.u32 %v4335, 4294901760
        %4337 = vmatpush1.msra.mxu0 %v4336
        %4338 = vmatprep.subr.mxu0 0.0
        %4339 = vmatpush2.msra.mxu0 0.0
        %4340 = vmatprep.subr.mxu0 0.0
        %4341 = vmatpush2.msra.mxu0 0.0
        %4342 = vmatprep.subr.mxu0 0.0
        %4343 = vmatpush2.msra.mxu0 0.0
        %4344 = vmatprep.subr.mxu0 0.0
        %4345 = vmatpush2.msra.mxu0 0.0
        %4346 = vmatprep.subr.mxu0 0.0
        %4347 = vmatpush2.msra.mxu0 0.0
        %4348 = vmatprep.subr.mxu0 0.0
        %4349 = vmatpush2.msra.mxu0 0.0
        %4350 = vmatprep.subr.mxu0 0.0
        %4351 = vmatpush2.msra.mxu0 0.0
        %4352 = vmatprep.subr.mxu0 0.0
        %4353 = vmatpush2.msra.mxu0 0.0
        %4354 = vmatprep.subr.mxu0 0.0
        %4355 = vmatpush2.msra.mxu0 0.0
        %4356 = vmatprep.subr.mxu0 0.0
        %4357 = vmatpush2.msra.mxu0 0.0
        %4358 = vmatprep.subr.mxu0 0.0
        %4359 = vmatpush2.msra.mxu0 0.0
        %4360 = vmatprep.subr.mxu0 0.0
        %4361 = vmatpush2.msra.mxu0 0.0
        %4362 = vmatprep.subr.mxu0 0.0
        %4363 = vmatpush2.msra.mxu0 0.0
        %4364 = vmatprep.subr.mxu0 0.0
        %4365 = vmatpush2.msra.mxu0 0.0
        %4366 = vmatprep.subr.mxu0 0.0
        %4367 = vmatpush2.msra.mxu0 0.0
        %4368 = vmatprep.subr.mxu0 0.0
        %4369 = vmatpush2.msra.mxu0 0.0
        %4370 = vmatprep.mubr.f32.mxu0 0.0
        %v4371 = vand.u32 %v3109, 4294901760
        %4372 = vmatmul.mubr.f32.gmra.mxu0 %v4371
        %v4373 = vpop.f32.mrf.mxu0
        %v4374 = vadd.f32 %v4251, %v4373
        %v4375 = vpop.f32.mrf.mxu0
        %v4376 = vadd.f32 %v4253, %v4375
        %4377 = vmatprep.mubr.f32.mxu0 0.0
        %v4378 = vand.u32 %v3112, 4294901760
        %4379 = vmatmul.mubr.f32.gmra.mxu0 %v4378
        %v4380 = vpop.f32.mrf.mxu0
        %v4381 = vadd.f32 %v4260, %v4380
        %v4382 = vpop.f32.mrf.mxu0
        %v4383 = vadd.f32 %v4262, %v4382
        %4384 = vmatprep.mubr.f32.mxu0 0.0
        %v4385 = vand.u32 %v3115, 4294901760
        %4386 = vmatmul.mubr.f32.gmra.mxu0 %v4385
        %v4387 = vpop.f32.mrf.mxu0
        %v4388 = vadd.f32 %v4269, %v4387
        %v4389 = vpop.f32.mrf.mxu0
        %v4390 = vadd.f32 %v4271, %v4389
        %4391 = vmatprep.mubr.f32.mxu0 0.0
        %v4392 = vand.u32 %v3118, 4294901760
        %4393 = vmatmul.mubr.f32.gmra.mxu0 %v4392
        %v4394 = vpop.f32.mrf.mxu0
        %v4395 = vadd.f32 %v4278, %v4394
        %v4396 = vpop.f32.mrf.mxu0
        %v4397 = vadd.f32 %v4280, %v4396
        %4398 = vdwg.mxu0
        %4399 = vmatprep.subr.mxu0 0.0
        %4400 = vmatpush1.msra.mxu0 0.0
        %4401 = vmatprep.subr.mxu0 0.0
        %4402 = vmatpush1.msra.mxu0 0.0
        %4403 = vmatprep.subr.mxu0 0.0
        %4404 = vmatpush1.msra.mxu0 0.0
        %4405 = vmatprep.subr.mxu0 0.0
        %4406 = vmatpush1.msra.mxu0 0.0
        %4407 = vmatprep.subr.mxu0 0.0
        %4408 = vmatpush1.msra.mxu0 0.0
        %4409 = vmatprep.subr.mxu0 0.0
        %4410 = vmatpush1.msra.mxu0 0.0
        %4411 = vmatprep.subr.mxu0 0.0
        %4412 = vmatpush1.msra.mxu0 0.0
        %4413 = vmatprep.subr.mxu0 0.0
        %4414 = vmatpush1.msra.mxu0 0.0
        %4415 = vmatprep.subr.mxu0 0.0
        %4416 = vmatpush1.msra.mxu0 0.0
        %4417 = vmatprep.subr.mxu0 0.0
        %4418 = vmatpush1.msra.mxu0 0.0
        %4419 = vmatprep.subr.mxu0 0.0
        %4420 = vmatpush1.msra.mxu0 0.0
        %4421 = vmatprep.subr.mxu0 0.0
        %4422 = vmatpush1.msra.mxu0 0.0
        %v4423 = vand.u32 %v3079, 4294901760
        %4424 = vmatprep.subr.mxu0 %v4423
        %v4425 = vand.u32 %v3078, 4294901760
        %4426 = vmatpush1.msra.mxu0 %v4425
        %v4427 = vand.u32 %v3075, 4294901760
        %4428 = vmatprep.subr.mxu0 %v4427
        %v4429 = vand.u32 %v3074, 4294901760
        %4430 = vmatpush1.msra.mxu0 %v4429
        %v4431 = vand.u32 %v3071, 4294901760
        %4432 = vmatprep.subr.mxu0 %v4431
        %v4433 = vand.u32 %v3070, 4294901760
        %4434 = vmatpush1.msra.mxu0 %v4433
        %v4435 = vand.u32 %v3067, 4294901760
        %4436 = vmatprep.subr.mxu0 %v4435
        %v4437 = vand.u32 %v3066, 4294901760
        %4438 = vmatpush1.msra.mxu0 %v4437
        %4439 = vmatprep.subr.mxu0 0.0
        %4440 = vmatpush2.msra.mxu0 0.0
        %4441 = vmatprep.subr.mxu0 0.0
        %4442 = vmatpush2.msra.mxu0 0.0
        %4443 = vmatprep.subr.mxu0 0.0
        %4444 = vmatpush2.msra.mxu0 0.0
        %4445 = vmatprep.subr.mxu0 0.0
        %4446 = vmatpush2.msra.mxu0 0.0
        %4447 = vmatprep.subr.mxu0 0.0
        %4448 = vmatpush2.msra.mxu0 0.0
        %4449 = vmatprep.subr.mxu0 0.0
        %4450 = vmatpush2.msra.mxu0 0.0
        %4451 = vmatprep.subr.mxu0 0.0
        %4452 = vmatpush2.msra.mxu0 0.0
        %4453 = vmatprep.subr.mxu0 0.0
        %4454 = vmatpush2.msra.mxu0 0.0
        %4455 = vmatprep.subr.mxu0 0.0
        %4456 = vmatpush2.msra.mxu0 0.0
        %4457 = vmatprep.subr.mxu0 0.0
        %4458 = vmatpush2.msra.mxu0 0.0
        %4459 = vmatprep.subr.mxu0 0.0
        %4460 = vmatpush2.msra.mxu0 0.0
        %4461 = vmatprep.subr.mxu0 0.0
        %4462 = vmatpush2.msra.mxu0 0.0
        %4463 = vmatprep.subr.mxu0 0.0
        %4464 = vmatpush2.msra.mxu0 0.0
        %4465 = vmatprep.subr.mxu0 0.0
        %4466 = vmatpush2.msra.mxu0 0.0
        %4467 = vmatprep.subr.mxu0 0.0
        %4468 = vmatpush2.msra.mxu0 0.0
        %4469 = vmatprep.subr.mxu0 0.0
        %4470 = vmatpush2.msra.mxu0 0.0
        %4471 = vmatprep.mubr.f32.mxu0 0.0
        %v4472 = vand.u32 %v3109, 4294901760
        %4473 = vmatmul.mubr.f32.gmra.mxu0 %v4472
        %v4474 = vpop.f32.mrf.mxu0
        %v4475 = vadd.f32 %v4374, %v4474
        %v4476 = vpop.f32.mrf.mxu0
        %v4477 = vadd.f32 %v4376, %v4476
        %4478 = vmatprep.mubr.f32.mxu0 0.0
        %v4479 = vand.u32 %v3112, 4294901760
        %4480 = vmatmul.mubr.f32.gmra.mxu0 %v4479
        %v4481 = vpop.f32.mrf.mxu0
        %v4482 = vadd.f32 %v4381, %v4481
        %v4483 = vpop.f32.mrf.mxu0
        %v4484 = vadd.f32 %v4383, %v4483
        %4485 = vmatprep.mubr.f32.mxu0 0.0
        %v4486 = vand.u32 %v3115, 4294901760
        %4487 = vmatmul.mubr.f32.gmra.mxu0 %v4486
        %v4488 = vpop.f32.mrf.mxu0
        %v4489 = vadd.f32 %v4388, %v4488
        %v4490 = vpop.f32.mrf.mxu0
        %v4491 = vadd.f32 %v4390, %v4490
        %4492 = vmatprep.mubr.f32.mxu0 0.0
        %v4493 = vand.u32 %v3118, 4294901760
        %4494 = vmatmul.mubr.f32.gmra.mxu0 %v4493
        %v4495 = vpop.f32.mrf.mxu0
        %v4496 = vadd.f32 %v4395, %v4495
        %v4497 = vpop.f32.mrf.mxu0
        %v4498 = vadd.f32 %v4397, %v4497
        %4499 = vdwg.mxu0
        %v4500 = vmax.f32 %v3785, 0.0
        %v4501 = vmax.f32 %v3787, 0.0
        %v4502 = vmax.f32 %v4475, 0.0
        %v4503 = vmax.f32 %v4477, 0.0
        %v4504 = vmax.f32 %v3792, 0.0
        %v4505 = vmax.f32 %v3794, 0.0
        %v4506 = vmax.f32 %v4482, 0.0
        %v4507 = vmax.f32 %v4484, 0.0
        %v4508 = vmax.f32 %v3799, 0.0
        %v4509 = vmax.f32 %v3801, 0.0
        %v4510 = vmax.f32 %v4489, 0.0
        %v4511 = vmax.f32 %v4491, 0.0
        %v4512 = vmax.f32 %v3806, 0.0
        %v4513 = vmax.f32 %v3808, 0.0
        %v4514 = vmax.f32 %v4496, 0.0
        %v4515 = vmax.f32 %v4498, 0.0
        %v4516 = vld [vmem:[%s7] sm:$0xff]
        %v4517 = vld [vmem:[%s8] sm:$0xff]
        %4519 = vset.pattern.permute.xlu0 0
        %4520 = vperm.xlu0 %4519, %v4517
        %v4521 = vpop.permute.xlu0 %4520
        %v4524 = vsel %vm1671, %v4516, 0
        %4526 = vmatprep.subr.mxu0 0.0
        %4527 = vmatpush1.msra.mxu0 0.0
        %4528 = vmatprep.subr.mxu0 0.0
        %4529 = vmatpush1.msra.mxu0 0.0
        %4530 = vmatprep.subr.mxu0 0.0
        %4531 = vmatpush1.msra.mxu0 0.0
        %4532 = vmatprep.subr.mxu0 0.0
        %4533 = vmatpush1.msra.mxu0 0.0
        %4534 = vmatprep.subr.mxu0 0.0
        %4535 = vmatpush1.msra.mxu0 0.0
        %4536 = vmatprep.subr.mxu0 0.0
        %4537 = vmatpush1.msra.mxu0 0.0
        %4538 = vmatprep.subr.mxu0 0.0
        %4539 = vmatpush1.msra.mxu0 0.0
        %4540 = vmatprep.subr.mxu0 0.0
        %4541 = vmatpush1.msra.mxu0 0.0
        %4542 = vmatprep.subr.mxu0 0.0
        %4543 = vmatpush1.msra.mxu0 0.0
        %4544 = vmatprep.subr.mxu0 0.0
        %4545 = vmatpush1.msra.mxu0 0.0
        %4546 = vmatprep.subr.mxu0 0.0
        %4547 = vmatpush1.msra.mxu0 0.0
        %4548 = vmatprep.subr.mxu0 0.0
        %4549 = vmatpush1.msra.mxu0 0.0
        %v4550 = vand.u32 %v4513, 4294901760
        %4551 = vmatprep.subr.mxu0 %v4550
        %v4552 = vand.u32 %v4512, 4294901760
        %4553 = vmatpush1.msra.mxu0 %v4552
        %v4554 = vand.u32 %v4509, 4294901760
        %4555 = vmatprep.subr.mxu0 %v4554
        %v4556 = vand.u32 %v4508, 4294901760
        %4557 = vmatpush1.msra.mxu0 %v4556
        %v4558 = vand.u32 %v4505, 4294901760
        %4559 = vmatprep.subr.mxu0 %v4558
        %v4560 = vand.u32 %v4504, 4294901760
        %4561 = vmatpush1.msra.mxu0 %v4560
        %v4562 = vand.u32 %v4501, 4294901760
        %4563 = vmatprep.subr.mxu0 %v4562
        %v4564 = vand.u32 %v4500, 4294901760
        %4565 = vmatpush1.msra.mxu0 %v4564
        %4566 = vmatprep.subr.mxu0 0.0
        %4567 = vmatpush2.msra.mxu0 0.0
        %4568 = vmatprep.subr.mxu0 0.0
        %4569 = vmatpush2.msra.mxu0 0.0
        %4570 = vmatprep.subr.mxu0 0.0
        %4571 = vmatpush2.msra.mxu0 0.0
        %4572 = vmatprep.subr.mxu0 0.0
        %4573 = vmatpush2.msra.mxu0 0.0
        %4574 = vmatprep.subr.mxu0 0.0
        %4575 = vmatpush2.msra.mxu0 0.0
        %4576 = vmatprep.subr.mxu0 0.0
        %4577 = vmatpush2.msra.mxu0 0.0
        %4578 = vmatprep.subr.mxu0 0.0
        %4579 = vmatpush2.msra.mxu0 0.0
        %4580 = vmatprep.subr.mxu0 0.0
        %4581 = vmatpush2.msra.mxu0 0.0
        %4582 = vmatprep.subr.mxu0 0.0
        %4583 = vmatpush2.msra.mxu0 0.0
        %4584 = vmatprep.subr.mxu0 0.0
        %4585 = vmatpush2.msra.mxu0 0.0
        %4586 = vmatprep.subr.mxu0 0.0
        %4587 = vmatpush2.msra.mxu0 0.0
        %4588 = vmatprep.subr.mxu0 0.0
        %4589 = vmatpush2.msra.mxu0 0.0
        %4590 = vmatprep.subr.mxu0 0.0
        %4591 = vmatpush2.msra.mxu0 0.0
        %4592 = vmatprep.subr.mxu0 0.0
        %4593 = vmatpush2.msra.mxu0 0.0
        %4594 = vmatprep.subr.mxu0 0.0
        %4595 = vmatpush2.msra.mxu0 0.0
        %4596 = vmatprep.subr.mxu0 0.0
        %4597 = vmatpush2.msra.mxu0 0.0
        %4598 = vmatprep.mubr.f32.mxu0 0.0
        %v4599 = vand.u32 %v4524, 4294901760
        %v4600 = vsub.f32 %v4524, %v4599
        %v4601 = vand.u32 %v4600, 4294901760
        %v4602 = vsub.f32 %v4600, %v4601
        %v4603 = vand.u32 %v4602, 4294901760
        %4604 = vmatmul.mubr.f32.gmra.mxu0 %v4603
        %v4605 = vpop.f32.mrf.mxu0
        %v4606 = vadd.f32 %v4521, %v4605
        %v4607 = vpop.f32.mrf.mxu0
        %v4608 = vadd.f32 %v4521, %v4607
        %4609 = vdwg.mxu0
        %4610 = vmatprep.subr.mxu0 0.0
        %4611 = vmatpush1.msra.mxu0 0.0
        %4612 = vmatprep.subr.mxu0 0.0
        %4613 = vmatpush1.msra.mxu0 0.0
        %4614 = vmatprep.subr.mxu0 0.0
        %4615 = vmatpush1.msra.mxu0 0.0
        %4616 = vmatprep.subr.mxu0 0.0
        %4617 = vmatpush1.msra.mxu0 0.0
        %4618 = vmatprep.subr.mxu0 0.0
        %4619 = vmatpush1.msra.mxu0 0.0
        %4620 = vmatprep.subr.mxu0 0.0
        %4621 = vmatpush1.msra.mxu0 0.0
        %4622 = vmatprep.subr.mxu0 0.0
        %4623 = vmatpush1.msra.mxu0 0.0
        %4624 = vmatprep.subr.mxu0 0.0
        %4625 = vmatpush1.msra.mxu0 0.0
        %4626 = vmatprep.subr.mxu0 0.0
        %4627 = vmatpush1.msra.mxu0 0.0
        %4628 = vmatprep.subr.mxu0 0.0
        %4629 = vmatpush1.msra.mxu0 0.0
        %4630 = vmatprep.subr.mxu0 0.0
        %4631 = vmatpush1.msra.mxu0 0.0
        %4632 = vmatprep.subr.mxu0 0.0
        %4633 = vmatpush1.msra.mxu0 0.0
        %v4634 = vand.u32 %v4513, 4294901760
        %v4635 = vsub.f32 %v4513, %v4634
        %v4636 = vand.u32 %v4635, 4294901760
        %v4637 = vsub.f32 %v4635, %v4636
        %v4638 = vand.u32 %v4637, 4294901760
        %4639 = vmatprep.subr.mxu0 %v4638
        %v4640 = vand.u32 %v4512, 4294901760
        %v4641 = vsub.f32 %v4512, %v4640
        %v4642 = vand.u32 %v4641, 4294901760
        %v4643 = vsub.f32 %v4641, %v4642
        %v4644 = vand.u32 %v4643, 4294901760
        %4645 = vmatpush1.msra.mxu0 %v4644
        %v4646 = vand.u32 %v4509, 4294901760
        %v4647 = vsub.f32 %v4509, %v4646
        %v4648 = vand.u32 %v4647, 4294901760
        %v4649 = vsub.f32 %v4647, %v4648
        %v4650 = vand.u32 %v4649, 4294901760
        %4651 = vmatprep.subr.mxu0 %v4650
        %v4652 = vand.u32 %v4508, 4294901760
        %v4653 = vsub.f32 %v4508, %v4652
        %v4654 = vand.u32 %v4653, 4294901760
        %v4655 = vsub.f32 %v4653, %v4654
        %v4656 = vand.u32 %v4655, 4294901760
        %4657 = vmatpush1.msra.mxu0 %v4656
        %v4658 = vand.u32 %v4505, 4294901760
        %v4659 = vsub.f32 %v4505, %v4658
        %v4660 = vand.u32 %v4659, 4294901760
        %v4661 = vsub.f32 %v4659, %v4660
        %v4662 = vand.u32 %v4661, 4294901760
        %4663 = vmatprep.subr.mxu0 %v4662
        %v4664 = vand.u32 %v4504, 4294901760
        %v4665 = vsub.f32 %v4504, %v4664
        %v4666 = vand.u32 %v4665, 4294901760
        %v4667 = vsub.f32 %v4665, %v4666
        %v4668 = vand.u32 %v4667, 4294901760
        %4669 = vmatpush1.msra.mxu0 %v4668
        %v4670 = vand.u32 %v4501, 4294901760
        %v4671 = vsub.f32 %v4501, %v4670
        %v4672 = vand.u32 %v4671, 4294901760
        %v4673 = vsub.f32 %v4671, %v4672
        %v4674 = vand.u32 %v4673, 4294901760
        %4675 = vmatprep.subr.mxu0 %v4674
        %v4676 = vand.u32 %v4500, 4294901760
        %v4677 = vsub.f32 %v4500, %v4676
        %v4678 = vand.u32 %v4677, 4294901760
        %v4679 = vsub.f32 %v4677, %v4678
        %v4680 = vand.u32 %v4679, 4294901760
        %4681 = vmatpush1.msra.mxu0 %v4680
        %4682 = vmatprep.subr.mxu0 0.0
        %4683 = vmatpush2.msra.mxu0 0.0
        %4684 = vmatprep.subr.mxu0 0.0
        %4685 = vmatpush2.msra.mxu0 0.0
        %4686 = vmatprep.subr.mxu0 0.0
        %4687 = vmatpush2.msra.mxu0 0.0
        %4688 = vmatprep.subr.mxu0 0.0
        %4689 = vmatpush2.msra.mxu0 0.0
        %4690 = vmatprep.subr.mxu0 0.0
        %4691 = vmatpush2.msra.mxu0 0.0
        %4692 = vmatprep.subr.mxu0 0.0
        %4693 = vmatpush2.msra.mxu0 0.0
        %4694 = vmatprep.subr.mxu0 0.0
        %4695 = vmatpush2.msra.mxu0 0.0
        %4696 = vmatprep.subr.mxu0 0.0
        %4697 = vmatpush2.msra.mxu0 0.0
        %4698 = vmatprep.subr.mxu0 0.0
        %4699 = vmatpush2.msra.mxu0 0.0
        %4700 = vmatprep.subr.mxu0 0.0
        %4701 = vmatpush2.msra.mxu0 0.0
        %4702 = vmatprep.subr.mxu0 0.0
        %4703 = vmatpush2.msra.mxu0 0.0
        %4704 = vmatprep.subr.mxu0 0.0
        %4705 = vmatpush2.msra.mxu0 0.0
        %4706 = vmatprep.subr.mxu0 0.0
        %4707 = vmatpush2.msra.mxu0 0.0
        %4708 = vmatprep.subr.mxu0 0.0
        %4709 = vmatpush2.msra.mxu0 0.0
        %4710 = vmatprep.subr.mxu0 0.0
        %4711 = vmatpush2.msra.mxu0 0.0
        %4712 = vmatprep.subr.mxu0 0.0
        %4713 = vmatpush2.msra.mxu0 0.0
        %4714 = vmatprep.mubr.f32.mxu0 0.0
        %v4715 = vand.u32 %v4524, 4294901760
        %4716 = vmatmul.mubr.f32.gmra.mxu0 %v4715
        %v4717 = vpop.f32.mrf.mxu0
        %v4718 = vadd.f32 %v4606, %v4717
        %v4719 = vpop.f32.mrf.mxu0
        %v4720 = vadd.f32 %v4608, %v4719
        %4721 = vdwg.mxu0
        %4722 = vmatprep.subr.mxu0 0.0
        %4723 = vmatpush1.msra.mxu0 0.0
        %4724 = vmatprep.subr.mxu0 0.0
        %4725 = vmatpush1.msra.mxu0 0.0
        %4726 = vmatprep.subr.mxu0 0.0
        %4727 = vmatpush1.msra.mxu0 0.0
        %4728 = vmatprep.subr.mxu0 0.0
        %4729 = vmatpush1.msra.mxu0 0.0
        %4730 = vmatprep.subr.mxu0 0.0
        %4731 = vmatpush1.msra.mxu0 0.0
        %4732 = vmatprep.subr.mxu0 0.0
        %4733 = vmatpush1.msra.mxu0 0.0
        %4734 = vmatprep.subr.mxu0 0.0
        %4735 = vmatpush1.msra.mxu0 0.0
        %4736 = vmatprep.subr.mxu0 0.0
        %4737 = vmatpush1.msra.mxu0 0.0
        %4738 = vmatprep.subr.mxu0 0.0
        %4739 = vmatpush1.msra.mxu0 0.0
        %4740 = vmatprep.subr.mxu0 0.0
        %4741 = vmatpush1.msra.mxu0 0.0
        %4742 = vmatprep.subr.mxu0 0.0
        %4743 = vmatpush1.msra.mxu0 0.0
        %4744 = vmatprep.subr.mxu0 0.0
        %4745 = vmatpush1.msra.mxu0 0.0
        %v4746 = vand.u32 %v4513, 4294901760
        %v4747 = vsub.f32 %v4513, %v4746
        %4748 = vmatprep.subr.mxu0 %v4747
        %v4749 = vand.u32 %v4512, 4294901760
        %v4750 = vsub.f32 %v4512, %v4749
        %4751 = vmatpush1.msra.mxu0 %v4750
        %v4752 = vand.u32 %v4509, 4294901760
        %v4753 = vsub.f32 %v4509, %v4752
        %4754 = vmatprep.subr.mxu0 %v4753
        %v4755 = vand.u32 %v4508, 4294901760
        %v4756 = vsub.f32 %v4508, %v4755
        %4757 = vmatpush1.msra.mxu0 %v4756
        %v4758 = vand.u32 %v4505, 4294901760
        %v4759 = vsub.f32 %v4505, %v4758
        %4760 = vmatprep.subr.mxu0 %v4759
        %v4761 = vand.u32 %v4504, 4294901760
        %v4762 = vsub.f32 %v4504, %v4761
        %4763 = vmatpush1.msra.mxu0 %v4762
        %v4764 = vand.u32 %v4501, 4294901760
        %v4765 = vsub.f32 %v4501, %v4764
        %4766 = vmatprep.subr.mxu0 %v4765
        %v4767 = vand.u32 %v4500, 4294901760
        %v4768 = vsub.f32 %v4500, %v4767
        %4769 = vmatpush1.msra.mxu0 %v4768
        %4770 = vmatprep.subr.mxu0 0.0
        %4771 = vmatpush2.msra.mxu0 0.0
        %4772 = vmatprep.subr.mxu0 0.0
        %4773 = vmatpush2.msra.mxu0 0.0
        %4774 = vmatprep.subr.mxu0 0.0
        %4775 = vmatpush2.msra.mxu0 0.0
        %4776 = vmatprep.subr.mxu0 0.0
        %4777 = vmatpush2.msra.mxu0 0.0
        %4778 = vmatprep.subr.mxu0 0.0
        %4779 = vmatpush2.msra.mxu0 0.0
        %4780 = vmatprep.subr.mxu0 0.0
        %4781 = vmatpush2.msra.mxu0 0.0
        %4782 = vmatprep.subr.mxu0 0.0
        %4783 = vmatpush2.msra.mxu0 0.0
        %4784 = vmatprep.subr.mxu0 0.0
        %4785 = vmatpush2.msra.mxu0 0.0
        %4786 = vmatprep.subr.mxu0 0.0
        %4787 = vmatpush2.msra.mxu0 0.0
        %4788 = vmatprep.subr.mxu0 0.0
        %4789 = vmatpush2.msra.mxu0 0.0
        %4790 = vmatprep.subr.mxu0 0.0
        %4791 = vmatpush2.msra.mxu0 0.0
        %4792 = vmatprep.subr.mxu0 0.0
        %4793 = vmatpush2.msra.mxu0 0.0
        %4794 = vmatprep.subr.mxu0 0.0
        %4795 = vmatpush2.msra.mxu0 0.0
        %4796 = vmatprep.subr.mxu0 0.0
        %4797 = vmatpush2.msra.mxu0 0.0
        %4798 = vmatprep.subr.mxu0 0.0
        %4799 = vmatpush2.msra.mxu0 0.0
        %4800 = vmatprep.subr.mxu0 0.0
        %4801 = vmatpush2.msra.mxu0 0.0
        %4802 = vmatprep.mubr.f32.mxu0 0.0
        %v4803 = vand.u32 %v4524, 4294901760
        %v4804 = vsub.f32 %v4524, %v4803
        %4805 = vmatmul.mubr.f32.gmra.mxu0 %v4804
        %v4806 = vpop.f32.mrf.mxu0
        %v4807 = vadd.f32 %v4718, %v4806
        %v4808 = vpop.f32.mrf.mxu0
        %v4809 = vadd.f32 %v4720, %v4808
        %4810 = vdwg.mxu0
        %4811 = vmatprep.subr.mxu0 0.0
        %4812 = vmatpush1.msra.mxu0 0.0
        %4813 = vmatprep.subr.mxu0 0.0
        %4814 = vmatpush1.msra.mxu0 0.0
        %4815 = vmatprep.subr.mxu0 0.0
        %4816 = vmatpush1.msra.mxu0 0.0
        %4817 = vmatprep.subr.mxu0 0.0
        %4818 = vmatpush1.msra.mxu0 0.0
        %4819 = vmatprep.subr.mxu0 0.0
        %4820 = vmatpush1.msra.mxu0 0.0
        %4821 = vmatprep.subr.mxu0 0.0
        %4822 = vmatpush1.msra.mxu0 0.0
        %4823 = vmatprep.subr.mxu0 0.0
        %4824 = vmatpush1.msra.mxu0 0.0
        %4825 = vmatprep.subr.mxu0 0.0
        %4826 = vmatpush1.msra.mxu0 0.0
        %4827 = vmatprep.subr.mxu0 0.0
        %4828 = vmatpush1.msra.mxu0 0.0
        %4829 = vmatprep.subr.mxu0 0.0
        %4830 = vmatpush1.msra.mxu0 0.0
        %4831 = vmatprep.subr.mxu0 0.0
        %4832 = vmatpush1.msra.mxu0 0.0
        %4833 = vmatprep.subr.mxu0 0.0
        %4834 = vmatpush1.msra.mxu0 0.0
        %v4835 = vand.u32 %v4513, 4294901760
        %4836 = vmatprep.subr.mxu0 %v4835
        %v4837 = vand.u32 %v4512, 4294901760
        %4838 = vmatpush1.msra.mxu0 %v4837
        %v4839 = vand.u32 %v4509, 4294901760
        %4840 = vmatprep.subr.mxu0 %v4839
        %v4841 = vand.u32 %v4508, 4294901760
        %4842 = vmatpush1.msra.mxu0 %v4841
        %v4843 = vand.u32 %v4505, 4294901760
        %4844 = vmatprep.subr.mxu0 %v4843
        %v4845 = vand.u32 %v4504, 4294901760
        %4846 = vmatpush1.msra.mxu0 %v4845
        %v4847 = vand.u32 %v4501, 4294901760
        %4848 = vmatprep.subr.mxu0 %v4847
        %v4849 = vand.u32 %v4500, 4294901760
        %4850 = vmatpush1.msra.mxu0 %v4849
        %4851 = vmatprep.subr.mxu0 0.0
        %4852 = vmatpush2.msra.mxu0 0.0
        %4853 = vmatprep.subr.mxu0 0.0
        %4854 = vmatpush2.msra.mxu0 0.0
        %4855 = vmatprep.subr.mxu0 0.0
        %4856 = vmatpush2.msra.mxu0 0.0
        %4857 = vmatprep.subr.mxu0 0.0
        %4858 = vmatpush2.msra.mxu0 0.0
        %4859 = vmatprep.subr.mxu0 0.0
        %4860 = vmatpush2.msra.mxu0 0.0
        %4861 = vmatprep.subr.mxu0 0.0
        %4862 = vmatpush2.msra.mxu0 0.0
        %4863 = vmatprep.subr.mxu0 0.0
        %4864 = vmatpush2.msra.mxu0 0.0
        %4865 = vmatprep.subr.mxu0 0.0
        %4866 = vmatpush2.msra.mxu0 0.0
        %4867 = vmatprep.subr.mxu0 0.0
        %4868 = vmatpush2.msra.mxu0 0.0
        %4869 = vmatprep.subr.mxu0 0.0
        %4870 = vmatpush2.msra.mxu0 0.0
        %4871 = vmatprep.subr.mxu0 0.0
        %4872 = vmatpush2.msra.mxu0 0.0
        %4873 = vmatprep.subr.mxu0 0.0
        %4874 = vmatpush2.msra.mxu0 0.0
        %4875 = vmatprep.subr.mxu0 0.0
        %4876 = vmatpush2.msra.mxu0 0.0
        %4877 = vmatprep.subr.mxu0 0.0
        %4878 = vmatpush2.msra.mxu0 0.0
        %4879 = vmatprep.subr.mxu0 0.0
        %4880 = vmatpush2.msra.mxu0 0.0
        %4881 = vmatprep.subr.mxu0 0.0
        %4882 = vmatpush2.msra.mxu0 0.0
        %4883 = vmatprep.mubr.f32.mxu0 0.0
        %v4884 = vand.u32 %v4524, 4294901760
        %v4885 = vsub.f32 %v4524, %v4884
        %v4886 = vand.u32 %v4885, 4294901760
        %4887 = vmatmul.mubr.f32.gmra.mxu0 %v4886
        %v4888 = vpop.f32.mrf.mxu0
        %v4889 = vadd.f32 %v4807, %v4888
        %v4890 = vpop.f32.mrf.mxu0
        %v4891 = vadd.f32 %v4809, %v4890
        %4892 = vdwg.mxu0
        %4893 = vmatprep.subr.mxu0 0.0
        %4894 = vmatpush1.msra.mxu0 0.0
        %4895 = vmatprep.subr.mxu0 0.0
        %4896 = vmatpush1.msra.mxu0 0.0
        %4897 = vmatprep.subr.mxu0 0.0
        %4898 = vmatpush1.msra.mxu0 0.0
        %4899 = vmatprep.subr.mxu0 0.0
        %4900 = vmatpush1.msra.mxu0 0.0
        %4901 = vmatprep.subr.mxu0 0.0
        %4902 = vmatpush1.msra.mxu0 0.0
        %4903 = vmatprep.subr.mxu0 0.0
        %4904 = vmatpush1.msra.mxu0 0.0
        %4905 = vmatprep.subr.mxu0 0.0
        %4906 = vmatpush1.msra.mxu0 0.0
        %4907 = vmatprep.subr.mxu0 0.0
        %4908 = vmatpush1.msra.mxu0 0.0
        %4909 = vmatprep.subr.mxu0 0.0
        %4910 = vmatpush1.msra.mxu0 0.0
        %4911 = vmatprep.subr.mxu0 0.0
        %4912 = vmatpush1.msra.mxu0 0.0
        %4913 = vmatprep.subr.mxu0 0.0
        %4914 = vmatpush1.msra.mxu0 0.0
        %4915 = vmatprep.subr.mxu0 0.0
        %4916 = vmatpush1.msra.mxu0 0.0
        %v4917 = vand.u32 %v4513, 4294901760
        %v4918 = vsub.f32 %v4513, %v4917
        %v4919 = vand.u32 %v4918, 4294901760
        %4920 = vmatprep.subr.mxu0 %v4919
        %v4921 = vand.u32 %v4512, 4294901760
        %v4922 = vsub.f32 %v4512, %v4921
        %v4923 = vand.u32 %v4922, 4294901760
        %4924 = vmatpush1.msra.mxu0 %v4923
        %v4925 = vand.u32 %v4509, 4294901760
        %v4926 = vsub.f32 %v4509, %v4925
        %v4927 = vand.u32 %v4926, 4294901760
        %4928 = vmatprep.subr.mxu0 %v4927
        %v4929 = vand.u32 %v4508, 4294901760
        %v4930 = vsub.f32 %v4508, %v4929
        %v4931 = vand.u32 %v4930, 4294901760
        %4932 = vmatpush1.msra.mxu0 %v4931
        %v4933 = vand.u32 %v4505, 4294901760
        %v4934 = vsub.f32 %v4505, %v4933
        %v4935 = vand.u32 %v4934, 4294901760
        %4936 = vmatprep.subr.mxu0 %v4935
        %v4937 = vand.u32 %v4504, 4294901760
        %v4938 = vsub.f32 %v4504, %v4937
        %v4939 = vand.u32 %v4938, 4294901760
        %4940 = vmatpush1.msra.mxu0 %v4939
        %v4941 = vand.u32 %v4501, 4294901760
        %v4942 = vsub.f32 %v4501, %v4941
        %v4943 = vand.u32 %v4942, 4294901760
        %4944 = vmatprep.subr.mxu0 %v4943
        %v4945 = vand.u32 %v4500, 4294901760
        %v4946 = vsub.f32 %v4500, %v4945
        %v4947 = vand.u32 %v4946, 4294901760
        %4948 = vmatpush1.msra.mxu0 %v4947
        %4949 = vmatprep.subr.mxu0 0.0
        %4950 = vmatpush2.msra.mxu0 0.0
        %4951 = vmatprep.subr.mxu0 0.0
        %4952 = vmatpush2.msra.mxu0 0.0
        %4953 = vmatprep.subr.mxu0 0.0
        %4954 = vmatpush2.msra.mxu0 0.0
        %4955 = vmatprep.subr.mxu0 0.0
        %4956 = vmatpush2.msra.mxu0 0.0
        %4957 = vmatprep.subr.mxu0 0.0
        %4958 = vmatpush2.msra.mxu0 0.0
        %4959 = vmatprep.subr.mxu0 0.0
        %4960 = vmatpush2.msra.mxu0 0.0
        %4961 = vmatprep.subr.mxu0 0.0
        %4962 = vmatpush2.msra.mxu0 0.0
        %4963 = vmatprep.subr.mxu0 0.0
        %4964 = vmatpush2.msra.mxu0 0.0
        %4965 = vmatprep.subr.mxu0 0.0
        %4966 = vmatpush2.msra.mxu0 0.0
        %4967 = vmatprep.subr.mxu0 0.0
        %4968 = vmatpush2.msra.mxu0 0.0
        %4969 = vmatprep.subr.mxu0 0.0
        %4970 = vmatpush2.msra.mxu0 0.0
        %4971 = vmatprep.subr.mxu0 0.0
        %4972 = vmatpush2.msra.mxu0 0.0
        %4973 = vmatprep.subr.mxu0 0.0
        %4974 = vmatpush2.msra.mxu0 0.0
        %4975 = vmatprep.subr.mxu0 0.0
        %4976 = vmatpush2.msra.mxu0 0.0
        %4977 = vmatprep.subr.mxu0 0.0
        %4978 = vmatpush2.msra.mxu0 0.0
        %4979 = vmatprep.subr.mxu0 0.0
        %4980 = vmatpush2.msra.mxu0 0.0
        %4981 = vmatprep.mubr.f32.mxu0 0.0
        %v4982 = vand.u32 %v4524, 4294901760
        %4983 = vmatmul.mubr.f32.gmra.mxu0 %v4982
        %v4984 = vpop.f32.mrf.mxu0
        %v4985 = vadd.f32 %v4889, %v4984
        %v4986 = vpop.f32.mrf.mxu0
        %v4987 = vadd.f32 %v4891, %v4986
        %4988 = vdwg.mxu0
        %4989 = vmatprep.subr.mxu0 0.0
        %4990 = vmatpush1.msra.mxu0 0.0
        %4991 = vmatprep.subr.mxu0 0.0
        %4992 = vmatpush1.msra.mxu0 0.0
        %4993 = vmatprep.subr.mxu0 0.0
        %4994 = vmatpush1.msra.mxu0 0.0
        %4995 = vmatprep.subr.mxu0 0.0
        %4996 = vmatpush1.msra.mxu0 0.0
        %4997 = vmatprep.subr.mxu0 0.0
        %4998 = vmatpush1.msra.mxu0 0.0
        %4999 = vmatprep.subr.mxu0 0.0
        %5000 = vmatpush1.msra.mxu0 0.0
        %5001 = vmatprep.subr.mxu0 0.0
        %5002 = vmatpush1.msra.mxu0 0.0
        %5003 = vmatprep.subr.mxu0 0.0
        %5004 = vmatpush1.msra.mxu0 0.0
        %5005 = vmatprep.subr.mxu0 0.0
        %5006 = vmatpush1.msra.mxu0 0.0
        %5007 = vmatprep.subr.mxu0 0.0
        %5008 = vmatpush1.msra.mxu0 0.0
        %5009 = vmatprep.subr.mxu0 0.0
        %5010 = vmatpush1.msra.mxu0 0.0
        %5011 = vmatprep.subr.mxu0 0.0
        %5012 = vmatpush1.msra.mxu0 0.0
        %v5013 = vand.u32 %v4513, 4294901760
        %5014 = vmatprep.subr.mxu0 %v5013
        %v5015 = vand.u32 %v4512, 4294901760
        %5016 = vmatpush1.msra.mxu0 %v5015
        %v5017 = vand.u32 %v4509, 4294901760
        %5018 = vmatprep.subr.mxu0 %v5017
        %v5019 = vand.u32 %v4508, 4294901760
        %5020 = vmatpush1.msra.mxu0 %v5019
        %v5021 = vand.u32 %v4505, 4294901760
        %5022 = vmatprep.subr.mxu0 %v5021
        %v5023 = vand.u32 %v4504, 4294901760
        %5024 = vmatpush1.msra.mxu0 %v5023
        %v5025 = vand.u32 %v4501, 4294901760
        %5026 = vmatprep.subr.mxu0 %v5025
        %v5027 = vand.u32 %v4500, 4294901760
        %5028 = vmatpush1.msra.mxu0 %v5027
        %5029 = vmatprep.subr.mxu0 0.0
        %5030 = vmatpush2.msra.mxu0 0.0
        %5031 = vmatprep.subr.mxu0 0.0
        %5032 = vmatpush2.msra.mxu0 0.0
        %5033 = vmatprep.subr.mxu0 0.0
        %5034 = vmatpush2.msra.mxu0 0.0
        %5035 = vmatprep.subr.mxu0 0.0
        %5036 = vmatpush2.msra.mxu0 0.0
        %5037 = vmatprep.subr.mxu0 0.0
        %5038 = vmatpush2.msra.mxu0 0.0
        %5039 = vmatprep.subr.mxu0 0.0
        %5040 = vmatpush2.msra.mxu0 0.0
        %5041 = vmatprep.subr.mxu0 0.0
        %5042 = vmatpush2.msra.mxu0 0.0
        %5043 = vmatprep.subr.mxu0 0.0
        %5044 = vmatpush2.msra.mxu0 0.0
        %5045 = vmatprep.subr.mxu0 0.0
        %5046 = vmatpush2.msra.mxu0 0.0
        %5047 = vmatprep.subr.mxu0 0.0
        %5048 = vmatpush2.msra.mxu0 0.0
        %5049 = vmatprep.subr.mxu0 0.0
        %5050 = vmatpush2.msra.mxu0 0.0
        %5051 = vmatprep.subr.mxu0 0.0
        %5052 = vmatpush2.msra.mxu0 0.0
        %5053 = vmatprep.subr.mxu0 0.0
        %5054 = vmatpush2.msra.mxu0 0.0
        %5055 = vmatprep.subr.mxu0 0.0
        %5056 = vmatpush2.msra.mxu0 0.0
        %5057 = vmatprep.subr.mxu0 0.0
        %5058 = vmatpush2.msra.mxu0 0.0
        %5059 = vmatprep.subr.mxu0 0.0
        %5060 = vmatpush2.msra.mxu0 0.0
        %5061 = vmatprep.mubr.f32.mxu0 0.0
        %v5062 = vand.u32 %v4524, 4294901760
        %5063 = vmatmul.mubr.f32.gmra.mxu0 %v5062
        %v5064 = vpop.f32.mrf.mxu0
        %v5065 = vadd.f32 %v4985, %v5064
        %v5066 = vpop.f32.mrf.mxu0
        %v5067 = vadd.f32 %v4987, %v5066
        %5068 = vdwg.mxu0
        %5069 = vmatprep.subr.mxu0 0.0
        %5070 = vmatpush1.msra.mxu0 0.0
        %5071 = vmatprep.subr.mxu0 0.0
        %5072 = vmatpush1.msra.mxu0 0.0
        %5073 = vmatprep.subr.mxu0 0.0
        %5074 = vmatpush1.msra.mxu0 0.0
        %5075 = vmatprep.subr.mxu0 0.0
        %5076 = vmatpush1.msra.mxu0 0.0
        %5077 = vmatprep.subr.mxu0 0.0
        %5078 = vmatpush1.msra.mxu0 0.0
        %5079 = vmatprep.subr.mxu0 0.0
        %5080 = vmatpush1.msra.mxu0 0.0
        %5081 = vmatprep.subr.mxu0 0.0
        %5082 = vmatpush1.msra.mxu0 0.0
        %5083 = vmatprep.subr.mxu0 0.0
        %5084 = vmatpush1.msra.mxu0 0.0
        %5085 = vmatprep.subr.mxu0 0.0
        %5086 = vmatpush1.msra.mxu0 0.0
        %5087 = vmatprep.subr.mxu0 0.0
        %5088 = vmatpush1.msra.mxu0 0.0
        %5089 = vmatprep.subr.mxu0 0.0
        %5090 = vmatpush1.msra.mxu0 0.0
        %5091 = vmatprep.subr.mxu0 0.0
        %5092 = vmatpush1.msra.mxu0 0.0
        %v5093 = vand.u32 %v4515, 4294901760
        %5094 = vmatprep.subr.mxu0 %v5093
        %v5095 = vand.u32 %v4514, 4294901760
        %5096 = vmatpush1.msra.mxu0 %v5095
        %v5097 = vand.u32 %v4511, 4294901760
        %5098 = vmatprep.subr.mxu0 %v5097
        %v5099 = vand.u32 %v4510, 4294901760
        %5100 = vmatpush1.msra.mxu0 %v5099
        %v5101 = vand.u32 %v4507, 4294901760
        %5102 = vmatprep.subr.mxu0 %v5101
        %v5103 = vand.u32 %v4506, 4294901760
        %5104 = vmatpush1.msra.mxu0 %v5103
        %v5105 = vand.u32 %v4503, 4294901760
        %5106 = vmatprep.subr.mxu0 %v5105
        %v5107 = vand.u32 %v4502, 4294901760
        %5108 = vmatpush1.msra.mxu0 %v5107
        %5109 = vmatprep.subr.mxu0 0.0
        %5110 = vmatpush2.msra.mxu0 0.0
        %5111 = vmatprep.subr.mxu0 0.0
        %5112 = vmatpush2.msra.mxu0 0.0
        %5113 = vmatprep.subr.mxu0 0.0
        %5114 = vmatpush2.msra.mxu0 0.0
        %5115 = vmatprep.subr.mxu0 0.0
        %5116 = vmatpush2.msra.mxu0 0.0
        %5117 = vmatprep.subr.mxu0 0.0
        %5118 = vmatpush2.msra.mxu0 0.0
        %5119 = vmatprep.subr.mxu0 0.0
        %5120 = vmatpush2.msra.mxu0 0.0
        %5121 = vmatprep.subr.mxu0 0.0
        %5122 = vmatpush2.msra.mxu0 0.0
        %5123 = vmatprep.subr.mxu0 0.0
        %5124 = vmatpush2.msra.mxu0 0.0
        %5125 = vmatprep.subr.mxu0 0.0
        %5126 = vmatpush2.msra.mxu0 0.0
        %5127 = vmatprep.subr.mxu0 0.0
        %5128 = vmatpush2.msra.mxu0 0.0
        %5129 = vmatprep.subr.mxu0 0.0
        %5130 = vmatpush2.msra.mxu0 0.0
        %5131 = vmatprep.subr.mxu0 0.0
        %5132 = vmatpush2.msra.mxu0 0.0
        %5133 = vmatprep.subr.mxu0 0.0
        %5134 = vmatpush2.msra.mxu0 0.0
        %5135 = vmatprep.subr.mxu0 0.0
        %5136 = vmatpush2.msra.mxu0 0.0
        %5137 = vmatprep.subr.mxu0 0.0
        %5138 = vmatpush2.msra.mxu0 0.0
        %5139 = vmatprep.subr.mxu0 0.0
        %5140 = vmatpush2.msra.mxu0 0.0
        %5141 = vmatprep.mubr.f32.mxu0 0.0
        %v5142 = vand.u32 %v4524, 4294901760
        %v5143 = vsub.f32 %v4524, %v5142
        %v5144 = vand.u32 %v5143, 4294901760
        %v5145 = vsub.f32 %v5143, %v5144
        %v5146 = vand.u32 %v5145, 4294901760
        %5147 = vmatmul.mubr.f32.gmra.mxu0 %v5146
        %v5148 = vpop.f32.mrf.mxu0
        %v5149 = vadd.f32 %v4521, %v5148
        %v5150 = vpop.f32.mrf.mxu0
        %v5151 = vadd.f32 %v4521, %v5150
        %5152 = vdwg.mxu0
        %5153 = vmatprep.subr.mxu0 0.0
        %5154 = vmatpush1.msra.mxu0 0.0
        %5155 = vmatprep.subr.mxu0 0.0
        %5156 = vmatpush1.msra.mxu0 0.0
        %5157 = vmatprep.subr.mxu0 0.0
        %5158 = vmatpush1.msra.mxu0 0.0
        %5159 = vmatprep.subr.mxu0 0.0
        %5160 = vmatpush1.msra.mxu0 0.0
        %5161 = vmatprep.subr.mxu0 0.0
        %5162 = vmatpush1.msra.mxu0 0.0
        %5163 = vmatprep.subr.mxu0 0.0
        %5164 = vmatpush1.msra.mxu0 0.0
        %5165 = vmatprep.subr.mxu0 0.0
        %5166 = vmatpush1.msra.mxu0 0.0
        %5167 = vmatprep.subr.mxu0 0.0
        %5168 = vmatpush1.msra.mxu0 0.0
        %5169 = vmatprep.subr.mxu0 0.0
        %5170 = vmatpush1.msra.mxu0 0.0
        %5171 = vmatprep.subr.mxu0 0.0
        %5172 = vmatpush1.msra.mxu0 0.0
        %5173 = vmatprep.subr.mxu0 0.0
        %5174 = vmatpush1.msra.mxu0 0.0
        %5175 = vmatprep.subr.mxu0 0.0
        %5176 = vmatpush1.msra.mxu0 0.0
        %v5177 = vand.u32 %v4515, 4294901760
        %v5178 = vsub.f32 %v4515, %v5177
        %v5179 = vand.u32 %v5178, 4294901760
        %v5180 = vsub.f32 %v5178, %v5179
        %v5181 = vand.u32 %v5180, 4294901760
        %5182 = vmatprep.subr.mxu0 %v5181
        %v5183 = vand.u32 %v4514, 4294901760
        %v5184 = vsub.f32 %v4514, %v5183
        %v5185 = vand.u32 %v5184, 4294901760
        %v5186 = vsub.f32 %v5184, %v5185
        %v5187 = vand.u32 %v5186, 4294901760
        %5188 = vmatpush1.msra.mxu0 %v5187
        %v5189 = vand.u32 %v4511, 4294901760
        %v5190 = vsub.f32 %v4511, %v5189
        %v5191 = vand.u32 %v5190, 4294901760
        %v5192 = vsub.f32 %v5190, %v5191
        %v5193 = vand.u32 %v5192, 4294901760
        %5194 = vmatprep.subr.mxu0 %v5193
        %v5195 = vand.u32 %v4510, 4294901760
        %v5196 = vsub.f32 %v4510, %v5195
        %v5197 = vand.u32 %v5196, 4294901760
        %v5198 = vsub.f32 %v5196, %v5197
        %v5199 = vand.u32 %v5198, 4294901760
        %5200 = vmatpush1.msra.mxu0 %v5199
        %v5201 = vand.u32 %v4507, 4294901760
        %v5202 = vsub.f32 %v4507, %v5201
        %v5203 = vand.u32 %v5202, 4294901760
        %v5204 = vsub.f32 %v5202, %v5203
        %v5205 = vand.u32 %v5204, 4294901760
        %5206 = vmatprep.subr.mxu0 %v5205
        %v5207 = vand.u32 %v4506, 4294901760
        %v5208 = vsub.f32 %v4506, %v5207
        %v5209 = vand.u32 %v5208, 4294901760
        %v5210 = vsub.f32 %v5208, %v5209
        %v5211 = vand.u32 %v5210, 4294901760
        %5212 = vmatpush1.msra.mxu0 %v5211
        %v5213 = vand.u32 %v4503, 4294901760
        %v5214 = vsub.f32 %v4503, %v5213
        %v5215 = vand.u32 %v5214, 4294901760
        %v5216 = vsub.f32 %v5214, %v5215
        %v5217 = vand.u32 %v5216, 4294901760
        %5218 = vmatprep.subr.mxu0 %v5217
        %v5219 = vand.u32 %v4502, 4294901760
        %v5220 = vsub.f32 %v4502, %v5219
        %v5221 = vand.u32 %v5220, 4294901760
        %v5222 = vsub.f32 %v5220, %v5221
        %v5223 = vand.u32 %v5222, 4294901760
        %5224 = vmatpush1.msra.mxu0 %v5223
        %5225 = vmatprep.subr.mxu0 0.0
        %5226 = vmatpush2.msra.mxu0 0.0
        %5227 = vmatprep.subr.mxu0 0.0
        %5228 = vmatpush2.msra.mxu0 0.0
        %5229 = vmatprep.subr.mxu0 0.0
        %5230 = vmatpush2.msra.mxu0 0.0
        %5231 = vmatprep.subr.mxu0 0.0
        %5232 = vmatpush2.msra.mxu0 0.0
        %5233 = vmatprep.subr.mxu0 0.0
        %5234 = vmatpush2.msra.mxu0 0.0
        %5235 = vmatprep.subr.mxu0 0.0
        %5236 = vmatpush2.msra.mxu0 0.0
        %5237 = vmatprep.subr.mxu0 0.0
        %5238 = vmatpush2.msra.mxu0 0.0
        %5239 = vmatprep.subr.mxu0 0.0
        %5240 = vmatpush2.msra.mxu0 0.0
        %5241 = vmatprep.subr.mxu0 0.0
        %5242 = vmatpush2.msra.mxu0 0.0
        %5243 = vmatprep.subr.mxu0 0.0
        %5244 = vmatpush2.msra.mxu0 0.0
        %5245 = vmatprep.subr.mxu0 0.0
        %5246 = vmatpush2.msra.mxu0 0.0
        %5247 = vmatprep.subr.mxu0 0.0
        %5248 = vmatpush2.msra.mxu0 0.0
        %5249 = vmatprep.subr.mxu0 0.0
        %5250 = vmatpush2.msra.mxu0 0.0
        %5251 = vmatprep.subr.mxu0 0.0
        %5252 = vmatpush2.msra.mxu0 0.0
        %5253 = vmatprep.subr.mxu0 0.0
        %5254 = vmatpush2.msra.mxu0 0.0
        %5255 = vmatprep.subr.mxu0 0.0
        %5256 = vmatpush2.msra.mxu0 0.0
        %5257 = vmatprep.mubr.f32.mxu0 0.0
        %v5258 = vand.u32 %v4524, 4294901760
        %5259 = vmatmul.mubr.f32.gmra.mxu0 %v5258
        %v5260 = vpop.f32.mrf.mxu0
        %v5261 = vadd.f32 %v5149, %v5260
        %v5262 = vpop.f32.mrf.mxu0
        %v5263 = vadd.f32 %v5151, %v5262
        %5264 = vdwg.mxu0
        %5265 = vmatprep.subr.mxu0 0.0
        %5266 = vmatpush1.msra.mxu0 0.0
        %5267 = vmatprep.subr.mxu0 0.0
        %5268 = vmatpush1.msra.mxu0 0.0
        %5269 = vmatprep.subr.mxu0 0.0
        %5270 = vmatpush1.msra.mxu0 0.0
        %5271 = vmatprep.subr.mxu0 0.0
        %5272 = vmatpush1.msra.mxu0 0.0
        %5273 = vmatprep.subr.mxu0 0.0
        %5274 = vmatpush1.msra.mxu0 0.0
        %5275 = vmatprep.subr.mxu0 0.0
        %5276 = vmatpush1.msra.mxu0 0.0
        %5277 = vmatprep.subr.mxu0 0.0
        %5278 = vmatpush1.msra.mxu0 0.0
        %5279 = vmatprep.subr.mxu0 0.0
        %5280 = vmatpush1.msra.mxu0 0.0
        %5281 = vmatprep.subr.mxu0 0.0
        %5282 = vmatpush1.msra.mxu0 0.0
        %5283 = vmatprep.subr.mxu0 0.0
        %5284 = vmatpush1.msra.mxu0 0.0
        %5285 = vmatprep.subr.mxu0 0.0
        %5286 = vmatpush1.msra.mxu0 0.0
        %5287 = vmatprep.subr.mxu0 0.0
        %5288 = vmatpush1.msra.mxu0 0.0
        %v5289 = vand.u32 %v4515, 4294901760
        %v5290 = vsub.f32 %v4515, %v5289
        %5291 = vmatprep.subr.mxu0 %v5290
        %v5292 = vand.u32 %v4514, 4294901760
        %v5293 = vsub.f32 %v4514, %v5292
        %5294 = vmatpush1.msra.mxu0 %v5293
        %v5295 = vand.u32 %v4511, 4294901760
        %v5296 = vsub.f32 %v4511, %v5295
        %5297 = vmatprep.subr.mxu0 %v5296
        %v5298 = vand.u32 %v4510, 4294901760
        %v5299 = vsub.f32 %v4510, %v5298
        %5300 = vmatpush1.msra.mxu0 %v5299
        %v5301 = vand.u32 %v4507, 4294901760
        %v5302 = vsub.f32 %v4507, %v5301
        %5303 = vmatprep.subr.mxu0 %v5302
        %v5304 = vand.u32 %v4506, 4294901760
        %v5305 = vsub.f32 %v4506, %v5304
        %5306 = vmatpush1.msra.mxu0 %v5305
        %v5307 = vand.u32 %v4503, 4294901760
        %v5308 = vsub.f32 %v4503, %v5307
        %5309 = vmatprep.subr.mxu0 %v5308
        %v5310 = vand.u32 %v4502, 4294901760
        %v5311 = vsub.f32 %v4502, %v5310
        %5312 = vmatpush1.msra.mxu0 %v5311
        %5313 = vmatprep.subr.mxu0 0.0
        %5314 = vmatpush2.msra.mxu0 0.0
        %5315 = vmatprep.subr.mxu0 0.0
        %5316 = vmatpush2.msra.mxu0 0.0
        %5317 = vmatprep.subr.mxu0 0.0
        %5318 = vmatpush2.msra.mxu0 0.0
        %5319 = vmatprep.subr.mxu0 0.0
        %5320 = vmatpush2.msra.mxu0 0.0
        %5321 = vmatprep.subr.mxu0 0.0
        %5322 = vmatpush2.msra.mxu0 0.0
        %5323 = vmatprep.subr.mxu0 0.0
        %5324 = vmatpush2.msra.mxu0 0.0
        %5325 = vmatprep.subr.mxu0 0.0
        %5326 = vmatpush2.msra.mxu0 0.0
        %5327 = vmatprep.subr.mxu0 0.0
        %5328 = vmatpush2.msra.mxu0 0.0
        %5329 = vmatprep.subr.mxu0 0.0
        %5330 = vmatpush2.msra.mxu0 0.0
        %5331 = vmatprep.subr.mxu0 0.0
        %5332 = vmatpush2.msra.mxu0 0.0
        %5333 = vmatprep.subr.mxu0 0.0
        %5334 = vmatpush2.msra.mxu0 0.0
        %5335 = vmatprep.subr.mxu0 0.0
        %5336 = vmatpush2.msra.mxu0 0.0
        %5337 = vmatprep.subr.mxu0 0.0
        %5338 = vmatpush2.msra.mxu0 0.0
        %5339 = vmatprep.subr.mxu0 0.0
        %5340 = vmatpush2.msra.mxu0 0.0
        %5341 = vmatprep.subr.mxu0 0.0
        %5342 = vmatpush2.msra.mxu0 0.0
        %5343 = vmatprep.subr.mxu0 0.0
        %5344 = vmatpush2.msra.mxu0 0.0
        %5345 = vmatprep.mubr.f32.mxu0 0.0
        %v5346 = vand.u32 %v4524, 4294901760
        %v5347 = vsub.f32 %v4524, %v5346
        %5348 = vmatmul.mubr.f32.gmra.mxu0 %v5347
        %v5349 = vpop.f32.mrf.mxu0
        %v5350 = vadd.f32 %v5261, %v5349
        %v5351 = vpop.f32.mrf.mxu0
        %v5352 = vadd.f32 %v5263, %v5351
        %5353 = vdwg.mxu0
        %5354 = vmatprep.subr.mxu0 0.0
        %5355 = vmatpush1.msra.mxu0 0.0
        %5356 = vmatprep.subr.mxu0 0.0
        %5357 = vmatpush1.msra.mxu0 0.0
        %5358 = vmatprep.subr.mxu0 0.0
        %5359 = vmatpush1.msra.mxu0 0.0
        %5360 = vmatprep.subr.mxu0 0.0
        %5361 = vmatpush1.msra.mxu0 0.0
        %5362 = vmatprep.subr.mxu0 0.0
        %5363 = vmatpush1.msra.mxu0 0.0
        %5364 = vmatprep.subr.mxu0 0.0
        %5365 = vmatpush1.msra.mxu0 0.0
        %5366 = vmatprep.subr.mxu0 0.0
        %5367 = vmatpush1.msra.mxu0 0.0
        %5368 = vmatprep.subr.mxu0 0.0
        %5369 = vmatpush1.msra.mxu0 0.0
        %5370 = vmatprep.subr.mxu0 0.0
        %5371 = vmatpush1.msra.mxu0 0.0
        %5372 = vmatprep.subr.mxu0 0.0
        %5373 = vmatpush1.msra.mxu0 0.0
        %5374 = vmatprep.subr.mxu0 0.0
        %5375 = vmatpush1.msra.mxu0 0.0
        %5376 = vmatprep.subr.mxu0 0.0
        %5377 = vmatpush1.msra.mxu0 0.0
        %v5378 = vand.u32 %v4515, 4294901760
        %5379 = vmatprep.subr.mxu0 %v5378
        %v5380 = vand.u32 %v4514, 4294901760
        %5381 = vmatpush1.msra.mxu0 %v5380
        %v5382 = vand.u32 %v4511, 4294901760
        %5383 = vmatprep.subr.mxu0 %v5382
        %v5384 = vand.u32 %v4510, 4294901760
        %5385 = vmatpush1.msra.mxu0 %v5384
        %v5386 = vand.u32 %v4507, 4294901760
        %5387 = vmatprep.subr.mxu0 %v5386
        %v5388 = vand.u32 %v4506, 4294901760
        %5389 = vmatpush1.msra.mxu0 %v5388
        %v5390 = vand.u32 %v4503, 4294901760
        %5391 = vmatprep.subr.mxu0 %v5390
        %v5392 = vand.u32 %v4502, 4294901760
        %5393 = vmatpush1.msra.mxu0 %v5392
        %5394 = vmatprep.subr.mxu0 0.0
        %5395 = vmatpush2.msra.mxu0 0.0
        %5396 = vmatprep.subr.mxu0 0.0
        %5397 = vmatpush2.msra.mxu0 0.0
        %5398 = vmatprep.subr.mxu0 0.0
        %5399 = vmatpush2.msra.mxu0 0.0
        %5400 = vmatprep.subr.mxu0 0.0
        %5401 = vmatpush2.msra.mxu0 0.0
        %5402 = vmatprep.subr.mxu0 0.0
        %5403 = vmatpush2.msra.mxu0 0.0
        %5404 = vmatprep.subr.mxu0 0.0
        %5405 = vmatpush2.msra.mxu0 0.0
        %5406 = vmatprep.subr.mxu0 0.0
        %5407 = vmatpush2.msra.mxu0 0.0
        %5408 = vmatprep.subr.mxu0 0.0
        %5409 = vmatpush2.msra.mxu0 0.0
        %5410 = vmatprep.subr.mxu0 0.0
        %5411 = vmatpush2.msra.mxu0 0.0
        %5412 = vmatprep.subr.mxu0 0.0
        %5413 = vmatpush2.msra.mxu0 0.0
        %5414 = vmatprep.subr.mxu0 0.0
        %5415 = vmatpush2.msra.mxu0 0.0
        %5416 = vmatprep.subr.mxu0 0.0
        %5417 = vmatpush2.msra.mxu0 0.0
        %5418 = vmatprep.subr.mxu0 0.0
        %5419 = vmatpush2.msra.mxu0 0.0
        %5420 = vmatprep.subr.mxu0 0.0
        %5421 = vmatpush2.msra.mxu0 0.0
        %5422 = vmatprep.subr.mxu0 0.0
        %5423 = vmatpush2.msra.mxu0 0.0
        %5424 = vmatprep.subr.mxu0 0.0
        %5425 = vmatpush2.msra.mxu0 0.0
        %5426 = vmatprep.mubr.f32.mxu0 0.0
        %v5427 = vand.u32 %v4524, 4294901760
        %v5428 = vsub.f32 %v4524, %v5427
        %v5429 = vand.u32 %v5428, 4294901760
        %5430 = vmatmul.mubr.f32.gmra.mxu0 %v5429
        %v5431 = vpop.f32.mrf.mxu0
        %v5432 = vadd.f32 %v5350, %v5431
        %v5433 = vpop.f32.mrf.mxu0
        %v5434 = vadd.f32 %v5352, %v5433
        %5435 = vdwg.mxu0
        %5436 = vmatprep.subr.mxu0 0.0
        %5437 = vmatpush1.msra.mxu0 0.0
        %5438 = vmatprep.subr.mxu0 0.0
        %5439 = vmatpush1.msra.mxu0 0.0
        %5440 = vmatprep.subr.mxu0 0.0
        %5441 = vmatpush1.msra.mxu0 0.0
        %5442 = vmatprep.subr.mxu0 0.0
        %5443 = vmatpush1.msra.mxu0 0.0
        %5444 = vmatprep.subr.mxu0 0.0
        %5445 = vmatpush1.msra.mxu0 0.0
        %5446 = vmatprep.subr.mxu0 0.0
        %5447 = vmatpush1.msra.mxu0 0.0
        %5448 = vmatprep.subr.mxu0 0.0
        %5449 = vmatpush1.msra.mxu0 0.0
        %5450 = vmatprep.subr.mxu0 0.0
        %5451 = vmatpush1.msra.mxu0 0.0
        %5452 = vmatprep.subr.mxu0 0.0
        %5453 = vmatpush1.msra.mxu0 0.0
        %5454 = vmatprep.subr.mxu0 0.0
        %5455 = vmatpush1.msra.mxu0 0.0
        %5456 = vmatprep.subr.mxu0 0.0
        %5457 = vmatpush1.msra.mxu0 0.0
        %5458 = vmatprep.subr.mxu0 0.0
        %5459 = vmatpush1.msra.mxu0 0.0
        %v5460 = vand.u32 %v4515, 4294901760
        %v5461 = vsub.f32 %v4515, %v5460
        %v5462 = vand.u32 %v5461, 4294901760
        %5463 = vmatprep.subr.mxu0 %v5462
        %v5464 = vand.u32 %v4514, 4294901760
        %v5465 = vsub.f32 %v4514, %v5464
        %v5466 = vand.u32 %v5465, 4294901760
        %5467 = vmatpush1.msra.mxu0 %v5466
        %v5468 = vand.u32 %v4511, 4294901760
        %v5469 = vsub.f32 %v4511, %v5468
        %v5470 = vand.u32 %v5469, 4294901760
        %5471 = vmatprep.subr.mxu0 %v5470
        %v5472 = vand.u32 %v4510, 4294901760
        %v5473 = vsub.f32 %v4510, %v5472
        %v5474 = vand.u32 %v5473, 4294901760
        %5475 = vmatpush1.msra.mxu0 %v5474
        %v5476 = vand.u32 %v4507, 4294901760
        %v5477 = vsub.f32 %v4507, %v5476
        %v5478 = vand.u32 %v5477, 4294901760
        %5479 = vmatprep.subr.mxu0 %v5478
        %v5480 = vand.u32 %v4506, 4294901760
        %v5481 = vsub.f32 %v4506, %v5480
        %v5482 = vand.u32 %v5481, 4294901760
        %5483 = vmatpush1.msra.mxu0 %v5482
        %v5484 = vand.u32 %v4503, 4294901760
        %v5485 = vsub.f32 %v4503, %v5484
        %v5486 = vand.u32 %v5485, 4294901760
        %5487 = vmatprep.subr.mxu0 %v5486
        %v5488 = vand.u32 %v4502, 4294901760
        %v5489 = vsub.f32 %v4502, %v5488
        %v5490 = vand.u32 %v5489, 4294901760
        %5491 = vmatpush1.msra.mxu0 %v5490
        %5492 = vmatprep.subr.mxu0 0.0
        %5493 = vmatpush2.msra.mxu0 0.0
        %5494 = vmatprep.subr.mxu0 0.0
        %5495 = vmatpush2.msra.mxu0 0.0
        %5496 = vmatprep.subr.mxu0 0.0
        %5497 = vmatpush2.msra.mxu0 0.0
        %5498 = vmatprep.subr.mxu0 0.0
        %5499 = vmatpush2.msra.mxu0 0.0
        %5500 = vmatprep.subr.mxu0 0.0
        %5501 = vmatpush2.msra.mxu0 0.0
        %5502 = vmatprep.subr.mxu0 0.0
        %5503 = vmatpush2.msra.mxu0 0.0
        %5504 = vmatprep.subr.mxu0 0.0
        %5505 = vmatpush2.msra.mxu0 0.0
        %5506 = vmatprep.subr.mxu0 0.0
        %5507 = vmatpush2.msra.mxu0 0.0
        %5508 = vmatprep.subr.mxu0 0.0
        %5509 = vmatpush2.msra.mxu0 0.0
        %5510 = vmatprep.subr.mxu0 0.0
        %5511 = vmatpush2.msra.mxu0 0.0
        %5512 = vmatprep.subr.mxu0 0.0
        %5513 = vmatpush2.msra.mxu0 0.0
        %5514 = vmatprep.subr.mxu0 0.0
        %5515 = vmatpush2.msra.mxu0 0.0
        %5516 = vmatprep.subr.mxu0 0.0
        %5517 = vmatpush2.msra.mxu0 0.0
        %5518 = vmatprep.subr.mxu0 0.0
        %5519 = vmatpush2.msra.mxu0 0.0
        %5520 = vmatprep.subr.mxu0 0.0
        %5521 = vmatpush2.msra.mxu0 0.0
        %5522 = vmatprep.subr.mxu0 0.0
        %5523 = vmatpush2.msra.mxu0 0.0
        %5524 = vmatprep.mubr.f32.mxu0 0.0
        %v5525 = vand.u32 %v4524, 4294901760
        %5526 = vmatmul.mubr.f32.gmra.mxu0 %v5525
        %v5527 = vpop.f32.mrf.mxu0
        %v5528 = vadd.f32 %v5432, %v5527
        %v5529 = vpop.f32.mrf.mxu0
        %v5530 = vadd.f32 %v5434, %v5529
        %5531 = vdwg.mxu0
        %5532 = vmatprep.subr.mxu0 0.0
        %5533 = vmatpush1.msra.mxu0 0.0
        %5534 = vmatprep.subr.mxu0 0.0
        %5535 = vmatpush1.msra.mxu0 0.0
        %5536 = vmatprep.subr.mxu0 0.0
        %5537 = vmatpush1.msra.mxu0 0.0
        %5538 = vmatprep.subr.mxu0 0.0
        %5539 = vmatpush1.msra.mxu0 0.0
        %5540 = vmatprep.subr.mxu0 0.0
        %5541 = vmatpush1.msra.mxu0 0.0
        %5542 = vmatprep.subr.mxu0 0.0
        %5543 = vmatpush1.msra.mxu0 0.0
        %5544 = vmatprep.subr.mxu0 0.0
        %5545 = vmatpush1.msra.mxu0 0.0
        %5546 = vmatprep.subr.mxu0 0.0
        %5547 = vmatpush1.msra.mxu0 0.0
        %5548 = vmatprep.subr.mxu0 0.0
        %5549 = vmatpush1.msra.mxu0 0.0
        %5550 = vmatprep.subr.mxu0 0.0
        %5551 = vmatpush1.msra.mxu0 0.0
        %5552 = vmatprep.subr.mxu0 0.0
        %5553 = vmatpush1.msra.mxu0 0.0
        %5554 = vmatprep.subr.mxu0 0.0
        %5555 = vmatpush1.msra.mxu0 0.0
        %v5556 = vand.u32 %v4515, 4294901760
        %5557 = vmatprep.subr.mxu0 %v5556
        %v5558 = vand.u32 %v4514, 4294901760
        %5559 = vmatpush1.msra.mxu0 %v5558
        %v5560 = vand.u32 %v4511, 4294901760
        %5561 = vmatprep.subr.mxu0 %v5560
        %v5562 = vand.u32 %v4510, 4294901760
        %5563 = vmatpush1.msra.mxu0 %v5562
        %v5564 = vand.u32 %v4507, 4294901760
        %5565 = vmatprep.subr.mxu0 %v5564
        %v5566 = vand.u32 %v4506, 4294901760
        %5567 = vmatpush1.msra.mxu0 %v5566
        %v5568 = vand.u32 %v4503, 4294901760
        %5569 = vmatprep.subr.mxu0 %v5568
        %v5570 = vand.u32 %v4502, 4294901760
        %5571 = vmatpush1.msra.mxu0 %v5570
        %5572 = vmatprep.subr.mxu0 0.0
        %5573 = vmatpush2.msra.mxu0 0.0
        %5574 = vmatprep.subr.mxu0 0.0
        %5575 = vmatpush2.msra.mxu0 0.0
        %5576 = vmatprep.subr.mxu0 0.0
        %5577 = vmatpush2.msra.mxu0 0.0
        %5578 = vmatprep.subr.mxu0 0.0
        %5579 = vmatpush2.msra.mxu0 0.0
        %5580 = vmatprep.subr.mxu0 0.0
        %5581 = vmatpush2.msra.mxu0 0.0
        %5582 = vmatprep.subr.mxu0 0.0
        %5583 = vmatpush2.msra.mxu0 0.0
        %5584 = vmatprep.subr.mxu0 0.0
        %5585 = vmatpush2.msra.mxu0 0.0
        %5586 = vmatprep.subr.mxu0 0.0
        %5587 = vmatpush2.msra.mxu0 0.0
        %5588 = vmatprep.subr.mxu0 0.0
        %5589 = vmatpush2.msra.mxu0 0.0
        %5590 = vmatprep.subr.mxu0 0.0
        %5591 = vmatpush2.msra.mxu0 0.0
        %5592 = vmatprep.subr.mxu0 0.0
        %5593 = vmatpush2.msra.mxu0 0.0
        %5594 = vmatprep.subr.mxu0 0.0
        %5595 = vmatpush2.msra.mxu0 0.0
        %5596 = vmatprep.subr.mxu0 0.0
        %5597 = vmatpush2.msra.mxu0 0.0
        %5598 = vmatprep.subr.mxu0 0.0
        %5599 = vmatpush2.msra.mxu0 0.0
        %5600 = vmatprep.subr.mxu0 0.0
        %5601 = vmatpush2.msra.mxu0 0.0
        %5602 = vmatprep.subr.mxu0 0.0
        %5603 = vmatpush2.msra.mxu0 0.0
        %5604 = vmatprep.mubr.f32.mxu0 0.0
        %v5605 = vand.u32 %v4524, 4294901760
        %5606 = vmatmul.mubr.f32.gmra.mxu0 %v5605
        %v5607 = vpop.f32.mrf.mxu0
        %v5608 = vadd.f32 %v5528, %v5607
        %v5609 = vpop.f32.mrf.mxu0
        %v5610 = vadd.f32 %v5530, %v5609
        %5611 = vdwg.mxu0
        %5612 = vst [vmem:[%s326] sm:$0xff] %v5065
        %5613 = vst [vmem:[%s326 + $0x8] sm:$0xff] %v5067
        %5614 = vst [vmem:[%s326 + $0x10] sm:$0xff] %v5608
        %5615 = vst [vmem:[%s326 + $0x18] sm:$0xff] %v5610
        %s5616 = sand.u32 %s225, 1
        %s5617 = scalar_lea.sflag [#allocation3], %s5616
        %s5618 = sand.u32 %s225, 1
        %s5619 = smul.addr %s5618, 32
        %s5620 = scalar_lea.vmem [#allocation2], %s5619
        // Predicated region
        $region57: #{tpu_custom_call.1} parent=55 // pred_check
          %p5621 = pneg %p235
        $region58: #{tpu_custom_call.1} parent=55 // pred_check_branch
          %5623 = sbr.rel (%p5621) target = $region60
        $region59: #{tpu_custom_call.1} parent=55 // pred_region
          %s5624 = smul.u32 4, %s23
          %s5626 = ssub.s32 512, 512
          %5627 = vsyncadd %s5617, %s5626
          %s5628 = smul.addr %s5624, 128
          %s5629 = scalar_lea.hbm %s9, %s5628
          %s5631 = sshll.u32 %s5620, 4
          %s5632 = int_to_ptr.vmem [resolvable:$true] %s5631
          %5634 = dma.vmem_to_hbm [thread:$0]  %s5632, 512, %s5629, %s5617
        $region60: #{tpu_custom_call.1} parent=55 // pred_fallthru
          _
      $region56: #{tpu_custom_call.1} parent=5 // pred_fallthru
        _
      %p5635 = scmp.le.s32.totalorder 2, %s18
      // Predicated region
      $region61: #{tpu_custom_call.1} parent=5 // pred_check
        %p5636 = pneg %p5635
      $region62: #{tpu_custom_call.1} parent=5 // pred_check_branch
        %5638 = sbr.rel (%p5636) target = $region64
      $region63: #{tpu_custom_call.1} parent=5 // pred_region
        %s5639 = ssub.s32 %s18, 2
        // Predicated region
        $region65: #{tpu_custom_call.1} parent=63 // pred_check
          %p5640 = pneg %p241
        $region66: #{tpu_custom_call.1} parent=63 // pred_check_branch
          %5642 = sbr.rel (%p5640) target = $region68
        $region67: #{tpu_custom_call.1} parent=63 // pred_region
          %s5643 = sand.u32 %s226, 1
          %s5644 = scalar_lea.sflag [#allocation3], %s5643
          %s5645 = sand.u32 %s226, 1
          %s5646 = smul.addr %s5645, 32
          %s5647 = scalar_lea.vmem [#allocation2], %s5646
          %5648 = dma.done %s5644, 512
        $region68: #{tpu_custom_call.1} parent=63 // pred_fallthru
          _
      $region64: #{tpu_custom_call.1} parent=5 // pred_fallthru
        _
    $region6: #{tpu_custom_call.1} parent=1 // loop_footer
      %s22 = sadd.s32 1, %s18
    $region7: #{tpu_custom_call.1} parent=1 // loop_footer_branch
      %17 = sbr.rel target = $region3
    $region8: #{tpu_custom_call.1} parent=1 // loop_exit
      _
    %5649 = vsyncpa [#allocation3], 1
    %s5650 = scalar_lea.sflag [#allocation3], 1
    %5651 = vsyncpa %s5650, 1

</llo_original>
